<compile_context>
chip_gen: v6e
topology: v6e:2x2x1
jax: 0.10.0
libtpu: 0.0.40
codegen_flags: <defaults>
</compile_context>

<pallas_src>
import jax
import jax.numpy as jnp
from jax.experimental import pallas as pl
from jax.experimental.pallas import tpu as pltpu


_VMEM_LIMIT = 32 * 1024 * 1024   # explicit VMEM budget, safe on v5e/v6e/v7x


def _round_up(x, m):
    return (x + m - 1) // m * m


# ---------------------------------------------------------------------------
# Pallas kernels
# ---------------------------------------------------------------------------

def _conv_pool_kernel(cols_ref, w_ref, b_ref, o_ref):
    """out[m, :] = max_u relu(cols[u, m, :] @ w + b)  (2x2 maxpool over u).

    cols_ref: (1, tm, K) bf16  -- pool-window element u selected by grid axis 1
    w_ref:    (K, N)     bf16  -- conv weights with BN scale folded in
    b_ref:    (1, N)     f32   -- BN-folded bias
    o_ref:    (tm, N)    bf16  -- max-accumulated across the 4 window elements
    """
    u = pl.program_id(1)
    acc = jnp.dot(cols_ref[0], w_ref[...], preferred_element_type=jnp.float32)
    acc = jnp.maximum(acc + b_ref[...], 0.0)          # f32 epilogue
    val = acc.astype(o_ref.dtype)

    @pl.when(u == 0)
    def _():
        o_ref[...] = val

    @pl.when(u > 0)
    def _():
        o_ref[...] = jnp.maximum(o_ref[...], val)


def _mlp_kernel(x_ref, w0_ref, b0_ref, w1_ref, b1_ref, o_ref):
    """out = relu(x @ w0 + b0) @ w1 + b1  -- fc0+ReLU+fc1 fused in VMEM."""
    h = jnp.dot(x_ref[...], w0_ref[...], preferred_element_type=jnp.float32)
    h = jnp.maximum(h + b0_ref[...], 0.0)
    # TODO(synk): training-mode Dropout (random mask) not implemented; eval = identity.
    out = jnp.dot(h.astype(w1_ref.dtype), w1_ref[...],
                  preferred_element_type=jnp.float32)
    o_ref[...] = (out + b1_ref[...]).astype(o_ref.dtype)


# ---------------------------------------------------------------------------
# Layer wrappers (glue: im2col row grouping, padding, reshapes)
# ---------------------------------------------------------------------------

def _im2col_pool_rows(x, kh, kw):
    """im2col rows grouped by 2x2 pool-window element.

    x: (B, H, W, C) NHWC.  Returns cols (4, B*PH*PW, kh*kw*C), PH, PW where
    cols[u, m, :] is the patch for pool-window element u of pooled output m.
    # TODO(synk): patch extraction is still XLA glue; a fully in-kernel
    # shifted-view conv would also remove this HBM materialization.
    """
    B, H, W, C = x.shape
    OH, OW = H - kh + 1, W - kw + 1
    PH, PW = OH // 2, OW // 2
    K = kh * kw * C
    patches = jnp.stack([x[:, i:i + OH, j:j + OW, :]
                         for i in range(kh) for j in range(kw)], axis=3)
    patches = patches.reshape(B, OH, OW, K)
    patches = patches.reshape(B, PH, 2, PW, 2, K)
    patches = jnp.transpose(patches, (2, 4, 0, 1, 3, 5))   # (2, 2, B, PH, PW, K)
    return patches.reshape(4, B * PH * PW, K), PH, PW


def conv_bn_relu_pool(x, p, *, tm=512):
    """Conv2d(k, stride=1, valid) + BN(eval, folded) + ReLU + MaxPool2d(2, 2)."""
    w, b = p["w"], p["b"]                  # (K, OC) bf16, (1, OC) f32
    K, OC = w.shape
    B, _, _, C = x.shape
    ksize = int(round((K // C) ** 0.5))    # static (from shapes)
    cols, PH, PW = _im2col_pool_rows(x, ksize, ksize)
    M = cols.shape[1]
    tm_eff = min(tm, _round_up(M, 8))
    Mpad = _round_up(M, tm_eff)
    if Mpad != M:
        cols = jnp.pad(cols, ((0, 0), (0, Mpad - M), (0, 0)))
    out = pl.pallas_call(
        _conv_pool_kernel,
        out_shape=jax.ShapeDtypeStruct((Mpad, OC), jnp.bfloat16),
        grid=(Mpad // tm_eff, 4),
        in_specs=[
            pl.BlockSpec((1, tm_eff, K), lambda m, u: (u, m, 0)),
            pl.BlockSpec((K, OC), lambda m, u: (0, 0)),
            pl.BlockSpec((1, OC), lambda m, u: (0, 0)),
        ],
        out_specs=pl.BlockSpec((tm_eff, OC), lambda m, u: (m, 0)),
        compiler_params=pltpu.CompilerParams(
            dimension_semantics=("parallel", "arbitrary"),
            vmem_limit_bytes=_VMEM_LIMIT),
    )(cols, w, b)
    return out[:M].reshape(B, PH, PW, OC)


def mlp(x, p, *, tm=256):
    """fc0 (1024->512) + ReLU (+Dropout=id) and fc1 (512->10), one kernel."""
    w0, b0, w1, b1 = p["w0"], p["b0"], p["w1"], p["b1"]
    B, K = x.shape
    N0, N1 = w0.shape[1], w1.shape[1]
    tm_eff = min(tm, _round_up(B, 8))
    Mpad = _round_up(B, tm_eff)
    if Mpad != B:
        x = jnp.pad(x, ((0, Mpad - B), (0, 0)))
    out = pl.pallas_call(
        _mlp_kernel,
        out_shape=jax.ShapeDtypeStruct((Mpad, N1), jnp.float32),
        grid=(Mpad // tm_eff,),
        in_specs=[
            pl.BlockSpec((tm_eff, K), lambda m: (m, 0)),
            pl.BlockSpec((K, N0), lambda m: (0, 0)),
            pl.BlockSpec((1, N0), lambda m: (0, 0)),
            pl.BlockSpec((N0, N1), lambda m: (0, 0)),
            pl.BlockSpec((1, N1), lambda m: (0, 0)),
        ],
        out_specs=pl.BlockSpec((tm_eff, N1), lambda m: (m, 0)),
        compiler_params=pltpu.CompilerParams(
            dimension_semantics=("parallel",),
            vmem_limit_bytes=_VMEM_LIMIT),
    )(x, w0, b0, w1, b1)
    return out[:B]


def mnist_forward(x_nchw, prep):
    x = jnp.transpose(x_nchw, (0, 2, 3, 1)).astype(jnp.bfloat16)   # NCHW -> NHWC
    x = conv_bn_relu_pool(x, prep["conv0"])      # (B, 12, 12, 32)
    x = conv_bn_relu_pool(x, prep["conv1"])      # (B, 4, 4, 64)
    B = x.shape[0]
    x = x.reshape(B, -1)            # NHWC-flat; fc0 rows were pre-permuted to match
    return mlp(x, prep["fc"])       # (B, 10) f32


# ---------------------------------------------------------------------------
# One-time parameter preparation (outside the per-forward path)
# ---------------------------------------------------------------------------

def prepare_params(params):
    """BN fold into conv weights/bias, conv weight -> (K, OC) bf16,
    Linear weights -> (in, out) bf16, fc0 rows permuted NCHW->NHWC flatten."""

    def conv_prep(p):
        w = p["w"]                                   # torch (OC, IC, KH, KW)
        OC, IC, KH, KW = w.shape
        scale = p["gamma"] / jnp.sqrt(p["var"] + p["eps"])
        bias = scale * p["b"] + (p["beta"] - p["mean"] * scale)
        w2 = jnp.transpose(w, (2, 3, 1, 0)).reshape(KH * KW * IC, OC)
        return {"w": (w2 * scale[None, :]).astype(jnp.bfloat16),
                "b": bias.reshape(1, OC).astype(jnp.float32)}

    # fc0: torch weight (512, 1024); columns indexed NCHW-flat (c*16 + h*4 + w).
    # Our activation is NHWC-flat (h*4*64 + w*64 + c) -> permute rows once here.
    w0 = params["fc0"]["w"]
    nout = w0.shape[0]
    w0t = w0.T.reshape(64, 4, 4, nout)               # rows (c, h, w)
    w0t = jnp.transpose(w0t, (1, 2, 0, 3)).reshape(64 * 4 * 4, nout)
    w1t = params["fc1"]["w"].T                       # (512, 10)
    return {
        "conv0": conv_prep(params["conv0"]),
        "conv1": conv_prep(params["conv1"]),
        "fc": {"w0": w0t.astype(jnp.bfloat16),
               "b0": params["fc0"]["b"].reshape(1, -1).astype(jnp.float32),
               "w1": w1t.astype(jnp.bfloat16),
               "b1": params["fc1"]["b"].reshape(1, -1).astype(jnp.float32)},
    }


# ---------------------------------------------------------------------------
# Deterministic synthetic parameters (PyTorch layouts / shapes)
# ---------------------------------------------------------------------------

def init_params(key):
    k = jax.random.split(key, 4)

    def conv_bn(kk, ic, oc, ks):
        s = jax.random.split(kk, 6)
        return {
            "w": 0.05 * jax.random.normal(s[0], (oc, ic, ks, ks), jnp.float32),
            "b": 0.05 * jax.random.normal(s[1], (oc,), jnp.float32),
            "gamma": 1.0 + 0.05 * jax.random.normal(s[2], (oc,), jnp.float32),
            "beta": 0.05 * jax.random.normal(s[3], (oc,), jnp.float32),
            "mean": 0.05 * jax.random.normal(s[4], (oc,), jnp.float32),
            "var": jnp.abs(1.0 + 0.05 * jax.random.normal(s[5], (oc,), jnp.float32)),
            "eps": jnp.float32(1e-5),
        }

    def fc_p(kk, fin, fout):
        s = jax.random.split(kk, 2)
        return {"w": 0.05 * jax.random.normal(s[0], (fout, fin), jnp.float32),
                "b": 0.05 * jax.random.normal(s[1], (fout,), jnp.float32)}

    return {
        "conv0": conv_bn(k[0], 1, 32, 5),
        "conv1": conv_bn(k[1], 32, 64, 5),
        "fc0": fc_p(k[2], 64 * 4 * 4, 512),
        "fc1": fc_p(k[3], 512, 10),
    }


if __name__ == "__main__":
    key = jax.random.PRNGKey(0)
    pkey, xkey = jax.random.split(key)
    params = init_params(pkey)
    prep = prepare_params(params)                 # one-time weight re-layout
    # MNIST-shaped input (28x28 is required so the flatten is 64*4*4)
    x = jax.random.normal(xkey, (2, 1, 28, 28), jnp.float32)

    out = jax.jit(mnist_forward)(x, prep)
    out = jax.block_until_ready(out)
    assert out.shape == (2, 10) and out.dtype == jnp.float32
    print("KERNEL_OK")
</pallas_src>

<mosaic_0001>
module attributes {stable_mosaic.version = 11 : i64} {
  func.func @_conv_pool_kernel(%arg0: i32, %arg1: i32, %arg2: memref<1x288x25xbf16, #tpu.memory_space<vmem>>, %arg3: memref<25x32xbf16, #tpu.memory_space<vmem>>, %arg4: memref<1x32xf32, #tpu.memory_space<vmem>>, %arg5: memref<288x32xbf16, #tpu.memory_space<vmem>>) attributes {dimension_semantics = [#tpu.dimension_semantics<parallel>, #tpu.dimension_semantics<arbitrary>], iteration_bounds = array<i64: 1, 4>, scalar_prefetch = 0 : i64, scratch_operands = 0 : i64, tpu.core_type = #tpu.core_type<tc>, window_params = [{transform_indices = @transform_0, window_bounds = array<i64: 1, 288, 25>}, {pipeline_mode = #tpu.pipeline_mode<synchronous>, transform_indices = @transform_1, window_bounds = array<i64: 25, 32>}, {pipeline_mode = #tpu.pipeline_mode<synchronous>, transform_indices = @transform_2, window_bounds = array<i64: 1, 32>}, {transform_indices = @transform_3, window_bounds = array<i64: 288, 32>}]} {
    %c0 = arith.constant 0 : index
    %c0_0 = arith.constant 0 : index
    %c0_1 = arith.constant 0 : index
    %0 = vector.load %arg2[%c0, %c0_0, %c0_1] : memref<1x288x25xbf16, #tpu.memory_space<vmem>>, vector<1x288x25xbf16>
    %1 = vector.shape_cast %0 : vector<1x288x25xbf16> to vector<288x25xbf16>
    %c0_2 = arith.constant 0 : index
    %c0_3 = arith.constant 0 : index
    %2 = vector.load %arg3[%c0_2, %c0_3] : memref<25x32xbf16, #tpu.memory_space<vmem>>, vector<25x32xbf16>
    %cst = arith.constant dense<0.000000e+00> : vector<288x32xf32>
    %3 = tpu.matmul %1, %2, %cst {dimension_numbers = #tpu.dot_dimension_numbers<[1], [0], [0], [1], [0, 0, 1, 1], [], []>} : vector<288x25xbf16>, vector<25x32xbf16>, vector<288x32xf32> -> vector<288x32xf32>
    %c0_4 = arith.constant 0 : index
    %c0_5 = arith.constant 0 : index
    %4 = vector.load %arg4[%c0_4, %c0_5] : memref<1x32xf32, #tpu.memory_space<vmem>>, vector<1x32xf32>
    %5 = vector.broadcast %4 : vector<1x32xf32> to vector<288x32xf32>
    %6 = arith.addf %3, %5 : vector<288x32xf32>
    %cst_6 = arith.constant 0.000000e+00 : f32
    %7 = vector.broadcast %cst_6 : f32 to vector<288x32xf32>
    %8 = arith.maximumf %6, %7 : vector<288x32xf32>
    %9 = arith.truncf %8 : vector<288x32xf32> to vector<288x32xbf16>
    %c0_i32 = arith.constant 0 : i32
    %10 = arith.cmpi eq, %arg1, %c0_i32 : i32
    %11 = arith.extui %10 : i1 to i32
    %c0_i32_7 = arith.constant 0 : i32
    %12 = arith.cmpi ne, %11, %c0_i32_7 : i32
    scf.if %12 {
      %c0_10 = arith.constant 0 : index
      %c0_11 = arith.constant 0 : index
      %16 = vector.load %arg5[%c0_10, %c0_11] : memref<288x32xbf16, #tpu.memory_space<vmem>>, vector<288x32xbf16>
      tpu.vector_store %arg5[%c0_10, %c0_11], %9 {strides = array<i32>} : memref<288x32xbf16, #tpu.memory_space<vmem>>, vector<288x32xbf16>,
    } else {
    }
    %c0_i32_8 = arith.constant 0 : i32
    %13 = arith.cmpi sgt, %arg1, %c0_i32_8 : i32
    %14 = arith.extui %13 : i1 to i32
    %c0_i32_9 = arith.constant 0 : i32
    %15 = arith.cmpi ne, %14, %c0_i32_9 : i32
    scf.if %15 {
      %c0_10 = arith.constant 0 : index
      %c0_11 = arith.constant 0 : index
      %16 = vector.load %arg5[%c0_10, %c0_11] : memref<288x32xbf16, #tpu.memory_space<vmem>>, vector<288x32xbf16>
      %17 = arith.maximumf %16, %9 : vector<288x32xbf16>
      %c0_12 = arith.constant 0 : index
      %c0_13 = arith.constant 0 : index
      %18 = vector.load %arg5[%c0_12, %c0_13] : memref<288x32xbf16, #tpu.memory_space<vmem>>, vector<288x32xbf16>
      tpu.vector_store %arg5[%c0_12, %c0_13], %17 {strides = array<i32>} : memref<288x32xbf16, #tpu.memory_space<vmem>>, vector<288x32xbf16>,
    } else {
    }
    return
  }
  func.func @transform_0(%arg0: i32, %arg1: i32) -> (i32, i32, i32) {
    %c0_i32 = arith.constant 0 : i32
    %c0_i32_0 = arith.constant 0 : i32
    return %arg1, %arg0, %c0_i32 : i32, i32, i32
  }
  func.func @transform_1(%arg0: i32, %arg1: i32) -> (i32, i32) {
    %c0_i32 = arith.constant 0 : i32
    %c0_i32_0 = arith.constant 0 : i32
    %c0_i32_1 = arith.constant 0 : i32
    return %c0_i32, %c0_i32_0 : i32, i32
  }
  func.func @transform_2(%arg0: i32, %arg1: i32) -> (i32, i32) {
    %c0_i32 = arith.constant 0 : i32
    %c0_i32_0 = arith.constant 0 : i32
    %c0_i32_1 = arith.constant 0 : i32
    return %c0_i32, %c0_i32_0 : i32, i32
  }
  func.func @transform_3(%arg0: i32, %arg1: i32) -> (i32, i32) {
    %c0_i32 = arith.constant 0 : i32
    %c0_i32_0 = arith.constant 0 : i32
    return %arg0, %c0_i32 : i32, i32
  }
}

module attributes {stable_mosaic.version = 11 : i64} {
  func.func @_conv_pool_kernel(%arg0: i32, %arg1: i32, %arg2: memref<1x32x800xbf16, #tpu.memory_space<vmem>>, %arg3: memref<800x64xbf16, #tpu.memory_space<vmem>>, %arg4: memref<1x64xf32, #tpu.memory_space<vmem>>, %arg5: memref<32x64xbf16, #tpu.memory_space<vmem>>) attributes {dimension_semantics = [#tpu.dimension_semantics<parallel>, #tpu.dimension_semantics<arbitrary>], iteration_bounds = array<i64: 1, 4>, scalar_prefetch = 0 : i64, scratch_operands = 0 : i64, tpu.core_type = #tpu.core_type<tc>, window_params = [{transform_indices = @transform_0, window_bounds = array<i64: 1, 32, 800>}, {pipeline_mode = #tpu.pipeline_mode<synchronous>, transform_indices = @transform_1, window_bounds = array<i64: 800, 64>}, {pipeline_mode = #tpu.pipeline_mode<synchronous>, transform_indices = @transform_2, window_bounds = array<i64: 1, 64>}, {transform_indices = @transform_3, window_bounds = array<i64: 32, 64>}]} {
    %c0 = arith.constant 0 : index
    %c0_0 = arith.constant 0 : index
    %c0_1 = arith.constant 0 : index
    %0 = vector.load %arg2[%c0, %c0_0, %c0_1] : memref<1x32x800xbf16, #tpu.memory_space<vmem>>, vector<1x32x800xbf16>
    %1 = vector.shape_cast %0 : vector<1x32x800xbf16> to vector<32x800xbf16>
    %c0_2 = arith.constant 0 : index
    %c0_3 = arith.constant 0 : index
    %2 = vector.load %arg3[%c0_2, %c0_3] : memref<800x64xbf16, #tpu.memory_space<vmem>>, vector<800x64xbf16>
    %cst = arith.constant dense<0.000000e+00> : vector<32x64xf32>
    %3 = tpu.matmul %1, %2, %cst {dimension_numbers = #tpu.dot_dimension_numbers<[1], [0], [0], [1], [0, 0, 1, 1], [], []>} : vector<32x800xbf16>, vector<800x64xbf16>, vector<32x64xf32> -> vector<32x64xf32>
    %c0_4 = arith.constant 0 : index
    %c0_5 = arith.constant 0 : index
    %4 = vector.load %arg4[%c0_4, %c0_5] : memref<1x64xf32, #tpu.memory_space<vmem>>, vector<1x64xf32>
    %5 = vector.broadcast %4 : vector<1x64xf32> to vector<32x64xf32>
    %6 = arith.addf %3, %5 : vector<32x64xf32>
    %cst_6 = arith.constant 0.000000e+00 : f32
    %7 = vector.broadcast %cst_6 : f32 to vector<32x64xf32>
    %8 = arith.maximumf %6, %7 : vector<32x64xf32>
    %9 = arith.truncf %8 : vector<32x64xf32> to vector<32x64xbf16>
    %c0_i32 = arith.constant 0 : i32
    %10 = arith.cmpi eq, %arg1, %c0_i32 : i32
    %11 = arith.extui %10 : i1 to i32
    %c0_i32_7 = arith.constant 0 : i32
    %12 = arith.cmpi ne, %11, %c0_i32_7 : i32
    scf.if %12 {
      %c0_10 = arith.constant 0 : index
      %c0_11 = arith.constant 0 : index
      %16 = vector.load %arg5[%c0_10, %c0_11] : memref<32x64xbf16, #tpu.memory_space<vmem>>, vector<32x64xbf16>
      tpu.vector_store %arg5[%c0_10, %c0_11], %9 {strides = array<i32>} : memref<32x64xbf16, #tpu.memory_space<vmem>>, vector<32x64xbf16>,
    } else {
    }
    %c0_i32_8 = arith.constant 0 : i32
    %13 = arith.cmpi sgt, %arg1, %c0_i32_8 : i32
    %14 = arith.extui %13 : i1 to i32
    %c0_i32_9 = arith.constant 0 : i32
    %15 = arith.cmpi ne, %14, %c0_i32_9 : i32
    scf.if %15 {
      %c0_10 = arith.constant 0 : index
      %c0_11 = arith.constant 0 : index
      %16 = vector.load %arg5[%c0_10, %c0_11] : memref<32x64xbf16, #tpu.memory_space<vmem>>, vector<32x64xbf16>
      %17 = arith.maximumf %16, %9 : vector<32x64xbf16>
      %c0_12 = arith.constant 0 : index
      %c0_13 = arith.constant 0 : index
      %18 = vector.load %arg5[%c0_12, %c0_13] : memref<32x64xbf16, #tpu.memory_space<vmem>>, vector<32x64xbf16>
      tpu.vector_store %arg5[%c0_12, %c0_13], %17 {strides = array<i32>} : memref<32x64xbf16, #tpu.memory_space<vmem>>, vector<32x64xbf16>,
    } else {
    }
    return
  }
  func.func @transform_0(%arg0: i32, %arg1: i32) -> (i32, i32, i32) {
    %c0_i32 = arith.constant 0 : i32
    %c0_i32_0 = arith.constant 0 : i32
    return %arg1, %arg0, %c0_i32 : i32, i32, i32
  }
  func.func @transform_1(%arg0: i32, %arg1: i32) -> (i32, i32) {
    %c0_i32 = arith.constant 0 : i32
    %c0_i32_0 = arith.constant 0 : i32
    %c0_i32_1 = arith.constant 0 : i32
    return %c0_i32, %c0_i32_0 : i32, i32
  }
  func.func @transform_2(%arg0: i32, %arg1: i32) -> (i32, i32) {
    %c0_i32 = arith.constant 0 : i32
    %c0_i32_0 = arith.constant 0 : i32
    %c0_i32_1 = arith.constant 0 : i32
    return %c0_i32, %c0_i32_0 : i32, i32
  }
  func.func @transform_3(%arg0: i32, %arg1: i32) -> (i32, i32) {
    %c0_i32 = arith.constant 0 : i32
    %c0_i32_0 = arith.constant 0 : i32
    return %arg0, %c0_i32 : i32, i32
  }
}

module attributes {stable_mosaic.version = 11 : i64} {
  func.func @_mlp_kernel(%arg0: i32, %arg1: memref<8x1024xbf16, #tpu.memory_space<vmem>>, %arg2: memref<1024x512xbf16, #tpu.memory_space<vmem>>, %arg3: memref<1x512xf32, #tpu.memory_space<vmem>>, %arg4: memref<512x10xbf16, #tpu.memory_space<vmem>>, %arg5: memref<1x10xf32, #tpu.memory_space<vmem>>, %arg6: memref<8x10xf32, #tpu.memory_space<vmem>>) attributes {dimension_semantics = [#tpu.dimension_semantics<parallel>], iteration_bounds = array<i64: 1>, scalar_prefetch = 0 : i64, scratch_operands = 0 : i64, tpu.core_type = #tpu.core_type<tc>, window_params = [{transform_indices = @transform_0, window_bounds = array<i64: 8, 1024>}, {pipeline_mode = #tpu.pipeline_mode<synchronous>, transform_indices = @transform_1, window_bounds = array<i64: 1024, 512>}, {pipeline_mode = #tpu.pipeline_mode<synchronous>, transform_indices = @transform_2, window_bounds = array<i64: 1, 512>}, {pipeline_mode = #tpu.pipeline_mode<synchronous>, transform_indices = @transform_3, window_bounds = array<i64: 512, 10>}, {pipeline_mode = #tpu.pipeline_mode<synchronous>, transform_indices = @transform_4, window_bounds = array<i64: 1, 10>}, {transform_indices = @transform_5, window_bounds = array<i64: 8, 10>}]} {
    %c0 = arith.constant 0 : index
    %c0_0 = arith.constant 0 : index
    %0 = vector.load %arg1[%c0, %c0_0] : memref<8x1024xbf16, #tpu.memory_space<vmem>>, vector<8x1024xbf16>
    %c0_1 = arith.constant 0 : index
    %c0_2 = arith.constant 0 : index
    %1 = vector.load %arg2[%c0_1, %c0_2] : memref<1024x512xbf16, #tpu.memory_space<vmem>>, vector<1024x512xbf16>
    %cst = arith.constant dense<0.000000e+00> : vector<8x512xf32>
    %2 = tpu.matmul %0, %1, %cst {dimension_numbers = #tpu.dot_dimension_numbers<[1], [0], [0], [1], [0, 0, 1, 1], [], []>} : vector<8x1024xbf16>, vector<1024x512xbf16>, vector<8x512xf32> -> vector<8x512xf32>
    %c0_3 = arith.constant 0 : index
    %c0_4 = arith.constant 0 : index
    %3 = vector.load %arg3[%c0_3, %c0_4] : memref<1x512xf32, #tpu.memory_space<vmem>>, vector<1x512xf32>
    %4 = vector.broadcast %3 : vector<1x512xf32> to vector<8x512xf32>
    %5 = arith.addf %2, %4 : vector<8x512xf32>
    %cst_5 = arith.constant 0.000000e+00 : f32
    %6 = vector.broadcast %cst_5 : f32 to vector<8x512xf32>
    %7 = arith.maximumf %5, %6 : vector<8x512xf32>
    %8 = arith.truncf %7 : vector<8x512xf32> to vector<8x512xbf16>
    %c0_6 = arith.constant 0 : index
    %c0_7 = arith.constant 0 : index
    %9 = vector.load %arg4[%c0_6, %c0_7] : memref<512x10xbf16, #tpu.memory_space<vmem>>, vector<512x10xbf16>
    %cst_8 = arith.constant dense<0.000000e+00> : vector<8x10xf32>
    %10 = tpu.matmul %8, %9, %cst_8 {dimension_numbers = #tpu.dot_dimension_numbers<[1], [0], [0], [1], [0, 0, 1, 1], [], []>} : vector<8x512xbf16>, vector<512x10xbf16>, vector<8x10xf32> -> vector<8x10xf32>
    %c0_9 = arith.constant 0 : index
    %c0_10 = arith.constant 0 : index
    %11 = vector.load %arg5[%c0_9, %c0_10] : memref<1x10xf32, #tpu.memory_space<vmem>>, vector<1x10xf32>
    %12 = vector.broadcast %11 : vector<1x10xf32> to vector<8x10xf32>
    %13 = arith.addf %10, %12 : vector<8x10xf32>
    %c0_11 = arith.constant 0 : index
    %c0_12 = arith.constant 0 : index
    %14 = vector.load %arg6[%c0_11, %c0_12] : memref<8x10xf32, #tpu.memory_space<vmem>>, vector<8x10xf32>
    tpu.vector_store %arg6[%c0_11, %c0_12], %13 {strides = array<i32>} : memref<8x10xf32, #tpu.memory_space<vmem>>, vector<8x10xf32>,
    return
  }
  func.func @transform_0(%arg0: i32) -> (i32, i32) {
    %c0_i32 = arith.constant 0 : i32
    %c0_i32_0 = arith.constant 0 : i32
    return %arg0, %c0_i32 : i32, i32
  }
  func.func @transform_1(%arg0: i32) -> (i32, i32) {
    %c0_i32 = arith.constant 0 : i32
    %c0_i32_0 = arith.constant 0 : i32
    %c0_i32_1 = arith.constant 0 : i32
    return %c0_i32, %c0_i32_0 : i32, i32
  }
  func.func @transform_2(%arg0: i32) -> (i32, i32) {
    %c0_i32 = arith.constant 0 : i32
    %c0_i32_0 = arith.constant 0 : i32
    %c0_i32_1 = arith.constant 0 : i32
    return %c0_i32, %c0_i32_0 : i32, i32
  }
  func.func @transform_3(%arg0: i32) -> (i32, i32) {
    %c0_i32 = arith.constant 0 : i32
    %c0_i32_0 = arith.constant 0 : i32
    %c0_i32_1 = arith.constant 0 : i32
    return %c0_i32, %c0_i32_0 : i32, i32
  }
  func.func @transform_4(%arg0: i32) -> (i32, i32) {
    %c0_i32 = arith.constant 0 : i32
    %c0_i32_0 = arith.constant 0 : i32
    %c0_i32_1 = arith.constant 0 : i32
    return %c0_i32, %c0_i32_0 : i32, i32
  }
  func.func @transform_5(%arg0: i32) -> (i32, i32) {
    %c0_i32 = arith.constant 0 : i32
    %c0_i32_0 = arith.constant 0 : i32
    return %arg0, %c0_i32 : i32, i32
  }
}

</mosaic_0001>

<llo_original>
// kernel: mnist_forward.3
$region0: #{mnist_forward.3}
  #allocation0 [shape = 'u32[]', space=smem, size = 0x4, offset = 0x4, fixed_abs, tag = 'smem constant byte address 0x4 - core index']
  #allocation1 [shape = 'u32[144,128]{1,0:T(1,128)}', space=vmem, size = 0x12000, scoped, tag = 'internal scratch']
  %s0 = inlined_call_operand.vmem [shape: bf16[4,288,25], index: 0, kind: input, shape index: {}]
  %s1 = inlined_call_operand.vmem [shape: bf16[25,32], index: 1, kind: input, shape index: {}]
  %s2 = inlined_call_operand.vmem [shape: f32[1,32], index: 2, kind: input, shape index: {}]
  %s3 = inlined_call_operand.vmem [shape: bf16[288,32], index: 3, kind: output, shape index: {}]
  %s4 = sld [smem:[#allocation0]]
  $region53: #{mnist_forward.3} parent=0
    _
  %s6 = ssub.s32 1, %s4
  %s7 = scalar_select 0, %s6, %s4
  loop: start=0, step=1, limit=6
  $region2: #{mnist_forward.3} parent=0 // loop_pre_header
    _
  $region3: #{mnist_forward.3} parent=0 // loop_header
    %s9 = sphi 0, %s13
    %p10 = scmp.ge.s32.totalorder %s9, 6
    %s16 = sphi 0, %s28
    %s17 = sphi 0, %s24
    %s18 = sphi 0, %s16
    %s19 = sphi 0, %s17
    %s20 = sphi 0, %s18
    %s21 = sphi 0, %s19
    %s33 = sphi 0, %s35
    %s36 = sphi 0, %s33
    %s37 = sphi 0, %s36
    %s53 = sphi 0, %s37
    %s57 = sphi 0, %s57
    %s59 = sphi 0, %s57
    %s60 = sphi 0, %s59
    %s74 = sphi 0, %s60
    %s78 = sphi 0, %s78
    %s80 = sphi 0, %s78
    %s81 = sphi 0, %s80
    %s95 = sphi 0, %s81
    %s101 = sphi 0, %s103
    %s104 = sphi 0, %s101
    %s105 = sphi 0, %s104
    %s121 = sphi 0, %s105
  $region4: #{mnist_forward.3} parent=0 // loop_header_branch
    %12 = sbr.rel (%p10) target = $region8
  $region5: #{mnist_forward.3} parent=0 // loop_body
    %s14 = ssub.s32 %s9, 1
    %s15 = ssub.s32 %s9, 2
    %s22 = sadd.s32 1, %s17
    %p23 = scmp.ge.s32.totalorder %s22, 4
    %s24 = scalar_select %p23, 0, %s22
    %s25 = sadd.s32 1, %s16
    %s26 = scalar_select %p23, %s25, %s16
    %p27 = scmp.ge.s32.totalorder %s26, 1
    %s28 = scalar_select %p27, 0, %s26
    %s29 = ssub.s32 %s17, %s24
    %s30 = ssub.s32 %s16, %s28
    %s31 = sor.u32 %s29, %s30
    %p32 = scmp.eq.s32.totalorder %s31, 0
    %s34 = sadd.s32 %s33, 1
    %s35 = scalar_select %p32, %s33, %s34
    %p38 = pneg %p32
    %p39 = scmp.eq.s32.totalorder %s9, 3
    %p40 = por %p38, %p39
    %p41 = scmp.ne.s32.totalorder %s33, %s36
    %p42 = scmp.eq.s32.totalorder %s9, 0
    %p43 = por %p41, %p42
    %p44 = scmp.ne.s32.totalorder %s33, %s36
    %p45 = scmp.eq.s32.totalorder %s14, 3
    %p46 = por %p44, %p45
    %p47 = scmp.ne.s32.totalorder %s36, %s37
    %p48 = scmp.eq.s32.totalorder %s14, 0
    %p49 = por %p47, %p48
    %p50 = scmp.ne.s32.totalorder %s36, %s37
    %p51 = scmp.eq.s32.totalorder %s15, 3
    %p52 = por %p50, %p51
    %p54 = scmp.ne.s32.totalorder %s37, %s53
    %p55 = scmp.eq.s32.totalorder %s15, 0
    %p56 = por %p54, %p55
    %s58 = sadd.s32 %s57, 1
    %p61 = scmp.eq.s32.totalorder %s9, 3
    %p62 = scmp.ne.s32.totalorder %s57, %s59
    %p63 = scmp.eq.s32.totalorder %s9, 0
    %p64 = por %p62, %p63
    %p65 = scmp.ne.s32.totalorder %s57, %s59
    %p66 = scmp.eq.s32.totalorder %s14, 3
    %p67 = por %p65, %p66
    %p68 = scmp.ne.s32.totalorder %s59, %s60
    %p69 = scmp.eq.s32.totalorder %s14, 0
    %p70 = por %p68, %p69
    %p71 = scmp.ne.s32.totalorder %s59, %s60
    %p72 = scmp.eq.s32.totalorder %s15, 3
    %p73 = por %p71, %p72
    %p75 = scmp.ne.s32.totalorder %s60, %s74
    %p76 = scmp.eq.s32.totalorder %s15, 0
    %p77 = por %p75, %p76
    %s79 = sadd.s32 %s78, 1
    %p82 = scmp.eq.s32.totalorder %s9, 3
    %p83 = scmp.ne.s32.totalorder %s78, %s80
    %p84 = scmp.eq.s32.totalorder %s9, 0
    %p85 = por %p83, %p84
    %p86 = scmp.ne.s32.totalorder %s78, %s80
    %p87 = scmp.eq.s32.totalorder %s14, 3
    %p88 = por %p86, %p87
    %p89 = scmp.ne.s32.totalorder %s80, %s81
    %p90 = scmp.eq.s32.totalorder %s14, 0
    %p91 = por %p89, %p90
    %p92 = scmp.ne.s32.totalorder %s80, %s81
    %p93 = scmp.eq.s32.totalorder %s15, 3
    %p94 = por %p92, %p93
    %p96 = scmp.ne.s32.totalorder %s81, %s95
    %p97 = scmp.eq.s32.totalorder %s15, 0
    %p98 = por %p96, %p97
    %s99 = ssub.s32 %s16, %s28
    %p100 = scmp.eq.s32.totalorder %s99, 0
    %s102 = sadd.s32 %s101, 1
    %s103 = scalar_select %p100, %s101, %s102
    %p106 = pneg %p100
    %p107 = scmp.eq.s32.totalorder %s9, 3
    %p108 = por %p106, %p107
    %p109 = scmp.ne.s32.totalorder %s101, %s104
    %p110 = scmp.eq.s32.totalorder %s9, 0
    %p111 = por %p109, %p110
    %p112 = scmp.ne.s32.totalorder %s101, %s104
    %p113 = scmp.eq.s32.totalorder %s14, 3
    %p114 = por %p112, %p113
    %p115 = scmp.ne.s32.totalorder %s104, %s105
    %p116 = scmp.eq.s32.totalorder %s14, 0
    %p117 = por %p115, %p116
    %p118 = scmp.ne.s32.totalorder %s104, %s105
    %p119 = scmp.eq.s32.totalorder %s15, 3
    %p120 = por %p118, %p119
    %p122 = scmp.ne.s32.totalorder %s105, %s121
    %p123 = scmp.eq.s32.totalorder %s15, 0
    %p124 = por %p122, %p123
    %p125 = scmp.le.s32.totalorder 1, %s9
    %p126 = scmp.lt.s32.totalorder %s9, 5
    %p127 = pnand %p125, %p126
    %p128 = pneg %p127
    // Predicated region
    $region9: #{mnist_forward.3} parent=5 // pred_check
      _
    $region10: #{mnist_forward.3} parent=5 // pred_check_branch
      %130 = sbr.rel (%p127) target = $region12
    $region11: #{mnist_forward.3} parent=5 // pred_region
      %s131 = ssub.s32 %s9, 1
      // Predicated region
      $region13: #{mnist_forward.3} parent=11 // pred_check
        %p132 = pneg %p70
      $region14: #{mnist_forward.3} parent=11 // pred_check_branch
        %134 = sbr.rel (%p132) target = $region16
      $region15: #{mnist_forward.3} parent=11 // pred_region
        _
      $region16: #{mnist_forward.3} parent=11 // pred_fallthru
        _
      // Predicated region
      $region17: #{mnist_forward.3} parent=11 // pred_check
        %p135 = pneg %p91
      $region18: #{mnist_forward.3} parent=11 // pred_check_branch
        %137 = sbr.rel (%p135) target = $region20
      $region19: #{mnist_forward.3} parent=11 // pred_region
        _
      $region20: #{mnist_forward.3} parent=11 // pred_fallthru
        _
    $region12: #{mnist_forward.3} parent=5 // pred_fallthru
      _
    %p138 = scmp.lt.s32.totalorder %s9, 4
    // Predicated region
    $region21: #{mnist_forward.3} parent=5 // pred_check
      %p139 = pneg %p138
    $region22: #{mnist_forward.3} parent=5 // pred_check_branch
      %141 = sbr.rel (%p139) target = $region24
    $region23: #{mnist_forward.3} parent=5 // pred_region
      // Predicated region
      $region25: #{mnist_forward.3} parent=23 // pred_check
        %p142 = pneg %p43
      $region26: #{mnist_forward.3} parent=23 // pred_check_branch
        %144 = sbr.rel (%p142) target = $region28
      $region27: #{mnist_forward.3} parent=23 // pred_region
        %s145 = smul.u32 36, %s16
        %p146 = scmp.lt.s32.totalorder %s17, 3
        %s147 = scalar_select %p146, %s17, 3
        %p148 = scmp.lt.s32.totalorder %s145, 35
        %s149 = scalar_select %p148, %s145, 35
        %s150 = smul.addr %s147, 36
        %s151 = sadd.s32 %s149, %s150
        %s152 = smul.addr %s151, 4
        %s153 = scalar_lea.vmem %s0, %s152
        %s154 = smul.u32 36, %s16
      $region28: #{mnist_forward.3} parent=23 // pred_fallthru
        _
    $region24: #{mnist_forward.3} parent=5 // pred_fallthru
      _
    %p155 = scmp.le.s32.totalorder 1, %s9
    %p156 = scmp.lt.s32.totalorder %s9, 5
    %p157 = pnand %p155, %p156
    %p158 = pneg %p157
    // Predicated region
    $region29: #{mnist_forward.3} parent=5 // pred_check
      _
    $region30: #{mnist_forward.3} parent=5 // pred_check_branch
      %160 = sbr.rel (%p157) target = $region32
    $region31: #{mnist_forward.3} parent=5 // pred_region
      %s161 = ssub.s32 %s9, 1
      %s162 = smul.u32 36, %s18
      %p163 = scmp.lt.s32.totalorder %s19, 3
      %s164 = scalar_select %p163, %s19, 3
      %p165 = scmp.lt.s32.totalorder %s162, 35
      %s166 = scalar_select %p165, %s162, 35
      %s167 = smul.addr %s164, 36
      %s168 = sadd.s32 %s166, %s167
      %s169 = smul.addr %s168, 4
      %s170 = scalar_lea.vmem %s0, %s169
      %p171 = pneg %p49
      %p172 = pneg %p46
      %p173 = pneg %p70
      %p174 = pneg %p67
      %p175 = pneg %p91
      %p176 = pneg %p88
      %p177 = pneg %p117
      %p178 = pneg %p114
      %s179 = smul.u32 36, %s18
      %p180 = scmp.lt.s32.totalorder %s179, 35
      %s181 = scalar_select %p180, %s179, 35
      %s182 = smul.addr %s181, 4
      %s183 = scalar_lea.vmem %s3, %s182
      %s184 = smul.u32 36, %s18
      %p185 = scmp.lt.s32.totalorder %s19, 3
      %s186 = scalar_select %p185, %s19, 3
      %p187 = scmp.lt.s32.totalorder %s184, 35
      %s188 = scalar_select %p187, %s184, 35
      %s189 = smul.addr %s186, 36
      %s190 = sadd.s32 %s188, %s189
      %s191 = smul.addr %s190, 4
      %s192 = scalar_lea.vmem %s0, %s191
      %s193 = smul.u32 36, %s18
      %s194 = smul.u32 36, %s18
      %p195 = scmp.lt.s32.totalorder %s194, 35
      %s196 = scalar_select %p195, %s194, 35
      %s197 = smul.addr %s196, 4
      %s198 = scalar_lea.vmem %s3, %s197
      %s199 = smul.u32 36, %s18
      %v201 = vld [vmem:[%s192] sm:$0xf]
      %v202 = vld [vmem:[%s192 + $0x4] sm:$0xf]
      %v203 = vld [vmem:[%s192 + $0x8] sm:$0xf]
      %v204 = vld [vmem:[%s192 + $0xc] sm:$0xf]
      %v205 = vld [vmem:[%s192 + $0x10] sm:$0xf]
      %v206 = vld [vmem:[%s192 + $0x14] sm:$0xf]
      %v207 = vld [vmem:[%s192 + $0x18] sm:$0xf]
      %v208 = vld [vmem:[%s192 + $0x1c] sm:$0xf]
      %v209 = vld [vmem:[%s192 + $0x20] sm:$0xf]
      %v210 = vld [vmem:[%s192 + $0x24] sm:$0xf]
      %v211 = vld [vmem:[%s192 + $0x28] sm:$0xf]
      %v212 = vld [vmem:[%s192 + $0x2c] sm:$0xf]
      %v213 = vld [vmem:[%s192 + $0x30] sm:$0xf]
      %v214 = vld [vmem:[%s192 + $0x34] sm:$0xf]
      %v215 = vld [vmem:[%s192 + $0x38] sm:$0xf]
      %v216 = vld [vmem:[%s192 + $0x3c] sm:$0xf]
      %v217 = vld [vmem:[%s192 + $0x40] sm:$0xf]
      %v218 = vld [vmem:[%s192 + $0x44] sm:$0xf]
      %v219 = vld [vmem:[%s192 + $0x48] sm:$0xf]
      %v220 = vld [vmem:[%s192 + $0x4c] sm:$0xf]
      %v221 = vld [vmem:[%s192 + $0x50] sm:$0xf]
      %v222 = vld [vmem:[%s192 + $0x54] sm:$0xf]
      %v223 = vld [vmem:[%s192 + $0x58] sm:$0xf]
      %v224 = vld [vmem:[%s192 + $0x5c] sm:$0xf]
      %v225 = vld [vmem:[%s192 + $0x60] sm:$0xf]
      %v226 = vld [vmem:[%s192 + $0x64] sm:$0xf]
      %v227 = vld [vmem:[%s192 + $0x68] sm:$0xf]
      %v228 = vld [vmem:[%s192 + $0x6c] sm:$0xf]
      %v229 = vld [vmem:[%s192 + $0x70] sm:$0xf]
      %v230 = vld [vmem:[%s192 + $0x74] sm:$0xf]
      %v231 = vld [vmem:[%s192 + $0x78] sm:$0xf]
      %v232 = vld [vmem:[%s192 + $0x7c] sm:$0xf]
      %v233 = vld [vmem:[%s192 + $0x80] sm:$0xf]
      %v234 = vld [vmem:[%s192 + $0x84] sm:$0xf]
      %v235 = vld [vmem:[%s192 + $0x88] sm:$0xf]
      %v236 = vld [vmem:[%s192 + $0x8c] sm:$0xf]
      %v237 = vld [vmem:[%s1] sm:$0xf]
      %v238 = vld [vmem:[%s1 + $0x4] sm:$0xf]
      %v239 = vld [vmem:[%s1 + $0x8] sm:$0xf]
      %v240 = vld [vmem:[%s1 + $0xc] sm:$0x1]
      %v241 = vld [vmem:[%s2] sm:$0x1]
      %v243 = vlaneseq
      %v244 = vshrl.u32 %v243, 7
      %v245 = vsub.s32 0, %v244
      %v246 = vrot.slane %v241, %v245
      %v284 = vunpack.c.l.b16 %v201
      %v285 = vunpack.c.l.b16 %v202
      %v286 = vunpack.c.l.b16 %v203
      %v287 = vunpack.c.l.b16 %v204
      %v288 = vunpack.c.l.b16 %v205
      %v289 = vunpack.c.l.b16 %v206
      %v290 = vunpack.c.l.b16 %v207
      %v291 = vunpack.c.l.b16 %v208
      %v292 = vunpack.c.l.b16 %v209
      %v293 = vunpack.c.l.b16 %v210
      %v294 = vunpack.c.l.b16 %v211
      %v295 = vunpack.c.l.b16 %v212
      %v296 = vunpack.c.l.b16 %v213
      %v297 = vunpack.c.l.b16 %v214
      %v298 = vunpack.c.l.b16 %v215
      %v299 = vunpack.c.l.b16 %v216
      %v300 = vunpack.c.l.b16 %v217
      %v301 = vunpack.c.l.b16 %v218
      %v302 = vunpack.c.l.b16 %v219
      %v303 = vunpack.c.l.b16 %v220
      %v304 = vunpack.c.l.b16 %v221
      %v305 = vunpack.c.l.b16 %v222
      %v306 = vunpack.c.l.b16 %v223
      %v307 = vunpack.c.l.b16 %v224
      %v308 = vunpack.c.l.b16 %v225
      %v309 = vunpack.c.l.b16 %v226
      %v310 = vunpack.c.l.b16 %v227
      %v311 = vunpack.c.l.b16 %v228
      %v312 = vunpack.c.l.b16 %v229
      %v313 = vunpack.c.l.b16 %v230
      %v314 = vunpack.c.l.b16 %v231
      %v315 = vunpack.c.l.b16 %v232
      %v316 = vunpack.c.l.b16 %v233
      %v317 = vunpack.c.l.b16 %v234
      %v318 = vunpack.c.l.b16 %v235
      %v319 = vunpack.c.l.b16 %v236
      %v320 = vpack.c.b16 %v285, %v284
      %v321 = vpack.c.b16 %v287, %v286
      %v322 = vpack.c.b16 %v289, %v288
      %v323 = vpack.c.b16 %v291, %v290
      %v324 = vpack.c.b16 %v293, %v292
      %v325 = vpack.c.b16 %v295, %v294
      %v326 = vpack.c.b16 %v297, %v296
      %v327 = vpack.c.b16 %v299, %v298
      %v328 = vpack.c.b16 %v301, %v300
      %v329 = vpack.c.b16 %v303, %v302
      %v330 = vpack.c.b16 %v305, %v304
      %v331 = vpack.c.b16 %v307, %v306
      %v332 = vpack.c.b16 %v309, %v308
      %v333 = vpack.c.b16 %v311, %v310
      %v334 = vpack.c.b16 %v313, %v312
      %v335 = vpack.c.b16 %v315, %v314
      %v336 = vpack.c.b16 %v317, %v316
      %v337 = vpack.c.b16 %v319, %v318
      %v342 = vunpack.c.l.b16 %v237
      %v343 = vunpack.c.l.b16 %v238
      %v344 = vunpack.c.l.b16 %v239
      %v345 = vunpack.c.l.b16 %v240
      %v346 = vpack.c.b16 %v343, %v342
      %v347 = vpack.c.b16 %v345, %v344
      %vm349 = vcmask 203776
      %v351 = vsel %vm349, %v320, 0
      %v354 = vsel %vm349, %v321, 0
      %v357 = vsel %vm349, %v322, 0
      %v360 = vsel %vm349, %v323, 0
      %v363 = vsel %vm349, %v324, 0
      %v366 = vsel %vm349, %v325, 0
      %v369 = vsel %vm349, %v326, 0
      %v372 = vsel %vm349, %v327, 0
      %v375 = vsel %vm349, %v328, 0
      %v378 = vsel %vm349, %v329, 0
      %v381 = vsel %vm349, %v330, 0
      %v384 = vsel %vm349, %v331, 0
      %v387 = vsel %vm349, %v332, 0
      %v390 = vsel %vm349, %v333, 0
      %v393 = vsel %vm349, %v334, 0
      %v396 = vsel %vm349, %v335, 0
      %v399 = vsel %vm349, %v336, 0
      %v402 = vsel %vm349, %v337, 0
      %vm404 = vcmask 1043456
      %vm405 = vcmask 1044480
      %v406 = vsel %vm404, 4294967295, 65535
      %v407 = vsel %vm405, %v406, 0
      %v409 = vand.u32 %v347, %v407
      %411 = vmatprep.subr.bf16.mxu0 0
      %412 = vmatpush1.bf16.msra.mxu0 0
      %413 = vmatprep.subr.bf16.mxu0 0
      %414 = vmatpush1.bf16.msra.mxu0 0
      %415 = vmatprep.subr.bf16.mxu0 0
      %416 = vmatpush1.bf16.msra.mxu0 0
      %417 = vmatprep.subr.bf16.mxu0 0
      %418 = vmatpush1.bf16.msra.mxu0 0
      %419 = vmatprep.subr.bf16.mxu0 0
      %420 = vmatpush1.bf16.msra.mxu0 0
      %421 = vmatprep.subr.bf16.mxu0 0
      %422 = vmatpush1.bf16.msra.mxu0 0
      %423 = vmatprep.subr.bf16.mxu0 0
      %424 = vmatpush1.bf16.msra.mxu0 %v409
      %425 = vmatprep.subr.bf16.mxu0 0
      %426 = vmatpush1.bf16.msra.mxu0 %v346
      %427 = vmatprep.subr.bf16.mxu0 0
      %428 = vmatpush2.bf16.msra.mxu0 0
      %429 = vmatprep.subr.bf16.mxu0 0
      %430 = vmatpush2.bf16.msra.mxu0 0
      %431 = vmatprep.subr.bf16.mxu0 0
      %432 = vmatpush2.bf16.msra.mxu0 0
      %433 = vmatprep.subr.bf16.mxu0 0
      %434 = vmatpush2.bf16.msra.mxu0 0
      %435 = vmatprep.subr.bf16.mxu0 0
      %436 = vmatpush2.bf16.msra.mxu0 0
      %437 = vmatprep.subr.bf16.mxu0 0
      %438 = vmatpush2.bf16.msra.mxu0 0
      %439 = vmatprep.subr.bf16.mxu0 0
      %440 = vmatpush2.bf16.msra.mxu0 0
      %441 = vmatprep.subr.bf16.mxu0 0
      %442 = vmatpush2.bf16.msra.mxu0 0
      %443 = vmatprep.mubr.bf16.mxu0 0
      %444 = vmatmul.mubr.bf16.gmra.mxu0 %v351
      %v445 = vpop.f32.mrf.mxu0
      %v446 = vadd.f32 %v246, %v445
      %v447 = vpop.f32.mrf.mxu0
      %v448 = vpop.f32.mrf.mxu0
      %v449 = vadd.f32 %v246, %v448
      %v450 = vpop.f32.mrf.mxu0
      %451 = vmatprep.mubr.bf16.mxu0 0
      %452 = vmatmul.mubr.bf16.gmra.mxu0 %v354
      %v453 = vpop.f32.mrf.mxu0
      %v454 = vadd.f32 %v246, %v453
      %v455 = vpop.f32.mrf.mxu0
      %v456 = vpop.f32.mrf.mxu0
      %v457 = vadd.f32 %v246, %v456
      %v458 = vpop.f32.mrf.mxu0
      %459 = vmatprep.mubr.bf16.mxu0 0
      %460 = vmatmul.mubr.bf16.gmra.mxu0 %v357
      %v461 = vpop.f32.mrf.mxu0
      %v462 = vadd.f32 %v246, %v461
      %v463 = vpop.f32.mrf.mxu0
      %v464 = vpop.f32.mrf.mxu0
      %v465 = vadd.f32 %v246, %v464
      %v466 = vpop.f32.mrf.mxu0
      %467 = vmatprep.mubr.bf16.mxu0 0
      %468 = vmatmul.mubr.bf16.gmra.mxu0 %v360
      %v469 = vpop.f32.mrf.mxu0
      %v470 = vadd.f32 %v246, %v469
      %v471 = vpop.f32.mrf.mxu0
      %v472 = vpop.f32.mrf.mxu0
      %v473 = vadd.f32 %v246, %v472
      %v474 = vpop.f32.mrf.mxu0
      %475 = vmatprep.mubr.bf16.mxu0 0
      %476 = vmatmul.mubr.bf16.gmra.mxu0 %v363
      %v477 = vpop.f32.mrf.mxu0
      %v478 = vadd.f32 %v246, %v477
      %v479 = vpop.f32.mrf.mxu0
      %v480 = vpop.f32.mrf.mxu0
      %v481 = vadd.f32 %v246, %v480
      %v482 = vpop.f32.mrf.mxu0
      %483 = vmatprep.mubr.bf16.mxu0 0
      %484 = vmatmul.mubr.bf16.gmra.mxu0 %v366
      %v485 = vpop.f32.mrf.mxu0
      %v486 = vadd.f32 %v246, %v485
      %v487 = vpop.f32.mrf.mxu0
      %v488 = vpop.f32.mrf.mxu0
      %v489 = vadd.f32 %v246, %v488
      %v490 = vpop.f32.mrf.mxu0
      %491 = vmatprep.mubr.bf16.mxu0 0
      %492 = vmatmul.mubr.bf16.gmra.mxu0 %v369
      %v493 = vpop.f32.mrf.mxu0
      %v494 = vadd.f32 %v246, %v493
      %v495 = vpop.f32.mrf.mxu0
      %v496 = vpop.f32.mrf.mxu0
      %v497 = vadd.f32 %v246, %v496
      %v498 = vpop.f32.mrf.mxu0
      %499 = vmatprep.mubr.bf16.mxu0 0
      %500 = vmatmul.mubr.bf16.gmra.mxu0 %v372
      %v501 = vpop.f32.mrf.mxu0
      %v502 = vadd.f32 %v246, %v501
      %v503 = vpop.f32.mrf.mxu0
      %v504 = vpop.f32.mrf.mxu0
      %v505 = vadd.f32 %v246, %v504
      %v506 = vpop.f32.mrf.mxu0
      %507 = vmatprep.mubr.bf16.mxu0 0
      %508 = vmatmul.mubr.bf16.gmra.mxu0 %v375
      %v509 = vpop.f32.mrf.mxu0
      %v510 = vadd.f32 %v246, %v509
      %v511 = vpop.f32.mrf.mxu0
      %v512 = vpop.f32.mrf.mxu0
      %v513 = vadd.f32 %v246, %v512
      %v514 = vpop.f32.mrf.mxu0
      %515 = vmatprep.mubr.bf16.mxu0 0
      %516 = vmatmul.mubr.bf16.gmra.mxu0 %v378
      %v517 = vpop.f32.mrf.mxu0
      %v518 = vadd.f32 %v246, %v517
      %v519 = vpop.f32.mrf.mxu0
      %v520 = vpop.f32.mrf.mxu0
      %v521 = vadd.f32 %v246, %v520
      %v522 = vpop.f32.mrf.mxu0
      %523 = vmatprep.mubr.bf16.mxu0 0
      %524 = vmatmul.mubr.bf16.gmra.mxu0 %v381
      %v525 = vpop.f32.mrf.mxu0
      %v526 = vadd.f32 %v246, %v525
      %v527 = vpop.f32.mrf.mxu0
      %v528 = vpop.f32.mrf.mxu0
      %v529 = vadd.f32 %v246, %v528
      %v530 = vpop.f32.mrf.mxu0
      %531 = vmatprep.mubr.bf16.mxu0 0
      %532 = vmatmul.mubr.bf16.gmra.mxu0 %v384
      %v533 = vpop.f32.mrf.mxu0
      %v534 = vadd.f32 %v246, %v533
      %v535 = vpop.f32.mrf.mxu0
      %v536 = vpop.f32.mrf.mxu0
      %v537 = vadd.f32 %v246, %v536
      %v538 = vpop.f32.mrf.mxu0
      %539 = vmatprep.mubr.bf16.mxu0 0
      %540 = vmatmul.mubr.bf16.gmra.mxu0 %v387
      %v541 = vpop.f32.mrf.mxu0
      %v542 = vadd.f32 %v246, %v541
      %v543 = vpop.f32.mrf.mxu0
      %v544 = vpop.f32.mrf.mxu0
      %v545 = vadd.f32 %v246, %v544
      %v546 = vpop.f32.mrf.mxu0
      %547 = vmatprep.mubr.bf16.mxu0 0
      %548 = vmatmul.mubr.bf16.gmra.mxu0 %v390
      %v549 = vpop.f32.mrf.mxu0
      %v550 = vadd.f32 %v246, %v549
      %v551 = vpop.f32.mrf.mxu0
      %v552 = vpop.f32.mrf.mxu0
      %v553 = vadd.f32 %v246, %v552
      %v554 = vpop.f32.mrf.mxu0
      %555 = vmatprep.mubr.bf16.mxu0 0
      %556 = vmatmul.mubr.bf16.gmra.mxu0 %v393
      %v557 = vpop.f32.mrf.mxu0
      %v558 = vadd.f32 %v246, %v557
      %v559 = vpop.f32.mrf.mxu0
      %v560 = vpop.f32.mrf.mxu0
      %v561 = vadd.f32 %v246, %v560
      %v562 = vpop.f32.mrf.mxu0
      %563 = vmatprep.mubr.bf16.mxu0 0
      %564 = vmatmul.mubr.bf16.gmra.mxu0 %v396
      %v565 = vpop.f32.mrf.mxu0
      %v566 = vadd.f32 %v246, %v565
      %v567 = vpop.f32.mrf.mxu0
      %v568 = vpop.f32.mrf.mxu0
      %v569 = vadd.f32 %v246, %v568
      %v570 = vpop.f32.mrf.mxu0
      %571 = vmatprep.mubr.bf16.mxu0 0
      %572 = vmatmul.mubr.bf16.gmra.mxu0 %v399
      %v573 = vpop.f32.mrf.mxu0
      %v574 = vadd.f32 %v246, %v573
      %v575 = vpop.f32.mrf.mxu0
      %v576 = vpop.f32.mrf.mxu0
      %v577 = vadd.f32 %v246, %v576
      %v578 = vpop.f32.mrf.mxu0
      %579 = vmatprep.mubr.bf16.mxu0 0
      %580 = vmatmul.mubr.bf16.gmra.mxu0 %v402
      %v581 = vpop.f32.mrf.mxu0
      %v582 = vadd.f32 %v246, %v581
      %v583 = vpop.f32.mrf.mxu0
      %v584 = vpop.f32.mrf.mxu0
      %v585 = vadd.f32 %v246, %v584
      %v586 = vpop.f32.mrf.mxu0
      %587 = vdwg.mxu0
      %v588 = vmax.f32 %v446, 0.0
      %v589 = vmax.f32 %v449, 0.0
      %v590 = vmax.f32 %v454, 0.0
      %v591 = vmax.f32 %v457, 0.0
      %v592 = vmax.f32 %v462, 0.0
      %v593 = vmax.f32 %v465, 0.0
      %v594 = vmax.f32 %v470, 0.0
      %v595 = vmax.f32 %v473, 0.0
      %v596 = vmax.f32 %v478, 0.0
      %v597 = vmax.f32 %v481, 0.0
      %v598 = vmax.f32 %v486, 0.0
      %v599 = vmax.f32 %v489, 0.0
      %v600 = vmax.f32 %v494, 0.0
      %v601 = vmax.f32 %v497, 0.0
      %v602 = vmax.f32 %v502, 0.0
      %v603 = vmax.f32 %v505, 0.0
      %v604 = vmax.f32 %v510, 0.0
      %v605 = vmax.f32 %v513, 0.0
      %v606 = vmax.f32 %v518, 0.0
      %v607 = vmax.f32 %v521, 0.0
      %v608 = vmax.f32 %v526, 0.0
      %v609 = vmax.f32 %v529, 0.0
      %v610 = vmax.f32 %v534, 0.0
      %v611 = vmax.f32 %v537, 0.0
      %v612 = vmax.f32 %v542, 0.0
      %v613 = vmax.f32 %v545, 0.0
      %v614 = vmax.f32 %v550, 0.0
      %v615 = vmax.f32 %v553, 0.0
      %v616 = vmax.f32 %v558, 0.0
      %v617 = vmax.f32 %v561, 0.0
      %v618 = vmax.f32 %v566, 0.0
      %v619 = vmax.f32 %v569, 0.0
      %v620 = vmax.f32 %v574, 0.0
      %v621 = vmax.f32 %v577, 0.0
      %v622 = vmax.f32 %v582, 0.0
      %v623 = vmax.f32 %v585, 0.0
      %v624 = vpack.c.bf16 %v589, %v588
      %v625 = vpack.c.bf16 %v591, %v590
      %v626 = vpack.c.bf16 %v593, %v592
      %v627 = vpack.c.bf16 %v595, %v594
      %v628 = vpack.c.bf16 %v597, %v596
      %v629 = vpack.c.bf16 %v599, %v598
      %v630 = vpack.c.bf16 %v601, %v600
      %v631 = vpack.c.bf16 %v603, %v602
      %v632 = vpack.c.bf16 %v605, %v604
      %v633 = vpack.c.bf16 %v607, %v606
      %v634 = vpack.c.bf16 %v609, %v608
      %v635 = vpack.c.bf16 %v611, %v610
      %v636 = vpack.c.bf16 %v613, %v612
      %v637 = vpack.c.bf16 %v615, %v614
      %v638 = vpack.c.bf16 %v617, %v616
      %v639 = vpack.c.bf16 %v619, %v618
      %v640 = vpack.c.bf16 %v621, %v620
      %v641 = vpack.c.bf16 %v623, %v622
      %p642 = scmp.eq.s32.totalorder %s19, 0
      // Predicated region
      $region33: #{mnist_forward.3} parent=31 // pred_check
        %p643 = pneg %p642
      $region34: #{mnist_forward.3} parent=31 // pred_check_branch
        %645 = sbr.rel (%p643) target = $region36
      $region35: #{mnist_forward.3} parent=31 // pred_region
        %v664 = vunpack.c.l.b16 %v624
        %v665 = vunpack.c.h.b16 %v624
        %v666 = vunpack.c.l.b16 %v625
        %v667 = vunpack.c.h.b16 %v625
        %v668 = vunpack.c.l.b16 %v626
        %v669 = vunpack.c.h.b16 %v626
        %v670 = vunpack.c.l.b16 %v627
        %v671 = vunpack.c.h.b16 %v627
        %v672 = vunpack.c.l.b16 %v628
        %v673 = vunpack.c.h.b16 %v628
        %v674 = vunpack.c.l.b16 %v629
        %v675 = vunpack.c.h.b16 %v629
        %v676 = vunpack.c.l.b16 %v630
        %v677 = vunpack.c.h.b16 %v630
        %v678 = vunpack.c.l.b16 %v631
        %v679 = vunpack.c.h.b16 %v631
        %v680 = vunpack.c.l.b16 %v632
        %v681 = vunpack.c.h.b16 %v632
        %v682 = vunpack.c.l.b16 %v633
        %v683 = vunpack.c.h.b16 %v633
        %v684 = vunpack.c.l.b16 %v634
        %v685 = vunpack.c.h.b16 %v634
        %v686 = vunpack.c.l.b16 %v635
        %v687 = vunpack.c.h.b16 %v635
        %v688 = vunpack.c.l.b16 %v636
        %v689 = vunpack.c.h.b16 %v636
        %v690 = vunpack.c.l.b16 %v637
        %v691 = vunpack.c.h.b16 %v637
        %v692 = vunpack.c.l.b16 %v638
        %v693 = vunpack.c.h.b16 %v638
        %v694 = vunpack.c.l.b16 %v639
        %v695 = vunpack.c.h.b16 %v639
        %v696 = vunpack.c.l.b16 %v640
        %v697 = vunpack.c.h.b16 %v640
        %v698 = vunpack.c.l.b16 %v641
        %v699 = vunpack.c.h.b16 %v641
        %v700 = vpack.c.b16 %v664, %v664
        %v701 = vpack.c.b16 %v665, %v665
        %v702 = vpack.c.b16 %v666, %v666
        %v703 = vpack.c.b16 %v667, %v667
        %v704 = vpack.c.b16 %v668, %v668
        %v705 = vpack.c.b16 %v669, %v669
        %v706 = vpack.c.b16 %v670, %v670
        %v707 = vpack.c.b16 %v671, %v671
        %v708 = vpack.c.b16 %v672, %v672
        %v709 = vpack.c.b16 %v673, %v673
        %v710 = vpack.c.b16 %v674, %v674
        %v711 = vpack.c.b16 %v675, %v675
        %v712 = vpack.c.b16 %v676, %v676
        %v713 = vpack.c.b16 %v677, %v677
        %v714 = vpack.c.b16 %v678, %v678
        %v715 = vpack.c.b16 %v679, %v679
        %v716 = vpack.c.b16 %v680, %v680
        %v717 = vpack.c.b16 %v681, %v681
        %v718 = vpack.c.b16 %v682, %v682
        %v719 = vpack.c.b16 %v683, %v683
        %v720 = vpack.c.b16 %v684, %v684
        %v721 = vpack.c.b16 %v685, %v685
        %v722 = vpack.c.b16 %v686, %v686
        %v723 = vpack.c.b16 %v687, %v687
        %v724 = vpack.c.b16 %v688, %v688
        %v725 = vpack.c.b16 %v689, %v689
        %v726 = vpack.c.b16 %v690, %v690
        %v727 = vpack.c.b16 %v691, %v691
        %v728 = vpack.c.b16 %v692, %v692
        %v729 = vpack.c.b16 %v693, %v693
        %v730 = vpack.c.b16 %v694, %v694
        %v731 = vpack.c.b16 %v695, %v695
        %v732 = vpack.c.b16 %v696, %v696
        %v733 = vpack.c.b16 %v697, %v697
        %v734 = vpack.c.b16 %v698, %v698
        %v735 = vpack.c.b16 %v699, %v699
        %vm772 = vcmask 257024
        %773 = vst.msk [vmem:[%s198] sm:$0xf] %vm772, %v700
        %774 = vst.msk [vmem:[%s198 + $0x4] sm:$0xf] %vm772, %v701
        %775 = vst.msk [vmem:[%s198 + $0x8] sm:$0xf] %vm772, %v702
        %776 = vst.msk [vmem:[%s198 + $0xc] sm:$0xf] %vm772, %v703
        %777 = vst.msk [vmem:[%s198 + $0x10] sm:$0xf] %vm772, %v704
        %778 = vst.msk [vmem:[%s198 + $0x14] sm:$0xf] %vm772, %v705
        %779 = vst.msk [vmem:[%s198 + $0x18] sm:$0xf] %vm772, %v706
        %780 = vst.msk [vmem:[%s198 + $0x1c] sm:$0xf] %vm772, %v707
        %781 = vst.msk [vmem:[%s198 + $0x20] sm:$0xf] %vm772, %v708
        %782 = vst.msk [vmem:[%s198 + $0x24] sm:$0xf] %vm772, %v709
        %783 = vst.msk [vmem:[%s198 + $0x28] sm:$0xf] %vm772, %v710
        %784 = vst.msk [vmem:[%s198 + $0x2c] sm:$0xf] %vm772, %v711
        %785 = vst.msk [vmem:[%s198 + $0x30] sm:$0xf] %vm772, %v712
        %786 = vst.msk [vmem:[%s198 + $0x34] sm:$0xf] %vm772, %v713
        %787 = vst.msk [vmem:[%s198 + $0x38] sm:$0xf] %vm772, %v714
        %788 = vst.msk [vmem:[%s198 + $0x3c] sm:$0xf] %vm772, %v715
        %789 = vst.msk [vmem:[%s198 + $0x40] sm:$0xf] %vm772, %v716
        %790 = vst.msk [vmem:[%s198 + $0x44] sm:$0xf] %vm772, %v717
        %791 = vst.msk [vmem:[%s198 + $0x48] sm:$0xf] %vm772, %v718
        %792 = vst.msk [vmem:[%s198 + $0x4c] sm:$0xf] %vm772, %v719
        %793 = vst.msk [vmem:[%s198 + $0x50] sm:$0xf] %vm772, %v720
        %794 = vst.msk [vmem:[%s198 + $0x54] sm:$0xf] %vm772, %v721
        %795 = vst.msk [vmem:[%s198 + $0x58] sm:$0xf] %vm772, %v722
        %796 = vst.msk [vmem:[%s198 + $0x5c] sm:$0xf] %vm772, %v723
        %797 = vst.msk [vmem:[%s198 + $0x60] sm:$0xf] %vm772, %v724
        %798 = vst.msk [vmem:[%s198 + $0x64] sm:$0xf] %vm772, %v725
        %799 = vst.msk [vmem:[%s198 + $0x68] sm:$0xf] %vm772, %v726
        %800 = vst.msk [vmem:[%s198 + $0x6c] sm:$0xf] %vm772, %v727
        %801 = vst.msk [vmem:[%s198 + $0x70] sm:$0xf] %vm772, %v728
        %802 = vst.msk [vmem:[%s198 + $0x74] sm:$0xf] %vm772, %v729
        %803 = vst.msk [vmem:[%s198 + $0x78] sm:$0xf] %vm772, %v730
        %804 = vst.msk [vmem:[%s198 + $0x7c] sm:$0xf] %vm772, %v731
        %805 = vst.msk [vmem:[%s198 + $0x80] sm:$0xf] %vm772, %v732
        %806 = vst.msk [vmem:[%s198 + $0x84] sm:$0xf] %vm772, %v733
        %807 = vst.msk [vmem:[%s198 + $0x88] sm:$0xf] %vm772, %v734
        %808 = vst.msk [vmem:[%s198 + $0x8c] sm:$0xf] %vm772, %v735
      $region36: #{mnist_forward.3} parent=31 // pred_fallthru
        _
      %p809 = scmp.gt.s32.totalorder %s19, 0
      // Predicated region
      $region37: #{mnist_forward.3} parent=31 // pred_check
        %p810 = pneg %p809
      $region38: #{mnist_forward.3} parent=31 // pred_check_branch
        %812 = sbr.rel (%p810) target = $region40
      $region39: #{mnist_forward.3} parent=31 // pred_region
        %v813 = vld [vmem:[%s198] sm:$0xf]
        %v814 = vld [vmem:[%s198 + $0x4] sm:$0xf]
        %v815 = vld [vmem:[%s198 + $0x8] sm:$0xf]
        %v816 = vld [vmem:[%s198 + $0xc] sm:$0xf]
        %v817 = vld [vmem:[%s198 + $0x10] sm:$0xf]
        %v818 = vld [vmem:[%s198 + $0x14] sm:$0xf]
        %v819 = vld [vmem:[%s198 + $0x18] sm:$0xf]
        %v820 = vld [vmem:[%s198 + $0x1c] sm:$0xf]
        %v821 = vld [vmem:[%s198 + $0x20] sm:$0xf]
        %v822 = vld [vmem:[%s198 + $0x24] sm:$0xf]
        %v823 = vld [vmem:[%s198 + $0x28] sm:$0xf]
        %v824 = vld [vmem:[%s198 + $0x2c] sm:$0xf]
        %v825 = vld [vmem:[%s198 + $0x30] sm:$0xf]
        %v826 = vld [vmem:[%s198 + $0x34] sm:$0xf]
        %v827 = vld [vmem:[%s198 + $0x38] sm:$0xf]
        %v828 = vld [vmem:[%s198 + $0x3c] sm:$0xf]
        %v829 = vld [vmem:[%s198 + $0x40] sm:$0xf]
        %v830 = vld [vmem:[%s198 + $0x44] sm:$0xf]
        %v831 = vld [vmem:[%s198 + $0x48] sm:$0xf]
        %v832 = vld [vmem:[%s198 + $0x4c] sm:$0xf]
        %v833 = vld [vmem:[%s198 + $0x50] sm:$0xf]
        %v834 = vld [vmem:[%s198 + $0x54] sm:$0xf]
        %v835 = vld [vmem:[%s198 + $0x58] sm:$0xf]
        %v836 = vld [vmem:[%s198 + $0x5c] sm:$0xf]
        %v837 = vld [vmem:[%s198 + $0x60] sm:$0xf]
        %v838 = vld [vmem:[%s198 + $0x64] sm:$0xf]
        %v839 = vld [vmem:[%s198 + $0x68] sm:$0xf]
        %v840 = vld [vmem:[%s198 + $0x6c] sm:$0xf]
        %v841 = vld [vmem:[%s198 + $0x70] sm:$0xf]
        %v842 = vld [vmem:[%s198 + $0x74] sm:$0xf]
        %v843 = vld [vmem:[%s198 + $0x78] sm:$0xf]
        %v844 = vld [vmem:[%s198 + $0x7c] sm:$0xf]
        %v845 = vld [vmem:[%s198 + $0x80] sm:$0xf]
        %v846 = vld [vmem:[%s198 + $0x84] sm:$0xf]
        %v847 = vld [vmem:[%s198 + $0x88] sm:$0xf]
        %v848 = vld [vmem:[%s198 + $0x8c] sm:$0xf]
        %v867 = vunpack.c.l.b16 %v624
        %v868 = vunpack.c.h.b16 %v624
        %v869 = vunpack.c.l.b16 %v625
        %v870 = vunpack.c.h.b16 %v625
        %v871 = vunpack.c.l.b16 %v626
        %v872 = vunpack.c.h.b16 %v626
        %v873 = vunpack.c.l.b16 %v627
        %v874 = vunpack.c.h.b16 %v627
        %v875 = vunpack.c.l.b16 %v628
        %v876 = vunpack.c.h.b16 %v628
        %v877 = vunpack.c.l.b16 %v629
        %v878 = vunpack.c.h.b16 %v629
        %v879 = vunpack.c.l.b16 %v630
        %v880 = vunpack.c.h.b16 %v630
        %v881 = vunpack.c.l.b16 %v631
        %v882 = vunpack.c.h.b16 %v631
        %v883 = vunpack.c.l.b16 %v632
        %v884 = vunpack.c.h.b16 %v632
        %v885 = vunpack.c.l.b16 %v633
        %v886 = vunpack.c.h.b16 %v633
        %v887 = vunpack.c.l.b16 %v634
        %v888 = vunpack.c.h.b16 %v634
        %v889 = vunpack.c.l.b16 %v635
        %v890 = vunpack.c.h.b16 %v635
        %v891 = vunpack.c.l.b16 %v636
        %v892 = vunpack.c.h.b16 %v636
        %v893 = vunpack.c.l.b16 %v637
        %v894 = vunpack.c.h.b16 %v637
        %v895 = vunpack.c.l.b16 %v638
        %v896 = vunpack.c.h.b16 %v638
        %v897 = vunpack.c.l.b16 %v639
        %v898 = vunpack.c.h.b16 %v639
        %v899 = vunpack.c.l.b16 %v640
        %v900 = vunpack.c.h.b16 %v640
        %v901 = vunpack.c.l.b16 %v641
        %v902 = vunpack.c.h.b16 %v641
        %v903 = vpack.c.b16 %v867, %v867
        %v904 = vpack.c.b16 %v868, %v868
        %v905 = vpack.c.b16 %v869, %v869
        %v906 = vpack.c.b16 %v870, %v870
        %v907 = vpack.c.b16 %v871, %v871
        %v908 = vpack.c.b16 %v872, %v872
        %v909 = vpack.c.b16 %v873, %v873
        %v910 = vpack.c.b16 %v874, %v874
        %v911 = vpack.c.b16 %v875, %v875
        %v912 = vpack.c.b16 %v876, %v876
        %v913 = vpack.c.b16 %v877, %v877
        %v914 = vpack.c.b16 %v878, %v878
        %v915 = vpack.c.b16 %v879, %v879
        %v916 = vpack.c.b16 %v880, %v880
        %v917 = vpack.c.b16 %v881, %v881
        %v918 = vpack.c.b16 %v882, %v882
        %v919 = vpack.c.b16 %v883, %v883
        %v920 = vpack.c.b16 %v884, %v884
        %v921 = vpack.c.b16 %v885, %v885
        %v922 = vpack.c.b16 %v886, %v886
        %v923 = vpack.c.b16 %v887, %v887
        %v924 = vpack.c.b16 %v888, %v888
        %v925 = vpack.c.b16 %v889, %v889
        %v926 = vpack.c.b16 %v890, %v890
        %v927 = vpack.c.b16 %v891, %v891
        %v928 = vpack.c.b16 %v892, %v892
        %v929 = vpack.c.b16 %v893, %v893
        %v930 = vpack.c.b16 %v894, %v894
        %v931 = vpack.c.b16 %v895, %v895
        %v932 = vpack.c.b16 %v896, %v896
        %v933 = vpack.c.b16 %v897, %v897
        %v934 = vpack.c.b16 %v898, %v898
        %v935 = vpack.c.b16 %v899, %v899
        %v936 = vpack.c.b16 %v900, %v900
        %v937 = vpack.c.b16 %v901, %v901
        %v938 = vpack.c.b16 %v902, %v902
        %v975 = vmax.bf16 %v813, %v903
        %v976 = vmax.bf16 %v814, %v904
        %v977 = vmax.bf16 %v815, %v905
        %v978 = vmax.bf16 %v816, %v906
        %v979 = vmax.bf16 %v817, %v907
        %v980 = vmax.bf16 %v818, %v908
        %v981 = vmax.bf16 %v819, %v909
        %v982 = vmax.bf16 %v820, %v910
        %v983 = vmax.bf16 %v821, %v911
        %v984 = vmax.bf16 %v822, %v912
        %v985 = vmax.bf16 %v823, %v913
        %v986 = vmax.bf16 %v824, %v914
        %v987 = vmax.bf16 %v825, %v915
        %v988 = vmax.bf16 %v826, %v916
        %v989 = vmax.bf16 %v827, %v917
        %v990 = vmax.bf16 %v828, %v918
        %v991 = vmax.bf16 %v829, %v919
        %v992 = vmax.bf16 %v830, %v920
        %v993 = vmax.bf16 %v831, %v921
        %v994 = vmax.bf16 %v832, %v922
        %v995 = vmax.bf16 %v833, %v923
        %v996 = vmax.bf16 %v834, %v924
        %v997 = vmax.bf16 %v835, %v925
        %v998 = vmax.bf16 %v836, %v926
        %v999 = vmax.bf16 %v837, %v927
        %v1000 = vmax.bf16 %v838, %v928
        %v1001 = vmax.bf16 %v839, %v929
        %v1002 = vmax.bf16 %v840, %v930
        %v1003 = vmax.bf16 %v841, %v931
        %v1004 = vmax.bf16 %v842, %v932
        %v1005 = vmax.bf16 %v843, %v933
        %v1006 = vmax.bf16 %v844, %v934
        %v1007 = vmax.bf16 %v845, %v935
        %v1008 = vmax.bf16 %v846, %v936
        %v1009 = vmax.bf16 %v847, %v937
        %v1010 = vmax.bf16 %v848, %v938
        %vm1011 = vcmask 257024
        %1012 = vst.msk [vmem:[%s198] sm:$0xf] %vm1011, %v975
        %1013 = vst.msk [vmem:[%s198 + $0x4] sm:$0xf] %vm1011, %v976
        %1014 = vst.msk [vmem:[%s198 + $0x8] sm:$0xf] %vm1011, %v977
        %1015 = vst.msk [vmem:[%s198 + $0xc] sm:$0xf] %vm1011, %v978
        %1016 = vst.msk [vmem:[%s198 + $0x10] sm:$0xf] %vm1011, %v979
        %1017 = vst.msk [vmem:[%s198 + $0x14] sm:$0xf] %vm1011, %v980
        %1018 = vst.msk [vmem:[%s198 + $0x18] sm:$0xf] %vm1011, %v981
        %1019 = vst.msk [vmem:[%s198 + $0x1c] sm:$0xf] %vm1011, %v982
        %1020 = vst.msk [vmem:[%s198 + $0x20] sm:$0xf] %vm1011, %v983
        %1021 = vst.msk [vmem:[%s198 + $0x24] sm:$0xf] %vm1011, %v984
        %1022 = vst.msk [vmem:[%s198 + $0x28] sm:$0xf] %vm1011, %v985
        %1023 = vst.msk [vmem:[%s198 + $0x2c] sm:$0xf] %vm1011, %v986
        %1024 = vst.msk [vmem:[%s198 + $0x30] sm:$0xf] %vm1011, %v987
        %1025 = vst.msk [vmem:[%s198 + $0x34] sm:$0xf] %vm1011, %v988
        %1026 = vst.msk [vmem:[%s198 + $0x38] sm:$0xf] %vm1011, %v989
        %1027 = vst.msk [vmem:[%s198 + $0x3c] sm:$0xf] %vm1011, %v990
        %1028 = vst.msk [vmem:[%s198 + $0x40] sm:$0xf] %vm1011, %v991
        %1029 = vst.msk [vmem:[%s198 + $0x44] sm:$0xf] %vm1011, %v992
        %1030 = vst.msk [vmem:[%s198 + $0x48] sm:$0xf] %vm1011, %v993
        %1031 = vst.msk [vmem:[%s198 + $0x4c] sm:$0xf] %vm1011, %v994
        %1032 = vst.msk [vmem:[%s198 + $0x50] sm:$0xf] %vm1011, %v995
        %1033 = vst.msk [vmem:[%s198 + $0x54] sm:$0xf] %vm1011, %v996
        %1034 = vst.msk [vmem:[%s198 + $0x58] sm:$0xf] %vm1011, %v997
        %1035 = vst.msk [vmem:[%s198 + $0x5c] sm:$0xf] %vm1011, %v998
        %1036 = vst.msk [vmem:[%s198 + $0x60] sm:$0xf] %vm1011, %v999
        %1037 = vst.msk [vmem:[%s198 + $0x64] sm:$0xf] %vm1011, %v1000
        %1038 = vst.msk [vmem:[%s198 + $0x68] sm:$0xf] %vm1011, %v1001
        %1039 = vst.msk [vmem:[%s198 + $0x6c] sm:$0xf] %vm1011, %v1002
        %1040 = vst.msk [vmem:[%s198 + $0x70] sm:$0xf] %vm1011, %v1003
        %1041 = vst.msk [vmem:[%s198 + $0x74] sm:$0xf] %vm1011, %v1004
        %1042 = vst.msk [vmem:[%s198 + $0x78] sm:$0xf] %vm1011, %v1005
        %1043 = vst.msk [vmem:[%s198 + $0x7c] sm:$0xf] %vm1011, %v1006
        %1044 = vst.msk [vmem:[%s198 + $0x80] sm:$0xf] %vm1011, %v1007
        %1045 = vst.msk [vmem:[%s198 + $0x84] sm:$0xf] %vm1011, %v1008
        %1046 = vst.msk [vmem:[%s198 + $0x88] sm:$0xf] %vm1011, %v1009
        %1047 = vst.msk [vmem:[%s198 + $0x8c] sm:$0xf] %vm1011, %v1010
      $region40: #{mnist_forward.3} parent=31 // pred_fallthru
        _
      %s1048 = smul.u32 36, %s18
      %p1049 = scmp.lt.s32.totalorder %s1048, 35
      %s1050 = scalar_select %p1049, %s1048, 35
      %s1051 = smul.addr %s1050, 4
      %s1052 = scalar_lea.vmem %s3, %s1051
      // Predicated region
      $region41: #{mnist_forward.3} parent=31 // pred_check
        %p1053 = pneg %p114
      $region42: #{mnist_forward.3} parent=31 // pred_check_branch
        %1055 = sbr.rel (%p1053) target = $region44
      $region43: #{mnist_forward.3} parent=31 // pred_region
        %s1056 = smul.u32 36, %s18
      $region44: #{mnist_forward.3} parent=31 // pred_fallthru
        _
      // Predicated region
      $region45: #{mnist_forward.3} parent=31 // pred_check
        %p1057 = pneg %p114
      $region46: #{mnist_forward.3} parent=31 // pred_check_branch
        %1059 = sbr.rel (%p1057) target = $region48
      $region47: #{mnist_forward.3} parent=31 // pred_region
        %s1060 = smul.u32 36, %s18
        %p1061 = scmp.lt.s32.totalorder %s1060, 35
        %s1062 = scalar_select %p1061, %s1060, 35
        %s1063 = smul.addr %s1062, 4
        %s1064 = scalar_lea.vmem %s3, %s1063
      $region48: #{mnist_forward.3} parent=31 // pred_fallthru
        _
    $region32: #{mnist_forward.3} parent=5 // pred_fallthru
      _
    %p1065 = scmp.le.s32.totalorder 2, %s9
    // Predicated region
    $region49: #{mnist_forward.3} parent=5 // pred_check
      %p1066 = pneg %p1065
    $region50: #{mnist_forward.3} parent=5 // pred_check_branch
      %1068 = sbr.rel (%p1066) target = $region52
    $region51: #{mnist_forward.3} parent=5 // pred_region
      %s1069 = ssub.s32 %s9, 2
    $region52: #{mnist_forward.3} parent=5 // pred_fallthru
      _
  $region6: #{mnist_forward.3} parent=0 // loop_footer
    %s13 = sadd.s32 1, %s9
  $region7: #{mnist_forward.3} parent=0 // loop_footer_branch
    %8 = sbr.rel target = $region3
  $region8: #{mnist_forward.3} parent=0 // loop_exit
    _

// kernel: mnist_forward.4
$region0: #{mnist_forward.4}
  #allocation0 [shape = 'u32[]', space=smem, size = 0x4, offset = 0x4, fixed_abs, tag = 'smem constant byte address 0x4 - core index']
  #allocation1 [shape = 'u32[144,128]{1,0:T(1,128)}', space=vmem, size = 0x12000, scoped, tag = 'internal scratch']
  %s0 = inlined_call_operand.vmem [shape: bf16[4,32,800], index: 0, kind: input, shape index: {}]
  %s1 = inlined_call_operand.vmem [shape: bf16[800,64], index: 1, kind: input, shape index: {}]
  %s2 = inlined_call_operand.vmem [shape: f32[1,64], index: 2, kind: input, shape index: {}]
  %s3 = inlined_call_operand.vmem [shape: bf16[32,64], index: 3, kind: output, shape index: {}]
  %s4 = sld [smem:[#allocation0]]
  $region53: #{mnist_forward.4} parent=0
    _
  %s6 = ssub.s32 1, %s4
  %s7 = scalar_select 0, %s6, %s4
  loop: start=0, step=1, limit=6
  $region2: #{mnist_forward.4} parent=0 // loop_pre_header
    _
  $region3: #{mnist_forward.4} parent=0 // loop_header
    %s9 = sphi 0, %s13
    %p10 = scmp.ge.s32.totalorder %s9, 6
    %s16 = sphi 0, %s28
    %s17 = sphi 0, %s24
    %s18 = sphi 0, %s16
    %s19 = sphi 0, %s17
    %s20 = sphi 0, %s18
    %s21 = sphi 0, %s19
    %s33 = sphi 0, %s35
    %s36 = sphi 0, %s33
    %s37 = sphi 0, %s36
    %s53 = sphi 0, %s37
    %s57 = sphi 0, %s57
    %s59 = sphi 0, %s57
    %s60 = sphi 0, %s59
    %s74 = sphi 0, %s60
    %s78 = sphi 0, %s78
    %s80 = sphi 0, %s78
    %s81 = sphi 0, %s80
    %s95 = sphi 0, %s81
    %s101 = sphi 0, %s103
    %s104 = sphi 0, %s101
    %s105 = sphi 0, %s104
    %s121 = sphi 0, %s105
  $region4: #{mnist_forward.4} parent=0 // loop_header_branch
    %12 = sbr.rel (%p10) target = $region8
  $region5: #{mnist_forward.4} parent=0 // loop_body
    %s14 = ssub.s32 %s9, 1
    %s15 = ssub.s32 %s9, 2
    %s22 = sadd.s32 1, %s17
    %p23 = scmp.ge.s32.totalorder %s22, 4
    %s24 = scalar_select %p23, 0, %s22
    %s25 = sadd.s32 1, %s16
    %s26 = scalar_select %p23, %s25, %s16
    %p27 = scmp.ge.s32.totalorder %s26, 1
    %s28 = scalar_select %p27, 0, %s26
    %s29 = ssub.s32 %s17, %s24
    %s30 = ssub.s32 %s16, %s28
    %s31 = sor.u32 %s29, %s30
    %p32 = scmp.eq.s32.totalorder %s31, 0
    %s34 = sadd.s32 %s33, 1
    %s35 = scalar_select %p32, %s33, %s34
    %p38 = pneg %p32
    %p39 = scmp.eq.s32.totalorder %s9, 3
    %p40 = por %p38, %p39
    %p41 = scmp.ne.s32.totalorder %s33, %s36
    %p42 = scmp.eq.s32.totalorder %s9, 0
    %p43 = por %p41, %p42
    %p44 = scmp.ne.s32.totalorder %s33, %s36
    %p45 = scmp.eq.s32.totalorder %s14, 3
    %p46 = por %p44, %p45
    %p47 = scmp.ne.s32.totalorder %s36, %s37
    %p48 = scmp.eq.s32.totalorder %s14, 0
    %p49 = por %p47, %p48
    %p50 = scmp.ne.s32.totalorder %s36, %s37
    %p51 = scmp.eq.s32.totalorder %s15, 3
    %p52 = por %p50, %p51
    %p54 = scmp.ne.s32.totalorder %s37, %s53
    %p55 = scmp.eq.s32.totalorder %s15, 0
    %p56 = por %p54, %p55
    %s58 = sadd.s32 %s57, 1
    %p61 = scmp.eq.s32.totalorder %s9, 3
    %p62 = scmp.ne.s32.totalorder %s57, %s59
    %p63 = scmp.eq.s32.totalorder %s9, 0
    %p64 = por %p62, %p63
    %p65 = scmp.ne.s32.totalorder %s57, %s59
    %p66 = scmp.eq.s32.totalorder %s14, 3
    %p67 = por %p65, %p66
    %p68 = scmp.ne.s32.totalorder %s59, %s60
    %p69 = scmp.eq.s32.totalorder %s14, 0
    %p70 = por %p68, %p69
    %p71 = scmp.ne.s32.totalorder %s59, %s60
    %p72 = scmp.eq.s32.totalorder %s15, 3
    %p73 = por %p71, %p72
    %p75 = scmp.ne.s32.totalorder %s60, %s74
    %p76 = scmp.eq.s32.totalorder %s15, 0
    %p77 = por %p75, %p76
    %s79 = sadd.s32 %s78, 1
    %p82 = scmp.eq.s32.totalorder %s9, 3
    %p83 = scmp.ne.s32.totalorder %s78, %s80
    %p84 = scmp.eq.s32.totalorder %s9, 0
    %p85 = por %p83, %p84
    %p86 = scmp.ne.s32.totalorder %s78, %s80
    %p87 = scmp.eq.s32.totalorder %s14, 3
    %p88 = por %p86, %p87
    %p89 = scmp.ne.s32.totalorder %s80, %s81
    %p90 = scmp.eq.s32.totalorder %s14, 0
    %p91 = por %p89, %p90
    %p92 = scmp.ne.s32.totalorder %s80, %s81
    %p93 = scmp.eq.s32.totalorder %s15, 3
    %p94 = por %p92, %p93
    %p96 = scmp.ne.s32.totalorder %s81, %s95
    %p97 = scmp.eq.s32.totalorder %s15, 0
    %p98 = por %p96, %p97
    %s99 = ssub.s32 %s16, %s28
    %p100 = scmp.eq.s32.totalorder %s99, 0
    %s102 = sadd.s32 %s101, 1
    %s103 = scalar_select %p100, %s101, %s102
    %p106 = pneg %p100
    %p107 = scmp.eq.s32.totalorder %s9, 3
    %p108 = por %p106, %p107
    %p109 = scmp.ne.s32.totalorder %s101, %s104
    %p110 = scmp.eq.s32.totalorder %s9, 0
    %p111 = por %p109, %p110
    %p112 = scmp.ne.s32.totalorder %s101, %s104
    %p113 = scmp.eq.s32.totalorder %s14, 3
    %p114 = por %p112, %p113
    %p115 = scmp.ne.s32.totalorder %s104, %s105
    %p116 = scmp.eq.s32.totalorder %s14, 0
    %p117 = por %p115, %p116
    %p118 = scmp.ne.s32.totalorder %s104, %s105
    %p119 = scmp.eq.s32.totalorder %s15, 3
    %p120 = por %p118, %p119
    %p122 = scmp.ne.s32.totalorder %s105, %s121
    %p123 = scmp.eq.s32.totalorder %s15, 0
    %p124 = por %p122, %p123
    %p125 = scmp.le.s32.totalorder 1, %s9
    %p126 = scmp.lt.s32.totalorder %s9, 5
    %p127 = pnand %p125, %p126
    %p128 = pneg %p127
    // Predicated region
    $region9: #{mnist_forward.4} parent=5 // pred_check
      _
    $region10: #{mnist_forward.4} parent=5 // pred_check_branch
      %130 = sbr.rel (%p127) target = $region12
    $region11: #{mnist_forward.4} parent=5 // pred_region
      %s131 = ssub.s32 %s9, 1
      // Predicated region
      $region13: #{mnist_forward.4} parent=11 // pred_check
        %p132 = pneg %p70
      $region14: #{mnist_forward.4} parent=11 // pred_check_branch
        %134 = sbr.rel (%p132) target = $region16
      $region15: #{mnist_forward.4} parent=11 // pred_region
        _
      $region16: #{mnist_forward.4} parent=11 // pred_fallthru
        _
      // Predicated region
      $region17: #{mnist_forward.4} parent=11 // pred_check
        %p135 = pneg %p91
      $region18: #{mnist_forward.4} parent=11 // pred_check_branch
        %137 = sbr.rel (%p135) target = $region20
      $region19: #{mnist_forward.4} parent=11 // pred_region
        _
      $region20: #{mnist_forward.4} parent=11 // pred_fallthru
        _
    $region12: #{mnist_forward.4} parent=5 // pred_fallthru
      _
    %p138 = scmp.lt.s32.totalorder %s9, 4
    // Predicated region
    $region21: #{mnist_forward.4} parent=5 // pred_check
      %p139 = pneg %p138
    $region22: #{mnist_forward.4} parent=5 // pred_check_branch
      %141 = sbr.rel (%p139) target = $region24
    $region23: #{mnist_forward.4} parent=5 // pred_region
      // Predicated region
      $region25: #{mnist_forward.4} parent=23 // pred_check
        %p142 = pneg %p43
      $region26: #{mnist_forward.4} parent=23 // pred_check_branch
        %144 = sbr.rel (%p142) target = $region28
      $region27: #{mnist_forward.4} parent=23 // pred_region
        %s145 = smul.u32 4, %s16
        %p146 = scmp.lt.s32.totalorder %s17, 3
        %s147 = scalar_select %p146, %s17, 3
        %p148 = scmp.lt.s32.totalorder %s145, 3
        %s149 = scalar_select %p148, %s145, 3
        %s150 = smul.addr %s149, 7
        %s151 = smul.addr %s147, 28
        %s152 = sadd.s32 %s150, %s151
        %s153 = smul.addr %s152, 4
        %s154 = scalar_lea.vmem %s0, %s153
        %s155 = smul.u32 4, %s16
      $region28: #{mnist_forward.4} parent=23 // pred_fallthru
        _
    $region24: #{mnist_forward.4} parent=5 // pred_fallthru
      _
    %p156 = scmp.le.s32.totalorder 1, %s9
    %p157 = scmp.lt.s32.totalorder %s9, 5
    %p158 = pnand %p156, %p157
    %p159 = pneg %p158
    // Predicated region
    $region29: #{mnist_forward.4} parent=5 // pred_check
      _
    $region30: #{mnist_forward.4} parent=5 // pred_check_branch
      %161 = sbr.rel (%p158) target = $region32
    $region31: #{mnist_forward.4} parent=5 // pred_region
      %s162 = ssub.s32 %s9, 1
      %s163 = smul.u32 4, %s18
      %p164 = scmp.lt.s32.totalorder %s19, 3
      %s165 = scalar_select %p164, %s19, 3
      %p166 = scmp.lt.s32.totalorder %s163, 3
      %s167 = scalar_select %p166, %s163, 3
      %s168 = smul.addr %s167, 7
      %s169 = smul.addr %s165, 28
      %s170 = sadd.s32 %s168, %s169
      %s171 = smul.addr %s170, 4
      %s172 = scalar_lea.vmem %s0, %s171
      %p173 = pneg %p49
      %p174 = pneg %p46
      %p175 = pneg %p70
      %p176 = pneg %p67
      %p177 = pneg %p91
      %p178 = pneg %p88
      %p179 = pneg %p117
      %p180 = pneg %p114
      %s181 = smul.u32 4, %s18
      %p182 = scmp.lt.s32.totalorder %s181, 3
      %s183 = scalar_select %p182, %s181, 3
      %s184 = smul.addr %s183, 4
      %s185 = scalar_lea.vmem %s3, %s184
      %s186 = smul.u32 4, %s18
      %p187 = scmp.lt.s32.totalorder %s19, 3
      %s188 = scalar_select %p187, %s19, 3
      %p189 = scmp.lt.s32.totalorder %s186, 3
      %s190 = scalar_select %p189, %s186, 3
      %s191 = smul.addr %s190, 7
      %s192 = smul.addr %s188, 28
      %s193 = sadd.s32 %s191, %s192
      %s194 = smul.addr %s193, 4
      %s195 = scalar_lea.vmem %s0, %s194
      %s196 = smul.u32 4, %s18
      %s197 = smul.u32 4, %s18
      %p198 = scmp.lt.s32.totalorder %s197, 3
      %s199 = scalar_select %p198, %s197, 3
      %s200 = smul.addr %s199, 4
      %s201 = scalar_lea.vmem %s3, %s200
      %s202 = smul.u32 4, %s18
      %v204 = vld [vmem:[%s195] sm:$0xff]
      %v205 = vld [vmem:[%s195 + $0x8] sm:$0xff]
      %v206 = vld [vmem:[%s195 + $0x10] sm:$0xff]
      %v207 = vld [vmem:[%s195 + $0x18] sm:$0xf]
      %v208 = vld [vmem:[%s195 + $0x1c] sm:$0xff]
      %v209 = vld [vmem:[%s195 + $0x24] sm:$0xff]
      %v210 = vld [vmem:[%s195 + $0x2c] sm:$0xff]
      %v211 = vld [vmem:[%s195 + $0x34] sm:$0xf]
      %v212 = vld [vmem:[%s195 + $0x38] sm:$0xff]
      %v213 = vld [vmem:[%s195 + $0x40] sm:$0xff]
      %v214 = vld [vmem:[%s195 + $0x48] sm:$0xff]
      %v215 = vld [vmem:[%s195 + $0x50] sm:$0xf]
      %v216 = vld [vmem:[%s195 + $0x54] sm:$0xff]
      %v217 = vld [vmem:[%s195 + $0x5c] sm:$0xff]
      %v218 = vld [vmem:[%s195 + $0x64] sm:$0xff]
      %v219 = vld [vmem:[%s195 + $0x6c] sm:$0xf]
      %v220 = vld [vmem:[%s1] sm:$0xf]
      %v221 = vld [vmem:[%s1 + $0x4] sm:$0xf]
      %v222 = vld [vmem:[%s1 + $0x8] sm:$0xf]
      %v223 = vld [vmem:[%s1 + $0xc] sm:$0xf]
      %v224 = vld [vmem:[%s1 + $0x10] sm:$0xf]
      %v225 = vld [vmem:[%s1 + $0x14] sm:$0xf]
      %v226 = vld [vmem:[%s1 + $0x18] sm:$0xf]
      %v227 = vld [vmem:[%s1 + $0x1c] sm:$0xf]
      %v228 = vld [vmem:[%s1 + $0x20] sm:$0xf]
      %v229 = vld [vmem:[%s1 + $0x24] sm:$0xf]
      %v230 = vld [vmem:[%s1 + $0x28] sm:$0xf]
      %v231 = vld [vmem:[%s1 + $0x2c] sm:$0xf]
      %v232 = vld [vmem:[%s1 + $0x30] sm:$0xf]
      %v233 = vld [vmem:[%s1 + $0x34] sm:$0xf]
      %v234 = vld [vmem:[%s1 + $0x38] sm:$0xf]
      %v235 = vld [vmem:[%s1 + $0x3c] sm:$0xf]
      %v236 = vld [vmem:[%s1 + $0x40] sm:$0xf]
      %v237 = vld [vmem:[%s1 + $0x44] sm:$0xf]
      %v238 = vld [vmem:[%s1 + $0x48] sm:$0xf]
      %v239 = vld [vmem:[%s1 + $0x4c] sm:$0xf]
      %v240 = vld [vmem:[%s1 + $0x50] sm:$0xf]
      %v241 = vld [vmem:[%s1 + $0x54] sm:$0xf]
      %v242 = vld [vmem:[%s1 + $0x58] sm:$0xf]
      %v243 = vld [vmem:[%s1 + $0x5c] sm:$0xf]
      %v244 = vld [vmem:[%s1 + $0x60] sm:$0xf]
      %v245 = vld [vmem:[%s1 + $0x64] sm:$0xf]
      %v246 = vld [vmem:[%s1 + $0x68] sm:$0xf]
      %v247 = vld [vmem:[%s1 + $0x6c] sm:$0xf]
      %v248 = vld [vmem:[%s1 + $0x70] sm:$0xf]
      %v249 = vld [vmem:[%s1 + $0x74] sm:$0xf]
      %v250 = vld [vmem:[%s1 + $0x78] sm:$0xf]
      %v251 = vld [vmem:[%s1 + $0x7c] sm:$0xf]
      %v252 = vld [vmem:[%s1 + $0x80] sm:$0xf]
      %v253 = vld [vmem:[%s1 + $0x84] sm:$0xf]
      %v254 = vld [vmem:[%s1 + $0x88] sm:$0xf]
      %v255 = vld [vmem:[%s1 + $0x8c] sm:$0xf]
      %v256 = vld [vmem:[%s1 + $0x90] sm:$0xf]
      %v257 = vld [vmem:[%s1 + $0x94] sm:$0xf]
      %v258 = vld [vmem:[%s1 + $0x98] sm:$0xf]
      %v259 = vld [vmem:[%s1 + $0x9c] sm:$0xf]
      %v260 = vld [vmem:[%s1 + $0xa0] sm:$0xf]
      %v261 = vld [vmem:[%s1 + $0xa4] sm:$0xf]
      %v262 = vld [vmem:[%s1 + $0xa8] sm:$0xf]
      %v263 = vld [vmem:[%s1 + $0xac] sm:$0xf]
      %v264 = vld [vmem:[%s1 + $0xb0] sm:$0xf]
      %v265 = vld [vmem:[%s1 + $0xb4] sm:$0xf]
      %v266 = vld [vmem:[%s1 + $0xb8] sm:$0xf]
      %v267 = vld [vmem:[%s1 + $0xbc] sm:$0xf]
      %v268 = vld [vmem:[%s1 + $0xc0] sm:$0xf]
      %v269 = vld [vmem:[%s1 + $0xc4] sm:$0xf]
      %v270 = vld [vmem:[%s1 + $0xc8] sm:$0xf]
      %v271 = vld [vmem:[%s1 + $0xcc] sm:$0xf]
      %v272 = vld [vmem:[%s1 + $0xd0] sm:$0xf]
      %v273 = vld [vmem:[%s1 + $0xd4] sm:$0xf]
      %v274 = vld [vmem:[%s1 + $0xd8] sm:$0xf]
      %v275 = vld [vmem:[%s1 + $0xdc] sm:$0xf]
      %v276 = vld [vmem:[%s1 + $0xe0] sm:$0xf]
      %v277 = vld [vmem:[%s1 + $0xe4] sm:$0xf]
      %v278 = vld [vmem:[%s1 + $0xe8] sm:$0xf]
      %v279 = vld [vmem:[%s1 + $0xec] sm:$0xf]
      %v280 = vld [vmem:[%s1 + $0xf0] sm:$0xf]
      %v281 = vld [vmem:[%s1 + $0xf4] sm:$0xf]
      %v282 = vld [vmem:[%s1 + $0xf8] sm:$0xf]
      %v283 = vld [vmem:[%s1 + $0xfc] sm:$0xf]
      %v284 = vld [vmem:[%s1 + $0x100] sm:$0xf]
      %v285 = vld [vmem:[%s1 + $0x104] sm:$0xf]
      %v286 = vld [vmem:[%s1 + $0x108] sm:$0xf]
      %v287 = vld [vmem:[%s1 + $0x10c] sm:$0xf]
      %v288 = vld [vmem:[%s1 + $0x110] sm:$0xf]
      %v289 = vld [vmem:[%s1 + $0x114] sm:$0xf]
      %v290 = vld [vmem:[%s1 + $0x118] sm:$0xf]
      %v291 = vld [vmem:[%s1 + $0x11c] sm:$0xf]
      %v292 = vld [vmem:[%s1 + $0x120] sm:$0xf]
      %v293 = vld [vmem:[%s1 + $0x124] sm:$0xf]
      %v294 = vld [vmem:[%s1 + $0x128] sm:$0xf]
      %v295 = vld [vmem:[%s1 + $0x12c] sm:$0xf]
      %v296 = vld [vmem:[%s1 + $0x130] sm:$0xf]
      %v297 = vld [vmem:[%s1 + $0x134] sm:$0xf]
      %v298 = vld [vmem:[%s1 + $0x138] sm:$0xf]
      %v299 = vld [vmem:[%s1 + $0x13c] sm:$0xf]
      %v300 = vld [vmem:[%s1 + $0x140] sm:$0xf]
      %v301 = vld [vmem:[%s1 + $0x144] sm:$0xf]
      %v302 = vld [vmem:[%s1 + $0x148] sm:$0xf]
      %v303 = vld [vmem:[%s1 + $0x14c] sm:$0xf]
      %v304 = vld [vmem:[%s1 + $0x150] sm:$0xf]
      %v305 = vld [vmem:[%s1 + $0x154] sm:$0xf]
      %v306 = vld [vmem:[%s1 + $0x158] sm:$0xf]
      %v307 = vld [vmem:[%s1 + $0x15c] sm:$0xf]
      %v308 = vld [vmem:[%s1 + $0x160] sm:$0xf]
      %v309 = vld [vmem:[%s1 + $0x164] sm:$0xf]
      %v310 = vld [vmem:[%s1 + $0x168] sm:$0xf]
      %v311 = vld [vmem:[%s1 + $0x16c] sm:$0xf]
      %v312 = vld [vmem:[%s1 + $0x170] sm:$0xf]
      %v313 = vld [vmem:[%s1 + $0x174] sm:$0xf]
      %v314 = vld [vmem:[%s1 + $0x178] sm:$0xf]
      %v315 = vld [vmem:[%s1 + $0x17c] sm:$0xf]
      %v316 = vld [vmem:[%s1 + $0x180] sm:$0xf]
      %v317 = vld [vmem:[%s1 + $0x184] sm:$0xf]
      %v318 = vld [vmem:[%s1 + $0x188] sm:$0xf]
      %v319 = vld [vmem:[%s1 + $0x18c] sm:$0xf]
      %v320 = vld [vmem:[%s2] sm:$0x1]
      %v322 = vlaneseq
      %v323 = vshrl.u32 %v322, 7
      %v324 = vsub.s32 0, %v323
      %v325 = vrot.slane %v320, %v324
      %v343 = vunpack.c.l.b16 %v204
      %v344 = vunpack.c.h.b16 %v204
      %v345 = vunpack.c.l.b16 %v205
      %v346 = vunpack.c.h.b16 %v205
      %v347 = vunpack.c.l.b16 %v206
      %v348 = vunpack.c.h.b16 %v206
      %v349 = vunpack.c.l.b16 %v207
      %v350 = vunpack.c.l.b16 %v208
      %v351 = vunpack.c.h.b16 %v208
      %v352 = vunpack.c.l.b16 %v209
      %v353 = vunpack.c.h.b16 %v209
      %v354 = vunpack.c.l.b16 %v210
      %v355 = vunpack.c.h.b16 %v210
      %v356 = vunpack.c.l.b16 %v211
      %v357 = vunpack.c.l.b16 %v212
      %v358 = vunpack.c.h.b16 %v212
      %v359 = vunpack.c.l.b16 %v213
      %v360 = vunpack.c.h.b16 %v213
      %v361 = vunpack.c.l.b16 %v214
      %v362 = vunpack.c.h.b16 %v214
      %v363 = vunpack.c.l.b16 %v215
      %v364 = vunpack.c.l.b16 %v216
      %v365 = vunpack.c.h.b16 %v216
      %v366 = vunpack.c.l.b16 %v217
      %v367 = vunpack.c.h.b16 %v217
      %v368 = vunpack.c.l.b16 %v218
      %v369 = vunpack.c.h.b16 %v218
      %v370 = vunpack.c.l.b16 %v219
      %v371 = vpack.c.b16 %v350, %v343
      %v372 = vpack.c.b16 %v351, %v344
      %v373 = vpack.c.b16 %v352, %v345
      %v374 = vpack.c.b16 %v353, %v346
      %v375 = vpack.c.b16 %v354, %v347
      %v376 = vpack.c.b16 %v355, %v348
      %v377 = vpack.c.b16 %v356, %v349
      %v378 = vpack.c.b16 %v364, %v357
      %v379 = vpack.c.b16 %v365, %v358
      %v380 = vpack.c.b16 %v366, %v359
      %v381 = vpack.c.b16 %v367, %v360
      %v382 = vpack.c.b16 %v368, %v361
      %v383 = vpack.c.b16 %v369, %v362
      %v384 = vpack.c.b16 %v370, %v363
      %v497 = vunpack.c.l.b16 %v220
      %v498 = vunpack.c.l.b16 %v221
      %v499 = vunpack.c.l.b16 %v222
      %v500 = vunpack.c.l.b16 %v223
      %v501 = vunpack.c.l.b16 %v224
      %v502 = vunpack.c.l.b16 %v225
      %v503 = vunpack.c.l.b16 %v226
      %v504 = vunpack.c.l.b16 %v227
      %v505 = vunpack.c.l.b16 %v228
      %v506 = vunpack.c.l.b16 %v229
      %v507 = vunpack.c.l.b16 %v230
      %v508 = vunpack.c.l.b16 %v231
      %v509 = vunpack.c.l.b16 %v232
      %v510 = vunpack.c.l.b16 %v233
      %v511 = vunpack.c.l.b16 %v234
      %v512 = vunpack.c.l.b16 %v235
      %v513 = vunpack.c.l.b16 %v236
      %v514 = vunpack.c.l.b16 %v237
      %v515 = vunpack.c.l.b16 %v238
      %v516 = vunpack.c.l.b16 %v239
      %v517 = vunpack.c.l.b16 %v240
      %v518 = vunpack.c.l.b16 %v241
      %v519 = vunpack.c.l.b16 %v242
      %v520 = vunpack.c.l.b16 %v243
      %v521 = vunpack.c.l.b16 %v244
      %v522 = vunpack.c.l.b16 %v245
      %v523 = vunpack.c.l.b16 %v246
      %v524 = vunpack.c.l.b16 %v247
      %v525 = vunpack.c.l.b16 %v248
      %v526 = vunpack.c.l.b16 %v249
      %v527 = vunpack.c.l.b16 %v250
      %v528 = vunpack.c.l.b16 %v251
      %v529 = vunpack.c.l.b16 %v252
      %v530 = vunpack.c.l.b16 %v253
      %v531 = vunpack.c.l.b16 %v254
      %v532 = vunpack.c.l.b16 %v255
      %v533 = vunpack.c.l.b16 %v256
      %v534 = vunpack.c.l.b16 %v257
      %v535 = vunpack.c.l.b16 %v258
      %v536 = vunpack.c.l.b16 %v259
      %v537 = vunpack.c.l.b16 %v260
      %v538 = vunpack.c.l.b16 %v261
      %v539 = vunpack.c.l.b16 %v262
      %v540 = vunpack.c.l.b16 %v263
      %v541 = vunpack.c.l.b16 %v264
      %v542 = vunpack.c.l.b16 %v265
      %v543 = vunpack.c.l.b16 %v266
      %v544 = vunpack.c.l.b16 %v267
      %v545 = vunpack.c.l.b16 %v268
      %v546 = vunpack.c.l.b16 %v269
      %v547 = vunpack.c.l.b16 %v270
      %v548 = vunpack.c.l.b16 %v271
      %v549 = vunpack.c.l.b16 %v272
      %v550 = vunpack.c.l.b16 %v273
      %v551 = vunpack.c.l.b16 %v274
      %v552 = vunpack.c.l.b16 %v275
      %v553 = vunpack.c.l.b16 %v276
      %v554 = vunpack.c.l.b16 %v277
      %v555 = vunpack.c.l.b16 %v278
      %v556 = vunpack.c.l.b16 %v279
      %v557 = vunpack.c.l.b16 %v280
      %v558 = vunpack.c.l.b16 %v281
      %v559 = vunpack.c.l.b16 %v282
      %v560 = vunpack.c.l.b16 %v283
      %v561 = vunpack.c.l.b16 %v284
      %v562 = vunpack.c.l.b16 %v285
      %v563 = vunpack.c.l.b16 %v286
      %v564 = vunpack.c.l.b16 %v287
      %v565 = vunpack.c.l.b16 %v288
      %v566 = vunpack.c.l.b16 %v289
      %v567 = vunpack.c.l.b16 %v290
      %v568 = vunpack.c.l.b16 %v291
      %v569 = vunpack.c.l.b16 %v292
      %v570 = vunpack.c.l.b16 %v293
      %v571 = vunpack.c.l.b16 %v294
      %v572 = vunpack.c.l.b16 %v295
      %v573 = vunpack.c.l.b16 %v296
      %v574 = vunpack.c.l.b16 %v297
      %v575 = vunpack.c.l.b16 %v298
      %v576 = vunpack.c.l.b16 %v299
      %v577 = vunpack.c.l.b16 %v300
      %v578 = vunpack.c.l.b16 %v301
      %v579 = vunpack.c.l.b16 %v302
      %v580 = vunpack.c.l.b16 %v303
      %v581 = vunpack.c.l.b16 %v304
      %v582 = vunpack.c.l.b16 %v305
      %v583 = vunpack.c.l.b16 %v306
      %v584 = vunpack.c.l.b16 %v307
      %v585 = vunpack.c.l.b16 %v308
      %v586 = vunpack.c.l.b16 %v309
      %v587 = vunpack.c.l.b16 %v310
      %v588 = vunpack.c.l.b16 %v311
      %v589 = vunpack.c.l.b16 %v312
      %v590 = vunpack.c.l.b16 %v313
      %v591 = vunpack.c.l.b16 %v314
      %v592 = vunpack.c.l.b16 %v315
      %v593 = vunpack.c.l.b16 %v316
      %v594 = vunpack.c.l.b16 %v317
      %v595 = vunpack.c.l.b16 %v318
      %v596 = vunpack.c.l.b16 %v319
      %v597 = vpack.c.b16 %v498, %v497
      %v598 = vpack.c.b16 %v500, %v499
      %v599 = vpack.c.b16 %v502, %v501
      %v600 = vpack.c.b16 %v504, %v503
      %v601 = vpack.c.b16 %v506, %v505
      %v602 = vpack.c.b16 %v508, %v507
      %v603 = vpack.c.b16 %v510, %v509
      %v604 = vpack.c.b16 %v512, %v511
      %v605 = vpack.c.b16 %v514, %v513
      %v606 = vpack.c.b16 %v516, %v515
      %v607 = vpack.c.b16 %v518, %v517
      %v608 = vpack.c.b16 %v520, %v519
      %v609 = vpack.c.b16 %v522, %v521
      %v610 = vpack.c.b16 %v524, %v523
      %v611 = vpack.c.b16 %v526, %v525
      %v612 = vpack.c.b16 %v528, %v527
      %v613 = vpack.c.b16 %v530, %v529
      %v614 = vpack.c.b16 %v532, %v531
      %v615 = vpack.c.b16 %v534, %v533
      %v616 = vpack.c.b16 %v536, %v535
      %v617 = vpack.c.b16 %v538, %v537
      %v618 = vpack.c.b16 %v540, %v539
      %v619 = vpack.c.b16 %v542, %v541
      %v620 = vpack.c.b16 %v544, %v543
      %v621 = vpack.c.b16 %v546, %v545
      %v622 = vpack.c.b16 %v548, %v547
      %v623 = vpack.c.b16 %v550, %v549
      %v624 = vpack.c.b16 %v552, %v551
      %v625 = vpack.c.b16 %v554, %v553
      %v626 = vpack.c.b16 %v556, %v555
      %v627 = vpack.c.b16 %v558, %v557
      %v628 = vpack.c.b16 %v560, %v559
      %v629 = vpack.c.b16 %v562, %v561
      %v630 = vpack.c.b16 %v564, %v563
      %v631 = vpack.c.b16 %v566, %v565
      %v632 = vpack.c.b16 %v568, %v567
      %v633 = vpack.c.b16 %v570, %v569
      %v634 = vpack.c.b16 %v572, %v571
      %v635 = vpack.c.b16 %v574, %v573
      %v636 = vpack.c.b16 %v576, %v575
      %v637 = vpack.c.b16 %v578, %v577
      %v638 = vpack.c.b16 %v580, %v579
      %v639 = vpack.c.b16 %v582, %v581
      %v640 = vpack.c.b16 %v584, %v583
      %v641 = vpack.c.b16 %v586, %v585
      %v642 = vpack.c.b16 %v588, %v587
      %v643 = vpack.c.b16 %v590, %v589
      %v644 = vpack.c.b16 %v592, %v591
      %v645 = vpack.c.b16 %v594, %v593
      %v646 = vpack.c.b16 %v596, %v595
      %vm697 = vcmask 261120
      %v699 = vsel %vm697, %v377, 0
      %v702 = vsel %vm697, %v384, 0
      %704 = vmatprep.subr.bf16.mxu0 0
      %705 = vmatpush1.bf16.msra.mxu0 %v604
      %706 = vmatprep.subr.bf16.mxu0 0
      %707 = vmatpush1.bf16.msra.mxu0 %v603
      %708 = vmatprep.subr.bf16.mxu0 0
      %709 = vmatpush1.bf16.msra.mxu0 %v602
      %710 = vmatprep.subr.bf16.mxu0 0
      %711 = vmatpush1.bf16.msra.mxu0 %v601
      %712 = vmatprep.subr.bf16.mxu0 0
      %713 = vmatpush1.bf16.msra.mxu0 %v600
      %714 = vmatprep.subr.bf16.mxu0 0
      %715 = vmatpush1.bf16.msra.mxu0 %v599
      %716 = vmatprep.subr.bf16.mxu0 0
      %717 = vmatpush1.bf16.msra.mxu0 %v598
      %718 = vmatprep.subr.bf16.mxu0 0
      %719 = vmatpush1.bf16.msra.mxu0 %v597
      %720 = vmatprep.subr.bf16.mxu0 0
      %721 = vmatpush2.bf16.msra.mxu0 %v612
      %722 = vmatprep.subr.bf16.mxu0 0
      %723 = vmatpush2.bf16.msra.mxu0 %v611
      %724 = vmatprep.subr.bf16.mxu0 0
      %725 = vmatpush2.bf16.msra.mxu0 %v610
      %726 = vmatprep.subr.bf16.mxu0 0
      %727 = vmatpush2.bf16.msra.mxu0 %v609
      %728 = vmatprep.subr.bf16.mxu0 0
      %729 = vmatpush2.bf16.msra.mxu0 %v608
      %730 = vmatprep.subr.bf16.mxu0 0
      %731 = vmatpush2.bf16.msra.mxu0 %v607
      %732 = vmatprep.subr.bf16.mxu0 0
      %733 = vmatpush2.bf16.msra.mxu0 %v606
      %734 = vmatprep.subr.bf16.mxu0 0
      %735 = vmatpush2.bf16.msra.mxu0 %v605
      %736 = vmatprep.mubr.bf16.mxu0 %v372
      %737 = vmatmul.mubr.bf16.gmra.mxu0 %v371
      %v738 = vpop.f32.mrf.mxu0
      %v739 = vadd.f32 %v325, %v738
      %v740 = vpop.f32.mrf.mxu0
      %v741 = vpop.f32.mrf.mxu0
      %v742 = vadd.f32 %v325, %v741
      %v743 = vpop.f32.mrf.mxu0
      %744 = vmatprep.mubr.bf16.mxu0 %v379
      %745 = vmatmul.mubr.bf16.gmra.mxu0 %v378
      %v746 = vpop.f32.mrf.mxu0
      %v747 = vadd.f32 %v325, %v746
      %v748 = vpop.f32.mrf.mxu0
      %v749 = vpop.f32.mrf.mxu0
      %v750 = vadd.f32 %v325, %v749
      %v751 = vpop.f32.mrf.mxu0
      %752 = vdwg.mxu0
      %753 = vmatprep.subr.bf16.mxu0 0
      %754 = vmatpush1.bf16.msra.mxu0 %v620
      %755 = vmatprep.subr.bf16.mxu0 0
      %756 = vmatpush1.bf16.msra.mxu0 %v619
      %757 = vmatprep.subr.bf16.mxu0 0
      %758 = vmatpush1.bf16.msra.mxu0 %v618
      %759 = vmatprep.subr.bf16.mxu0 0
      %760 = vmatpush1.bf16.msra.mxu0 %v617
      %761 = vmatprep.subr.bf16.mxu0 0
      %762 = vmatpush1.bf16.msra.mxu0 %v616
      %763 = vmatprep.subr.bf16.mxu0 0
      %764 = vmatpush1.bf16.msra.mxu0 %v615
      %765 = vmatprep.subr.bf16.mxu0 0
      %766 = vmatpush1.bf16.msra.mxu0 %v614
      %767 = vmatprep.subr.bf16.mxu0 0
      %768 = vmatpush1.bf16.msra.mxu0 %v613
      %769 = vmatprep.subr.bf16.mxu0 0
      %770 = vmatpush2.bf16.msra.mxu0 %v628
      %771 = vmatprep.subr.bf16.mxu0 0
      %772 = vmatpush2.bf16.msra.mxu0 %v627
      %773 = vmatprep.subr.bf16.mxu0 0
      %774 = vmatpush2.bf16.msra.mxu0 %v626
      %775 = vmatprep.subr.bf16.mxu0 0
      %776 = vmatpush2.bf16.msra.mxu0 %v625
      %777 = vmatprep.subr.bf16.mxu0 0
      %778 = vmatpush2.bf16.msra.mxu0 %v624
      %779 = vmatprep.subr.bf16.mxu0 0
      %780 = vmatpush2.bf16.msra.mxu0 %v623
      %781 = vmatprep.subr.bf16.mxu0 0
      %782 = vmatpush2.bf16.msra.mxu0 %v622
      %783 = vmatprep.subr.bf16.mxu0 0
      %784 = vmatpush2.bf16.msra.mxu0 %v621
      %785 = vmatprep.mubr.bf16.mxu0 %v374
      %786 = vmatmul.mubr.bf16.gmra.mxu0 %v373
      %v787 = vpop.f32.mrf.mxu0
      %v788 = vadd.f32 %v739, %v787
      %v789 = vpop.f32.mrf.mxu0
      %v790 = vpop.f32.mrf.mxu0
      %v791 = vadd.f32 %v742, %v790
      %v792 = vpop.f32.mrf.mxu0
      %793 = vmatprep.mubr.bf16.mxu0 %v381
      %794 = vmatmul.mubr.bf16.gmra.mxu0 %v380
      %v795 = vpop.f32.mrf.mxu0
      %v796 = vadd.f32 %v747, %v795
      %v797 = vpop.f32.mrf.mxu0
      %v798 = vpop.f32.mrf.mxu0
      %v799 = vadd.f32 %v750, %v798
      %v800 = vpop.f32.mrf.mxu0
      %801 = vdwg.mxu0
      %802 = vmatprep.subr.bf16.mxu0 0
      %803 = vmatpush1.bf16.msra.mxu0 %v636
      %804 = vmatprep.subr.bf16.mxu0 0
      %805 = vmatpush1.bf16.msra.mxu0 %v635
      %806 = vmatprep.subr.bf16.mxu0 0
      %807 = vmatpush1.bf16.msra.mxu0 %v634
      %808 = vmatprep.subr.bf16.mxu0 0
      %809 = vmatpush1.bf16.msra.mxu0 %v633
      %810 = vmatprep.subr.bf16.mxu0 0
      %811 = vmatpush1.bf16.msra.mxu0 %v632
      %812 = vmatprep.subr.bf16.mxu0 0
      %813 = vmatpush1.bf16.msra.mxu0 %v631
      %814 = vmatprep.subr.bf16.mxu0 0
      %815 = vmatpush1.bf16.msra.mxu0 %v630
      %816 = vmatprep.subr.bf16.mxu0 0
      %817 = vmatpush1.bf16.msra.mxu0 %v629
      %818 = vmatprep.subr.bf16.mxu0 0
      %819 = vmatpush2.bf16.msra.mxu0 %v644
      %820 = vmatprep.subr.bf16.mxu0 0
      %821 = vmatpush2.bf16.msra.mxu0 %v643
      %822 = vmatprep.subr.bf16.mxu0 0
      %823 = vmatpush2.bf16.msra.mxu0 %v642
      %824 = vmatprep.subr.bf16.mxu0 0
      %825 = vmatpush2.bf16.msra.mxu0 %v641
      %826 = vmatprep.subr.bf16.mxu0 0
      %827 = vmatpush2.bf16.msra.mxu0 %v640
      %828 = vmatprep.subr.bf16.mxu0 0
      %829 = vmatpush2.bf16.msra.mxu0 %v639
      %830 = vmatprep.subr.bf16.mxu0 0
      %831 = vmatpush2.bf16.msra.mxu0 %v638
      %832 = vmatprep.subr.bf16.mxu0 0
      %833 = vmatpush2.bf16.msra.mxu0 %v637
      %834 = vmatprep.mubr.bf16.mxu0 %v376
      %835 = vmatmul.mubr.bf16.gmra.mxu0 %v375
      %v836 = vpop.f32.mrf.mxu0
      %v837 = vadd.f32 %v788, %v836
      %v838 = vpop.f32.mrf.mxu0
      %v839 = vpop.f32.mrf.mxu0
      %v840 = vadd.f32 %v791, %v839
      %v841 = vpop.f32.mrf.mxu0
      %842 = vmatprep.mubr.bf16.mxu0 %v383
      %843 = vmatmul.mubr.bf16.gmra.mxu0 %v382
      %v844 = vpop.f32.mrf.mxu0
      %v845 = vadd.f32 %v796, %v844
      %v846 = vpop.f32.mrf.mxu0
      %v847 = vpop.f32.mrf.mxu0
      %v848 = vadd.f32 %v799, %v847
      %v849 = vpop.f32.mrf.mxu0
      %850 = vdwg.mxu0
      %851 = vmatprep.subr.bf16.mxu0 0
      %852 = vmatpush1.bf16.msra.mxu0 0
      %853 = vmatprep.subr.bf16.mxu0 0
      %854 = vmatpush1.bf16.msra.mxu0 0
      %855 = vmatprep.subr.bf16.mxu0 0
      %856 = vmatpush1.bf16.msra.mxu0 0
      %857 = vmatprep.subr.bf16.mxu0 0
      %858 = vmatpush1.bf16.msra.mxu0 0
      %859 = vmatprep.subr.bf16.mxu0 0
      %860 = vmatpush1.bf16.msra.mxu0 0
      %861 = vmatprep.subr.bf16.mxu0 0
      %862 = vmatpush1.bf16.msra.mxu0 0
      %863 = vmatprep.subr.bf16.mxu0 0
      %864 = vmatpush1.bf16.msra.mxu0 %v646
      %865 = vmatprep.subr.bf16.mxu0 0
      %866 = vmatpush1.bf16.msra.mxu0 %v645
      %867 = vmatprep.subr.bf16.mxu0 0
      %868 = vmatpush2.bf16.msra.mxu0 0
      %869 = vmatprep.subr.bf16.mxu0 0
      %870 = vmatpush2.bf16.msra.mxu0 0
      %871 = vmatprep.subr.bf16.mxu0 0
      %872 = vmatpush2.bf16.msra.mxu0 0
      %873 = vmatprep.subr.bf16.mxu0 0
      %874 = vmatpush2.bf16.msra.mxu0 0
      %875 = vmatprep.subr.bf16.mxu0 0
      %876 = vmatpush2.bf16.msra.mxu0 0
      %877 = vmatprep.subr.bf16.mxu0 0
      %878 = vmatpush2.bf16.msra.mxu0 0
      %879 = vmatprep.subr.bf16.mxu0 0
      %880 = vmatpush2.bf16.msra.mxu0 0
      %881 = vmatprep.subr.bf16.mxu0 0
      %882 = vmatpush2.bf16.msra.mxu0 0
      %883 = vmatprep.mubr.bf16.mxu0 0
      %884 = vmatmul.mubr.bf16.gmra.mxu0 %v699
      %v885 = vpop.f32.mrf.mxu0
      %v886 = vadd.f32 %v837, %v885
      %v887 = vpop.f32.mrf.mxu0
      %v888 = vpop.f32.mrf.mxu0
      %v889 = vadd.f32 %v840, %v888
      %v890 = vpop.f32.mrf.mxu0
      %891 = vmatprep.mubr.bf16.mxu0 0
      %892 = vmatmul.mubr.bf16.gmra.mxu0 %v702
      %v893 = vpop.f32.mrf.mxu0
      %v894 = vadd.f32 %v845, %v893
      %v895 = vpop.f32.mrf.mxu0
      %v896 = vpop.f32.mrf.mxu0
      %v897 = vadd.f32 %v848, %v896
      %v898 = vpop.f32.mrf.mxu0
      %899 = vdwg.mxu0
      %v900 = vmax.f32 %v886, 0.0
      %v901 = vmax.f32 %v889, 0.0
      %v902 = vmax.f32 %v894, 0.0
      %v903 = vmax.f32 %v897, 0.0
      %v904 = vpack.c.bf16 %v901, %v900
      %v905 = vpack.c.bf16 %v903, %v902
      %p906 = scmp.eq.s32.totalorder %s19, 0
      // Predicated region
      $region33: #{mnist_forward.4} parent=31 // pred_check
        %p907 = pneg %p906
      $region34: #{mnist_forward.4} parent=31 // pred_check_branch
        %909 = sbr.rel (%p907) target = $region36
      $region35: #{mnist_forward.4} parent=31 // pred_region
        %v912 = vunpack.c.l.b16 %v904
        %v913 = vunpack.c.h.b16 %v904
        %v914 = vunpack.c.l.b16 %v905
        %v915 = vunpack.c.h.b16 %v905
        %v916 = vpack.c.b16 %v912, %v912
        %v917 = vpack.c.b16 %v913, %v913
        %v918 = vpack.c.b16 %v914, %v914
        %v919 = vpack.c.b16 %v915, %v915
        %vm924 = vcmask 519168
        %925 = vst.msk [vmem:[%s201] sm:$0xf] %vm924, %v916
        %926 = vst.msk [vmem:[%s201 + $0x4] sm:$0xf] %vm924, %v917
        %927 = vst.msk [vmem:[%s201 + $0x8] sm:$0xf] %vm924, %v918
        %928 = vst.msk [vmem:[%s201 + $0xc] sm:$0xf] %vm924, %v919
      $region36: #{mnist_forward.4} parent=31 // pred_fallthru
        _
      %p929 = scmp.gt.s32.totalorder %s19, 0
      // Predicated region
      $region37: #{mnist_forward.4} parent=31 // pred_check
        %p930 = pneg %p929
      $region38: #{mnist_forward.4} parent=31 // pred_check_branch
        %932 = sbr.rel (%p930) target = $region40
      $region39: #{mnist_forward.4} parent=31 // pred_region
        %v933 = vld [vmem:[%s201] sm:$0xf]
        %v934 = vld [vmem:[%s201 + $0x4] sm:$0xf]
        %v935 = vld [vmem:[%s201 + $0x8] sm:$0xf]
        %v936 = vld [vmem:[%s201 + $0xc] sm:$0xf]
        %v939 = vunpack.c.l.b16 %v904
        %v940 = vunpack.c.h.b16 %v904
        %v941 = vunpack.c.l.b16 %v905
        %v942 = vunpack.c.h.b16 %v905
        %v943 = vpack.c.b16 %v939, %v939
        %v944 = vpack.c.b16 %v940, %v940
        %v945 = vpack.c.b16 %v941, %v941
        %v946 = vpack.c.b16 %v942, %v942
        %v951 = vmax.bf16 %v933, %v943
        %v952 = vmax.bf16 %v934, %v944
        %v953 = vmax.bf16 %v935, %v945
        %v954 = vmax.bf16 %v936, %v946
        %vm955 = vcmask 519168
        %956 = vst.msk [vmem:[%s201] sm:$0xf] %vm955, %v951
        %957 = vst.msk [vmem:[%s201 + $0x4] sm:$0xf] %vm955, %v952
        %958 = vst.msk [vmem:[%s201 + $0x8] sm:$0xf] %vm955, %v953
        %959 = vst.msk [vmem:[%s201 + $0xc] sm:$0xf] %vm955, %v954
      $region40: #{mnist_forward.4} parent=31 // pred_fallthru
        _
      %s960 = smul.u32 4, %s18
      %p961 = scmp.lt.s32.totalorder %s960, 3
      %s962 = scalar_select %p961, %s960, 3
      %s963 = smul.addr %s962, 4
      %s964 = scalar_lea.vmem %s3, %s963
      // Predicated region
      $region41: #{mnist_forward.4} parent=31 // pred_check
        %p965 = pneg %p114
      $region42: #{mnist_forward.4} parent=31 // pred_check_branch
        %967 = sbr.rel (%p965) target = $region44
      $region43: #{mnist_forward.4} parent=31 // pred_region
        %s968 = smul.u32 4, %s18
      $region44: #{mnist_forward.4} parent=31 // pred_fallthru
        _
      // Predicated region
      $region45: #{mnist_forward.4} parent=31 // pred_check
        %p969 = pneg %p114
      $region46: #{mnist_forward.4} parent=31 // pred_check_branch
        %971 = sbr.rel (%p969) target = $region48
      $region47: #{mnist_forward.4} parent=31 // pred_region
        %s972 = smul.u32 4, %s18
        %p973 = scmp.lt.s32.totalorder %s972, 3
        %s974 = scalar_select %p973, %s972, 3
        %s975 = smul.addr %s974, 4
        %s976 = scalar_lea.vmem %s3, %s975
      $region48: #{mnist_forward.4} parent=31 // pred_fallthru
        _
    $region32: #{mnist_forward.4} parent=5 // pred_fallthru
      _
    %p977 = scmp.le.s32.totalorder 2, %s9
    // Predicated region
    $region49: #{mnist_forward.4} parent=5 // pred_check
      %p978 = pneg %p977
    $region50: #{mnist_forward.4} parent=5 // pred_check_branch
      %980 = sbr.rel (%p978) target = $region52
    $region51: #{mnist_forward.4} parent=5 // pred_region
      %s981 = ssub.s32 %s9, 2
    $region52: #{mnist_forward.4} parent=5 // pred_fallthru
      _
  $region6: #{mnist_forward.4} parent=0 // loop_footer
    %s13 = sadd.s32 1, %s9
  $region7: #{mnist_forward.4} parent=0 // loop_footer_branch
    %8 = sbr.rel target = $region3
  $region8: #{mnist_forward.4} parent=0 // loop_exit
    _

// kernel: mnist_forward.5
$region0: #{mnist_forward.5}
  #allocation0 [shape = 'u32[]', space=smem, size = 0x4, offset = 0x4, fixed_abs, tag = 'smem constant byte address 0x4 - core index']
  #allocation1 [shape = 'u32[144,128]{1,0:T(1,128)}', space=vmem, size = 0x12000, scoped, tag = 'internal scratch']
  %s0 = inlined_call_operand.vmem [shape: bf16[8,1024], index: 0, kind: input, shape index: {}]
  %s1 = inlined_call_operand.vmem [shape: bf16[1024,512], index: 1, kind: input, shape index: {}]
  %s2 = inlined_call_operand.vmem [shape: f32[1,512], index: 2, kind: input, shape index: {}]
  %s3 = inlined_call_operand.vmem [shape: bf16[512,10], index: 3, kind: input, shape index: {}]
  %s4 = inlined_call_operand.vmem [shape: f32[1,10], index: 4, kind: input, shape index: {}]
  %s5 = inlined_call_operand.vmem [shape: f32[8,10], index: 5, kind: output, shape index: {}]
  %s6 = sld [smem:[#allocation0]]
  $region30: #{mnist_forward.5} parent=0
    _
  %s8 = ssub.s32 1, %s6
  %s9 = scalar_select 0, %s8, %s6
  // Predicated region
  $region2: #{mnist_forward.5} parent=0 // pred_check
    _
  $region3: #{mnist_forward.5} parent=0 // pred_check_branch
    %11 = sbr.rel (0) target = $region5
  $region4: #{mnist_forward.5} parent=0 // pred_region
    _
  $region5: #{mnist_forward.5} parent=0 // pred_fallthru
    _
  // Predicated region
  $region6: #{mnist_forward.5} parent=0 // pred_check
    _
  $region7: #{mnist_forward.5} parent=0 // pred_check_branch
    %13 = sbr.rel (0) target = $region9
  $region8: #{mnist_forward.5} parent=0 // pred_region
    _
  $region9: #{mnist_forward.5} parent=0 // pred_fallthru
    _
  // Predicated region
  $region10: #{mnist_forward.5} parent=0 // pred_check
    _
  $region11: #{mnist_forward.5} parent=0 // pred_check_branch
    %15 = sbr.rel (0) target = $region13
  $region12: #{mnist_forward.5} parent=0 // pred_region
    _
  $region13: #{mnist_forward.5} parent=0 // pred_fallthru
    _
  // Predicated region
  $region14: #{mnist_forward.5} parent=0 // pred_check
    _
  $region15: #{mnist_forward.5} parent=0 // pred_check_branch
    %17 = sbr.rel (0) target = $region17
  $region16: #{mnist_forward.5} parent=0 // pred_region
    _
  $region17: #{mnist_forward.5} parent=0 // pred_fallthru
    _
  // Predicated region
  $region18: #{mnist_forward.5} parent=0 // pred_check
    _
  $region19: #{mnist_forward.5} parent=0 // pred_check_branch
    %19 = sbr.rel (0) target = $region21
  $region20: #{mnist_forward.5} parent=0 // pred_region
    _
  $region21: #{mnist_forward.5} parent=0 // pred_fallthru
    _
  %v21 = vld [vmem:[%s0] sm:$0xff]
  %v22 = vld [vmem:[%s0 + $0x8] sm:$0xff]
  %v23 = vld [vmem:[%s0 + $0x10] sm:$0xff]
  %v24 = vld [vmem:[%s0 + $0x18] sm:$0xff]
  %v25 = vld [vmem:[%s1] sm:$0xff]
  %v26 = vld [vmem:[%s1 + $0x8] sm:$0xff]
  %v27 = vld [vmem:[%s1 + $0x10] sm:$0xff]
  %v28 = vld [vmem:[%s1 + $0x18] sm:$0xff]
  %v29 = vld [vmem:[%s1 + $0x20] sm:$0xff]
  %v30 = vld [vmem:[%s1 + $0x28] sm:$0xff]
  %v31 = vld [vmem:[%s1 + $0x30] sm:$0xff]
  %v32 = vld [vmem:[%s1 + $0x38] sm:$0xff]
  %v33 = vld [vmem:[%s1 + $0x40] sm:$0xff]
  %v34 = vld [vmem:[%s1 + $0x48] sm:$0xff]
  %v35 = vld [vmem:[%s1 + $0x50] sm:$0xff]
  %v36 = vld [vmem:[%s1 + $0x58] sm:$0xff]
  %v37 = vld [vmem:[%s1 + $0x60] sm:$0xff]
  %v38 = vld [vmem:[%s1 + $0x68] sm:$0xff]
  %v39 = vld [vmem:[%s1 + $0x70] sm:$0xff]
  %v40 = vld [vmem:[%s1 + $0x78] sm:$0xff]
  %v41 = vld [vmem:[%s1 + $0x80] sm:$0xff]
  %v42 = vld [vmem:[%s1 + $0x88] sm:$0xff]
  %v43 = vld [vmem:[%s1 + $0x90] sm:$0xff]
  %v44 = vld [vmem:[%s1 + $0x98] sm:$0xff]
  %v45 = vld [vmem:[%s1 + $0xa0] sm:$0xff]
  %v46 = vld [vmem:[%s1 + $0xa8] sm:$0xff]
  %v47 = vld [vmem:[%s1 + $0xb0] sm:$0xff]
  %v48 = vld [vmem:[%s1 + $0xb8] sm:$0xff]
  %v49 = vld [vmem:[%s1 + $0xc0] sm:$0xff]
  %v50 = vld [vmem:[%s1 + $0xc8] sm:$0xff]
  %v51 = vld [vmem:[%s1 + $0xd0] sm:$0xff]
  %v52 = vld [vmem:[%s1 + $0xd8] sm:$0xff]
  %v53 = vld [vmem:[%s1 + $0xe0] sm:$0xff]
  %v54 = vld [vmem:[%s1 + $0xe8] sm:$0xff]
  %v55 = vld [vmem:[%s1 + $0xf0] sm:$0xff]
  %v56 = vld [vmem:[%s1 + $0xf8] sm:$0xff]
  %v57 = vld [vmem:[%s1 + $0x100] sm:$0xff]
  %v58 = vld [vmem:[%s1 + $0x108] sm:$0xff]
  %v59 = vld [vmem:[%s1 + $0x110] sm:$0xff]
  %v60 = vld [vmem:[%s1 + $0x118] sm:$0xff]
  %v61 = vld [vmem:[%s1 + $0x120] sm:$0xff]
  %v62 = vld [vmem:[%s1 + $0x128] sm:$0xff]
  %v63 = vld [vmem:[%s1 + $0x130] sm:$0xff]
  %v64 = vld [vmem:[%s1 + $0x138] sm:$0xff]
  %v65 = vld [vmem:[%s1 + $0x140] sm:$0xff]
  %v66 = vld [vmem:[%s1 + $0x148] sm:$0xff]
  %v67 = vld [vmem:[%s1 + $0x150] sm:$0xff]
  %v68 = vld [vmem:[%s1 + $0x158] sm:$0xff]
  %v69 = vld [vmem:[%s1 + $0x160] sm:$0xff]
  %v70 = vld [vmem:[%s1 + $0x168] sm:$0xff]
  %v71 = vld [vmem:[%s1 + $0x170] sm:$0xff]
  %v72 = vld [vmem:[%s1 + $0x178] sm:$0xff]
  %v73 = vld [vmem:[%s1 + $0x180] sm:$0xff]
  %v74 = vld [vmem:[%s1 + $0x188] sm:$0xff]
  %v75 = vld [vmem:[%s1 + $0x190] sm:$0xff]
  %v76 = vld [vmem:[%s1 + $0x198] sm:$0xff]
  %v77 = vld [vmem:[%s1 + $0x1a0] sm:$0xff]
  %v78 = vld [vmem:[%s1 + $0x1a8] sm:$0xff]
  %v79 = vld [vmem:[%s1 + $0x1b0] sm:$0xff]
  %v80 = vld [vmem:[%s1 + $0x1b8] sm:$0xff]
  %v81 = vld [vmem:[%s1 + $0x1c0] sm:$0xff]
  %v82 = vld [vmem:[%s1 + $0x1c8] sm:$0xff]
  %v83 = vld [vmem:[%s1 + $0x1d0] sm:$0xff]
  %v84 = vld [vmem:[%s1 + $0x1d8] sm:$0xff]
  %v85 = vld [vmem:[%s1 + $0x1e0] sm:$0xff]
  %v86 = vld [vmem:[%s1 + $0x1e8] sm:$0xff]
  %v87 = vld [vmem:[%s1 + $0x1f0] sm:$0xff]
  %v88 = vld [vmem:[%s1 + $0x1f8] sm:$0xff]
  %v89 = vld [vmem:[%s1 + $0x200] sm:$0xff]
  %v90 = vld [vmem:[%s1 + $0x208] sm:$0xff]
  %v91 = vld [vmem:[%s1 + $0x210] sm:$0xff]
  %v92 = vld [vmem:[%s1 + $0x218] sm:$0xff]
  %v93 = vld [vmem:[%s1 + $0x220] sm:$0xff]
  %v94 = vld [vmem:[%s1 + $0x228] sm:$0xff]
  %v95 = vld [vmem:[%s1 + $0x230] sm:$0xff]
  %v96 = vld [vmem:[%s1 + $0x238] sm:$0xff]
  %v97 = vld [vmem:[%s1 + $0x240] sm:$0xff]
  %v98 = vld [vmem:[%s1 + $0x248] sm:$0xff]
  %v99 = vld [vmem:[%s1 + $0x250] sm:$0xff]
  %v100 = vld [vmem:[%s1 + $0x258] sm:$0xff]
  %v101 = vld [vmem:[%s1 + $0x260] sm:$0xff]
  %v102 = vld [vmem:[%s1 + $0x268] sm:$0xff]
  %v103 = vld [vmem:[%s1 + $0x270] sm:$0xff]
  %v104 = vld [vmem:[%s1 + $0x278] sm:$0xff]
  %v105 = vld [vmem:[%s1 + $0x280] sm:$0xff]
  %v106 = vld [vmem:[%s1 + $0x288] sm:$0xff]
  %v107 = vld [vmem:[%s1 + $0x290] sm:$0xff]
  %v108 = vld [vmem:[%s1 + $0x298] sm:$0xff]
  %v109 = vld [vmem:[%s1 + $0x2a0] sm:$0xff]
  %v110 = vld [vmem:[%s1 + $0x2a8] sm:$0xff]
  %v111 = vld [vmem:[%s1 + $0x2b0] sm:$0xff]
  %v112 = vld [vmem:[%s1 + $0x2b8] sm:$0xff]
  %v113 = vld [vmem:[%s1 + $0x2c0] sm:$0xff]
  %v114 = vld [vmem:[%s1 + $0x2c8] sm:$0xff]
  %v115 = vld [vmem:[%s1 + $0x2d0] sm:$0xff]
  %v116 = vld [vmem:[%s1 + $0x2d8] sm:$0xff]
  %v117 = vld [vmem:[%s1 + $0x2e0] sm:$0xff]
  %v118 = vld [vmem:[%s1 + $0x2e8] sm:$0xff]
  %v119 = vld [vmem:[%s1 + $0x2f0] sm:$0xff]
  %v120 = vld [vmem:[%s1 + $0x2f8] sm:$0xff]
  %v121 = vld [vmem:[%s1 + $0x300] sm:$0xff]
  %v122 = vld [vmem:[%s1 + $0x308] sm:$0xff]
  %v123 = vld [vmem:[%s1 + $0x310] sm:$0xff]
  %v124 = vld [vmem:[%s1 + $0x318] sm:$0xff]
  %v125 = vld [vmem:[%s1 + $0x320] sm:$0xff]
  %v126 = vld [vmem:[%s1 + $0x328] sm:$0xff]
  %v127 = vld [vmem:[%s1 + $0x330] sm:$0xff]
  %v128 = vld [vmem:[%s1 + $0x338] sm:$0xff]
  %v129 = vld [vmem:[%s1 + $0x340] sm:$0xff]
  %v130 = vld [vmem:[%s1 + $0x348] sm:$0xff]
  %v131 = vld [vmem:[%s1 + $0x350] sm:$0xff]
  %v132 = vld [vmem:[%s1 + $0x358] sm:$0xff]
  %v133 = vld [vmem:[%s1 + $0x360] sm:$0xff]
  %v134 = vld [vmem:[%s1 + $0x368] sm:$0xff]
  %v135 = vld [vmem:[%s1 + $0x370] sm:$0xff]
  %v136 = vld [vmem:[%s1 + $0x378] sm:$0xff]
  %v137 = vld [vmem:[%s1 + $0x380] sm:$0xff]
  %v138 = vld [vmem:[%s1 + $0x388] sm:$0xff]
  %v139 = vld [vmem:[%s1 + $0x390] sm:$0xff]
  %v140 = vld [vmem:[%s1 + $0x398] sm:$0xff]
  %v141 = vld [vmem:[%s1 + $0x3a0] sm:$0xff]
  %v142 = vld [vmem:[%s1 + $0x3a8] sm:$0xff]
  %v143 = vld [vmem:[%s1 + $0x3b0] sm:$0xff]
  %v144 = vld [vmem:[%s1 + $0x3b8] sm:$0xff]
  %v145 = vld [vmem:[%s1 + $0x3c0] sm:$0xff]
  %v146 = vld [vmem:[%s1 + $0x3c8] sm:$0xff]
  %v147 = vld [vmem:[%s1 + $0x3d0] sm:$0xff]
  %v148 = vld [vmem:[%s1 + $0x3d8] sm:$0xff]
  %v149 = vld [vmem:[%s1 + $0x3e0] sm:$0xff]
  %v150 = vld [vmem:[%s1 + $0x3e8] sm:$0xff]
  %v151 = vld [vmem:[%s1 + $0x3f0] sm:$0xff]
  %v152 = vld [vmem:[%s1 + $0x3f8] sm:$0xff]
  %v153 = vld [vmem:[%s1 + $0x400] sm:$0xff]
  %v154 = vld [vmem:[%s1 + $0x408] sm:$0xff]
  %v155 = vld [vmem:[%s1 + $0x410] sm:$0xff]
  %v156 = vld [vmem:[%s1 + $0x418] sm:$0xff]
  %v157 = vld [vmem:[%s1 + $0x420] sm:$0xff]
  %v158 = vld [vmem:[%s1 + $0x428] sm:$0xff]
  %v159 = vld [vmem:[%s1 + $0x430] sm:$0xff]
  %v160 = vld [vmem:[%s1 + $0x438] sm:$0xff]
  %v161 = vld [vmem:[%s1 + $0x440] sm:$0xff]
  %v162 = vld [vmem:[%s1 + $0x448] sm:$0xff]
  %v163 = vld [vmem:[%s1 + $0x450] sm:$0xff]
  %v164 = vld [vmem:[%s1 + $0x458] sm:$0xff]
  %v165 = vld [vmem:[%s1 + $0x460] sm:$0xff]
  %v166 = vld [vmem:[%s1 + $0x468] sm:$0xff]
  %v167 = vld [vmem:[%s1 + $0x470] sm:$0xff]
  %v168 = vld [vmem:[%s1 + $0x478] sm:$0xff]
  %v169 = vld [vmem:[%s1 + $0x480] sm:$0xff]
  %v170 = vld [vmem:[%s1 + $0x488] sm:$0xff]
  %v171 = vld [vmem:[%s1 + $0x490] sm:$0xff]
  %v172 = vld [vmem:[%s1 + $0x498] sm:$0xff]
  %v173 = vld [vmem:[%s1 + $0x4a0] sm:$0xff]
  %v174 = vld [vmem:[%s1 + $0x4a8] sm:$0xff]
  %v175 = vld [vmem:[%s1 + $0x4b0] sm:$0xff]
  %v176 = vld [vmem:[%s1 + $0x4b8] sm:$0xff]
  %v177 = vld [vmem:[%s1 + $0x4c0] sm:$0xff]
  %v178 = vld [vmem:[%s1 + $0x4c8] sm:$0xff]
  %v179 = vld [vmem:[%s1 + $0x4d0] sm:$0xff]
  %v180 = vld [vmem:[%s1 + $0x4d8] sm:$0xff]
  %v181 = vld [vmem:[%s1 + $0x4e0] sm:$0xff]
  %v182 = vld [vmem:[%s1 + $0x4e8] sm:$0xff]
  %v183 = vld [vmem:[%s1 + $0x4f0] sm:$0xff]
  %v184 = vld [vmem:[%s1 + $0x4f8] sm:$0xff]
  %v185 = vld [vmem:[%s1 + $0x500] sm:$0xff]
  %v186 = vld [vmem:[%s1 + $0x508] sm:$0xff]
  %v187 = vld [vmem:[%s1 + $0x510] sm:$0xff]
  %v188 = vld [vmem:[%s1 + $0x518] sm:$0xff]
  %v189 = vld [vmem:[%s1 + $0x520] sm:$0xff]
  %v190 = vld [vmem:[%s1 + $0x528] sm:$0xff]
  %v191 = vld [vmem:[%s1 + $0x530] sm:$0xff]
  %v192 = vld [vmem:[%s1 + $0x538] sm:$0xff]
  %v193 = vld [vmem:[%s1 + $0x540] sm:$0xff]
  %v194 = vld [vmem:[%s1 + $0x548] sm:$0xff]
  %v195 = vld [vmem:[%s1 + $0x550] sm:$0xff]
  %v196 = vld [vmem:[%s1 + $0x558] sm:$0xff]
  %v197 = vld [vmem:[%s1 + $0x560] sm:$0xff]
  %v198 = vld [vmem:[%s1 + $0x568] sm:$0xff]
  %v199 = vld [vmem:[%s1 + $0x570] sm:$0xff]
  %v200 = vld [vmem:[%s1 + $0x578] sm:$0xff]
  %v201 = vld [vmem:[%s1 + $0x580] sm:$0xff]
  %v202 = vld [vmem:[%s1 + $0x588] sm:$0xff]
  %v203 = vld [vmem:[%s1 + $0x590] sm:$0xff]
  %v204 = vld [vmem:[%s1 + $0x598] sm:$0xff]
  %v205 = vld [vmem:[%s1 + $0x5a0] sm:$0xff]
  %v206 = vld [vmem:[%s1 + $0x5a8] sm:$0xff]
  %v207 = vld [vmem:[%s1 + $0x5b0] sm:$0xff]
  %v208 = vld [vmem:[%s1 + $0x5b8] sm:$0xff]
  %v209 = vld [vmem:[%s1 + $0x5c0] sm:$0xff]
  %v210 = vld [vmem:[%s1 + $0x5c8] sm:$0xff]
  %v211 = vld [vmem:[%s1 + $0x5d0] sm:$0xff]
  %v212 = vld [vmem:[%s1 + $0x5d8] sm:$0xff]
  %v213 = vld [vmem:[%s1 + $0x5e0] sm:$0xff]
  %v214 = vld [vmem:[%s1 + $0x5e8] sm:$0xff]
  %v215 = vld [vmem:[%s1 + $0x5f0] sm:$0xff]
  %v216 = vld [vmem:[%s1 + $0x5f8] sm:$0xff]
  %v217 = vld [vmem:[%s1 + $0x600] sm:$0xff]
  %v218 = vld [vmem:[%s1 + $0x608] sm:$0xff]
  %v219 = vld [vmem:[%s1 + $0x610] sm:$0xff]
  %v220 = vld [vmem:[%s1 + $0x618] sm:$0xff]
  %v221 = vld [vmem:[%s1 + $0x620] sm:$0xff]
  %v222 = vld [vmem:[%s1 + $0x628] sm:$0xff]
  %v223 = vld [vmem:[%s1 + $0x630] sm:$0xff]
  %v224 = vld [vmem:[%s1 + $0x638] sm:$0xff]
  %v225 = vld [vmem:[%s1 + $0x640] sm:$0xff]
  %v226 = vld [vmem:[%s1 + $0x648] sm:$0xff]
  %v227 = vld [vmem:[%s1 + $0x650] sm:$0xff]
  %v228 = vld [vmem:[%s1 + $0x658] sm:$0xff]
  %v229 = vld [vmem:[%s1 + $0x660] sm:$0xff]
  %v230 = vld [vmem:[%s1 + $0x668] sm:$0xff]
  %v231 = vld [vmem:[%s1 + $0x670] sm:$0xff]
  %v232 = vld [vmem:[%s1 + $0x678] sm:$0xff]
  %v233 = vld [vmem:[%s1 + $0x680] sm:$0xff]
  %v234 = vld [vmem:[%s1 + $0x688] sm:$0xff]
  %v235 = vld [vmem:[%s1 + $0x690] sm:$0xff]
  %v236 = vld [vmem:[%s1 + $0x698] sm:$0xff]
  %v237 = vld [vmem:[%s1 + $0x6a0] sm:$0xff]
  %v238 = vld [vmem:[%s1 + $0x6a8] sm:$0xff]
  %v239 = vld [vmem:[%s1 + $0x6b0] sm:$0xff]
  %v240 = vld [vmem:[%s1 + $0x6b8] sm:$0xff]
  %v241 = vld [vmem:[%s1 + $0x6c0] sm:$0xff]
  %v242 = vld [vmem:[%s1 + $0x6c8] sm:$0xff]
  %v243 = vld [vmem:[%s1 + $0x6d0] sm:$0xff]
  %v244 = vld [vmem:[%s1 + $0x6d8] sm:$0xff]
  %v245 = vld [vmem:[%s1 + $0x6e0] sm:$0xff]
  %v246 = vld [vmem:[%s1 + $0x6e8] sm:$0xff]
  %v247 = vld [vmem:[%s1 + $0x6f0] sm:$0xff]
  %v248 = vld [vmem:[%s1 + $0x6f8] sm:$0xff]
  %v249 = vld [vmem:[%s1 + $0x700] sm:$0xff]
  %v250 = vld [vmem:[%s1 + $0x708] sm:$0xff]
  %v251 = vld [vmem:[%s1 + $0x710] sm:$0xff]
  %v252 = vld [vmem:[%s1 + $0x718] sm:$0xff]
  %v253 = vld [vmem:[%s1 + $0x720] sm:$0xff]
  %v254 = vld [vmem:[%s1 + $0x728] sm:$0xff]
  %v255 = vld [vmem:[%s1 + $0x730] sm:$0xff]
  %v256 = vld [vmem:[%s1 + $0x738] sm:$0xff]
  %v257 = vld [vmem:[%s1 + $0x740] sm:$0xff]
  %v258 = vld [vmem:[%s1 + $0x748] sm:$0xff]
  %v259 = vld [vmem:[%s1 + $0x750] sm:$0xff]
  %v260 = vld [vmem:[%s1 + $0x758] sm:$0xff]
  %v261 = vld [vmem:[%s1 + $0x760] sm:$0xff]
  %v262 = vld [vmem:[%s1 + $0x768] sm:$0xff]
  %v263 = vld [vmem:[%s1 + $0x770] sm:$0xff]
  %v264 = vld [vmem:[%s1 + $0x778] sm:$0xff]
  %v265 = vld [vmem:[%s1 + $0x780] sm:$0xff]
  %v266 = vld [vmem:[%s1 + $0x788] sm:$0xff]
  %v267 = vld [vmem:[%s1 + $0x790] sm:$0xff]
  %v268 = vld [vmem:[%s1 + $0x798] sm:$0xff]
  %v269 = vld [vmem:[%s1 + $0x7a0] sm:$0xff]
  %v270 = vld [vmem:[%s1 + $0x7a8] sm:$0xff]
  %v271 = vld [vmem:[%s1 + $0x7b0] sm:$0xff]
  %v272 = vld [vmem:[%s1 + $0x7b8] sm:$0xff]
  %v273 = vld [vmem:[%s1 + $0x7c0] sm:$0xff]
  %v274 = vld [vmem:[%s1 + $0x7c8] sm:$0xff]
  %v275 = vld [vmem:[%s1 + $0x7d0] sm:$0xff]
  %v276 = vld [vmem:[%s1 + $0x7d8] sm:$0xff]
  %v277 = vld [vmem:[%s1 + $0x7e0] sm:$0xff]
  %v278 = vld [vmem:[%s1 + $0x7e8] sm:$0xff]
  %v279 = vld [vmem:[%s1 + $0x7f0] sm:$0xff]
  %v280 = vld [vmem:[%s1 + $0x7f8] sm:$0xff]
  %v281 = vld [vmem:[%s2] sm:$0xf]
  %v283 = vlaneseq
  %v284 = vshrl.u32 %v283, 7
  %v285 = vsub.s32 0, %v284
  %v286 = vrot.slane %v281, %v285
  %v287 = vlaneseq
  %v288 = vshrl.u32 %v287, 7
  %v289 = vsub.s32 1, %v288
  %v290 = vrot.slane %v281, %v289
  %v291 = vlaneseq
  %v292 = vshrl.u32 %v291, 7
  %v293 = vsub.s32 2, %v292
  %v294 = vrot.slane %v281, %v293
  %v295 = vlaneseq
  %v296 = vshrl.u32 %v295, 7
  %v297 = vsub.s32 3, %v296
  %v298 = vrot.slane %v281, %v297
  %v307 = vunpack.c.l.b16 %v21
  %v308 = vunpack.c.h.b16 %v21
  %v309 = vunpack.c.l.b16 %v22
  %v310 = vunpack.c.h.b16 %v22
  %v311 = vunpack.c.l.b16 %v23
  %v312 = vunpack.c.h.b16 %v23
  %v313 = vunpack.c.l.b16 %v24
  %v314 = vunpack.c.h.b16 %v24
  %v315 = vpack.c.b16 %v307, %v307
  %v316 = vpack.c.b16 %v308, %v308
  %v317 = vpack.c.b16 %v309, %v309
  %v318 = vpack.c.b16 %v310, %v310
  %v319 = vpack.c.b16 %v311, %v311
  %v320 = vpack.c.b16 %v312, %v312
  %v321 = vpack.c.b16 %v313, %v313
  %v322 = vpack.c.b16 %v314, %v314
  %v587 = vunpack.c.l.b16 %v25
  %v588 = vunpack.c.h.b16 %v25
  %v589 = vunpack.c.l.b16 %v26
  %v590 = vunpack.c.h.b16 %v26
  %v591 = vunpack.c.l.b16 %v27
  %v592 = vunpack.c.h.b16 %v27
  %v593 = vunpack.c.l.b16 %v28
  %v594 = vunpack.c.h.b16 %v28
  %v595 = vunpack.c.l.b16 %v29
  %v596 = vunpack.c.h.b16 %v29
  %v597 = vunpack.c.l.b16 %v30
  %v598 = vunpack.c.h.b16 %v30
  %v599 = vunpack.c.l.b16 %v31
  %v600 = vunpack.c.h.b16 %v31
  %v601 = vunpack.c.l.b16 %v32
  %v602 = vunpack.c.h.b16 %v32
  %v603 = vunpack.c.l.b16 %v33
  %v604 = vunpack.c.h.b16 %v33
  %v605 = vunpack.c.l.b16 %v34
  %v606 = vunpack.c.h.b16 %v34
  %v607 = vunpack.c.l.b16 %v35
  %v608 = vunpack.c.h.b16 %v35
  %v609 = vunpack.c.l.b16 %v36
  %v610 = vunpack.c.h.b16 %v36
  %v611 = vunpack.c.l.b16 %v37
  %v612 = vunpack.c.h.b16 %v37
  %v613 = vunpack.c.l.b16 %v38
  %v614 = vunpack.c.h.b16 %v38
  %v615 = vunpack.c.l.b16 %v39
  %v616 = vunpack.c.h.b16 %v39
  %v617 = vunpack.c.l.b16 %v40
  %v618 = vunpack.c.h.b16 %v40
  %v619 = vunpack.c.l.b16 %v41
  %v620 = vunpack.c.h.b16 %v41
  %v621 = vunpack.c.l.b16 %v42
  %v622 = vunpack.c.h.b16 %v42
  %v623 = vunpack.c.l.b16 %v43
  %v624 = vunpack.c.h.b16 %v43
  %v625 = vunpack.c.l.b16 %v44
  %v626 = vunpack.c.h.b16 %v44
  %v627 = vunpack.c.l.b16 %v45
  %v628 = vunpack.c.h.b16 %v45
  %v629 = vunpack.c.l.b16 %v46
  %v630 = vunpack.c.h.b16 %v46
  %v631 = vunpack.c.l.b16 %v47
  %v632 = vunpack.c.h.b16 %v47
  %v633 = vunpack.c.l.b16 %v48
  %v634 = vunpack.c.h.b16 %v48
  %v635 = vunpack.c.l.b16 %v49
  %v636 = vunpack.c.h.b16 %v49
  %v637 = vunpack.c.l.b16 %v50
  %v638 = vunpack.c.h.b16 %v50
  %v639 = vunpack.c.l.b16 %v51
  %v640 = vunpack.c.h.b16 %v51
  %v641 = vunpack.c.l.b16 %v52
  %v642 = vunpack.c.h.b16 %v52
  %v643 = vunpack.c.l.b16 %v53
  %v644 = vunpack.c.h.b16 %v53
  %v645 = vunpack.c.l.b16 %v54
  %v646 = vunpack.c.h.b16 %v54
  %v647 = vunpack.c.l.b16 %v55
  %v648 = vunpack.c.h.b16 %v55
  %v649 = vunpack.c.l.b16 %v56
  %v650 = vunpack.c.h.b16 %v56
  %v651 = vunpack.c.l.b16 %v57
  %v652 = vunpack.c.h.b16 %v57
  %v653 = vunpack.c.l.b16 %v58
  %v654 = vunpack.c.h.b16 %v58
  %v655 = vunpack.c.l.b16 %v59
  %v656 = vunpack.c.h.b16 %v59
  %v657 = vunpack.c.l.b16 %v60
  %v658 = vunpack.c.h.b16 %v60
  %v659 = vunpack.c.l.b16 %v61
  %v660 = vunpack.c.h.b16 %v61
  %v661 = vunpack.c.l.b16 %v62
  %v662 = vunpack.c.h.b16 %v62
  %v663 = vunpack.c.l.b16 %v63
  %v664 = vunpack.c.h.b16 %v63
  %v665 = vunpack.c.l.b16 %v64
  %v666 = vunpack.c.h.b16 %v64
  %v667 = vunpack.c.l.b16 %v65
  %v668 = vunpack.c.h.b16 %v65
  %v669 = vunpack.c.l.b16 %v66
  %v670 = vunpack.c.h.b16 %v66
  %v671 = vunpack.c.l.b16 %v67
  %v672 = vunpack.c.h.b16 %v67
  %v673 = vunpack.c.l.b16 %v68
  %v674 = vunpack.c.h.b16 %v68
  %v675 = vunpack.c.l.b16 %v69
  %v676 = vunpack.c.h.b16 %v69
  %v677 = vunpack.c.l.b16 %v70
  %v678 = vunpack.c.h.b16 %v70
  %v679 = vunpack.c.l.b16 %v71
  %v680 = vunpack.c.h.b16 %v71
  %v681 = vunpack.c.l.b16 %v72
  %v682 = vunpack.c.h.b16 %v72
  %v683 = vunpack.c.l.b16 %v73
  %v684 = vunpack.c.h.b16 %v73
  %v685 = vunpack.c.l.b16 %v74
  %v686 = vunpack.c.h.b16 %v74
  %v687 = vunpack.c.l.b16 %v75
  %v688 = vunpack.c.h.b16 %v75
  %v689 = vunpack.c.l.b16 %v76
  %v690 = vunpack.c.h.b16 %v76
  %v691 = vunpack.c.l.b16 %v77
  %v692 = vunpack.c.h.b16 %v77
  %v693 = vunpack.c.l.b16 %v78
  %v694 = vunpack.c.h.b16 %v78
  %v695 = vunpack.c.l.b16 %v79
  %v696 = vunpack.c.h.b16 %v79
  %v697 = vunpack.c.l.b16 %v80
  %v698 = vunpack.c.h.b16 %v80
  %v699 = vunpack.c.l.b16 %v81
  %v700 = vunpack.c.h.b16 %v81
  %v701 = vunpack.c.l.b16 %v82
  %v702 = vunpack.c.h.b16 %v82
  %v703 = vunpack.c.l.b16 %v83
  %v704 = vunpack.c.h.b16 %v83
  %v705 = vunpack.c.l.b16 %v84
  %v706 = vunpack.c.h.b16 %v84
  %v707 = vunpack.c.l.b16 %v85
  %v708 = vunpack.c.h.b16 %v85
  %v709 = vunpack.c.l.b16 %v86
  %v710 = vunpack.c.h.b16 %v86
  %v711 = vunpack.c.l.b16 %v87
  %v712 = vunpack.c.h.b16 %v87
  %v713 = vunpack.c.l.b16 %v88
  %v714 = vunpack.c.h.b16 %v88
  %v715 = vunpack.c.l.b16 %v89
  %v716 = vunpack.c.h.b16 %v89
  %v717 = vunpack.c.l.b16 %v90
  %v718 = vunpack.c.h.b16 %v90
  %v719 = vunpack.c.l.b16 %v91
  %v720 = vunpack.c.h.b16 %v91
  %v721 = vunpack.c.l.b16 %v92
  %v722 = vunpack.c.h.b16 %v92
  %v723 = vunpack.c.l.b16 %v93
  %v724 = vunpack.c.h.b16 %v93
  %v725 = vunpack.c.l.b16 %v94
  %v726 = vunpack.c.h.b16 %v94
  %v727 = vunpack.c.l.b16 %v95
  %v728 = vunpack.c.h.b16 %v95
  %v729 = vunpack.c.l.b16 %v96
  %v730 = vunpack.c.h.b16 %v96
  %v731 = vunpack.c.l.b16 %v97
  %v732 = vunpack.c.h.b16 %v97
  %v733 = vunpack.c.l.b16 %v98
  %v734 = vunpack.c.h.b16 %v98
  %v735 = vunpack.c.l.b16 %v99
  %v736 = vunpack.c.h.b16 %v99
  %v737 = vunpack.c.l.b16 %v100
  %v738 = vunpack.c.h.b16 %v100
  %v739 = vunpack.c.l.b16 %v101
  %v740 = vunpack.c.h.b16 %v101
  %v741 = vunpack.c.l.b16 %v102
  %v742 = vunpack.c.h.b16 %v102
  %v743 = vunpack.c.l.b16 %v103
  %v744 = vunpack.c.h.b16 %v103
  %v745 = vunpack.c.l.b16 %v104
  %v746 = vunpack.c.h.b16 %v104
  %v747 = vunpack.c.l.b16 %v105
  %v748 = vunpack.c.h.b16 %v105
  %v749 = vunpack.c.l.b16 %v106
  %v750 = vunpack.c.h.b16 %v106
  %v751 = vunpack.c.l.b16 %v107
  %v752 = vunpack.c.h.b16 %v107
  %v753 = vunpack.c.l.b16 %v108
  %v754 = vunpack.c.h.b16 %v108
  %v755 = vunpack.c.l.b16 %v109
  %v756 = vunpack.c.h.b16 %v109
  %v757 = vunpack.c.l.b16 %v110
  %v758 = vunpack.c.h.b16 %v110
  %v759 = vunpack.c.l.b16 %v111
  %v760 = vunpack.c.h.b16 %v111
  %v761 = vunpack.c.l.b16 %v112
  %v762 = vunpack.c.h.b16 %v112
  %v763 = vunpack.c.l.b16 %v113
  %v764 = vunpack.c.h.b16 %v113
  %v765 = vunpack.c.l.b16 %v114
  %v766 = vunpack.c.h.b16 %v114
  %v767 = vunpack.c.l.b16 %v115
  %v768 = vunpack.c.h.b16 %v115
  %v769 = vunpack.c.l.b16 %v116
  %v770 = vunpack.c.h.b16 %v116
  %v771 = vunpack.c.l.b16 %v117
  %v772 = vunpack.c.h.b16 %v117
  %v773 = vunpack.c.l.b16 %v118
  %v774 = vunpack.c.h.b16 %v118
  %v775 = vunpack.c.l.b16 %v119
  %v776 = vunpack.c.h.b16 %v119
  %v777 = vunpack.c.l.b16 %v120
  %v778 = vunpack.c.h.b16 %v120
  %v779 = vunpack.c.l.b16 %v121
  %v780 = vunpack.c.h.b16 %v121
  %v781 = vunpack.c.l.b16 %v122
  %v782 = vunpack.c.h.b16 %v122
  %v783 = vunpack.c.l.b16 %v123
  %v784 = vunpack.c.h.b16 %v123
  %v785 = vunpack.c.l.b16 %v124
  %v786 = vunpack.c.h.b16 %v124
  %v787 = vunpack.c.l.b16 %v125
  %v788 = vunpack.c.h.b16 %v125
  %v789 = vunpack.c.l.b16 %v126
  %v790 = vunpack.c.h.b16 %v126
  %v791 = vunpack.c.l.b16 %v127
  %v792 = vunpack.c.h.b16 %v127
  %v793 = vunpack.c.l.b16 %v128
  %v794 = vunpack.c.h.b16 %v128
  %v795 = vunpack.c.l.b16 %v129
  %v796 = vunpack.c.h.b16 %v129
  %v797 = vunpack.c.l.b16 %v130
  %v798 = vunpack.c.h.b16 %v130
  %v799 = vunpack.c.l.b16 %v131
  %v800 = vunpack.c.h.b16 %v131
  %v801 = vunpack.c.l.b16 %v132
  %v802 = vunpack.c.h.b16 %v132
  %v803 = vunpack.c.l.b16 %v133
  %v804 = vunpack.c.h.b16 %v133
  %v805 = vunpack.c.l.b16 %v134
  %v806 = vunpack.c.h.b16 %v134
  %v807 = vunpack.c.l.b16 %v135
  %v808 = vunpack.c.h.b16 %v135
  %v809 = vunpack.c.l.b16 %v136
  %v810 = vunpack.c.h.b16 %v136
  %v811 = vunpack.c.l.b16 %v137
  %v812 = vunpack.c.h.b16 %v137
  %v813 = vunpack.c.l.b16 %v138
  %v814 = vunpack.c.h.b16 %v138
  %v815 = vunpack.c.l.b16 %v139
  %v816 = vunpack.c.h.b16 %v139
  %v817 = vunpack.c.l.b16 %v140
  %v818 = vunpack.c.h.b16 %v140
  %v819 = vunpack.c.l.b16 %v141
  %v820 = vunpack.c.h.b16 %v141
  %v821 = vunpack.c.l.b16 %v142
  %v822 = vunpack.c.h.b16 %v142
  %v823 = vunpack.c.l.b16 %v143
  %v824 = vunpack.c.h.b16 %v143
  %v825 = vunpack.c.l.b16 %v144
  %v826 = vunpack.c.h.b16 %v144
  %v827 = vunpack.c.l.b16 %v145
  %v828 = vunpack.c.h.b16 %v145
  %v829 = vunpack.c.l.b16 %v146
  %v830 = vunpack.c.h.b16 %v146
  %v831 = vunpack.c.l.b16 %v147
  %v832 = vunpack.c.h.b16 %v147
  %v833 = vunpack.c.l.b16 %v148
  %v834 = vunpack.c.h.b16 %v148
  %v835 = vunpack.c.l.b16 %v149
  %v836 = vunpack.c.h.b16 %v149
  %v837 = vunpack.c.l.b16 %v150
  %v838 = vunpack.c.h.b16 %v150
  %v839 = vunpack.c.l.b16 %v151
  %v840 = vunpack.c.h.b16 %v151
  %v841 = vunpack.c.l.b16 %v152
  %v842 = vunpack.c.h.b16 %v152
  %v843 = vunpack.c.l.b16 %v153
  %v844 = vunpack.c.h.b16 %v153
  %v845 = vunpack.c.l.b16 %v154
  %v846 = vunpack.c.h.b16 %v154
  %v847 = vunpack.c.l.b16 %v155
  %v848 = vunpack.c.h.b16 %v155
  %v849 = vunpack.c.l.b16 %v156
  %v850 = vunpack.c.h.b16 %v156
  %v851 = vunpack.c.l.b16 %v157
  %v852 = vunpack.c.h.b16 %v157
  %v853 = vunpack.c.l.b16 %v158
  %v854 = vunpack.c.h.b16 %v158
  %v855 = vunpack.c.l.b16 %v159
  %v856 = vunpack.c.h.b16 %v159
  %v857 = vunpack.c.l.b16 %v160
  %v858 = vunpack.c.h.b16 %v160
  %v859 = vunpack.c.l.b16 %v161
  %v860 = vunpack.c.h.b16 %v161
  %v861 = vunpack.c.l.b16 %v162
  %v862 = vunpack.c.h.b16 %v162
  %v863 = vunpack.c.l.b16 %v163
  %v864 = vunpack.c.h.b16 %v163
  %v865 = vunpack.c.l.b16 %v164
  %v866 = vunpack.c.h.b16 %v164
  %v867 = vunpack.c.l.b16 %v165
  %v868 = vunpack.c.h.b16 %v165
  %v869 = vunpack.c.l.b16 %v166
  %v870 = vunpack.c.h.b16 %v166
  %v871 = vunpack.c.l.b16 %v167
  %v872 = vunpack.c.h.b16 %v167
  %v873 = vunpack.c.l.b16 %v168
  %v874 = vunpack.c.h.b16 %v168
  %v875 = vunpack.c.l.b16 %v169
  %v876 = vunpack.c.h.b16 %v169
  %v877 = vunpack.c.l.b16 %v170
  %v878 = vunpack.c.h.b16 %v170
  %v879 = vunpack.c.l.b16 %v171
  %v880 = vunpack.c.h.b16 %v171
  %v881 = vunpack.c.l.b16 %v172
  %v882 = vunpack.c.h.b16 %v172
  %v883 = vunpack.c.l.b16 %v173
  %v884 = vunpack.c.h.b16 %v173
  %v885 = vunpack.c.l.b16 %v174
  %v886 = vunpack.c.h.b16 %v174
  %v887 = vunpack.c.l.b16 %v175
  %v888 = vunpack.c.h.b16 %v175
  %v889 = vunpack.c.l.b16 %v176
  %v890 = vunpack.c.h.b16 %v176
  %v891 = vunpack.c.l.b16 %v177
  %v892 = vunpack.c.h.b16 %v177
  %v893 = vunpack.c.l.b16 %v178
  %v894 = vunpack.c.h.b16 %v178
  %v895 = vunpack.c.l.b16 %v179
  %v896 = vunpack.c.h.b16 %v179
  %v897 = vunpack.c.l.b16 %v180
  %v898 = vunpack.c.h.b16 %v180
  %v899 = vunpack.c.l.b16 %v181
  %v900 = vunpack.c.h.b16 %v181
  %v901 = vunpack.c.l.b16 %v182
  %v902 = vunpack.c.h.b16 %v182
  %v903 = vunpack.c.l.b16 %v183
  %v904 = vunpack.c.h.b16 %v183
  %v905 = vunpack.c.l.b16 %v184
  %v906 = vunpack.c.h.b16 %v184
  %v907 = vunpack.c.l.b16 %v185
  %v908 = vunpack.c.h.b16 %v185
  %v909 = vunpack.c.l.b16 %v186
  %v910 = vunpack.c.h.b16 %v186
  %v911 = vunpack.c.l.b16 %v187
  %v912 = vunpack.c.h.b16 %v187
  %v913 = vunpack.c.l.b16 %v188
  %v914 = vunpack.c.h.b16 %v188
  %v915 = vunpack.c.l.b16 %v189
  %v916 = vunpack.c.h.b16 %v189
  %v917 = vunpack.c.l.b16 %v190
  %v918 = vunpack.c.h.b16 %v190
  %v919 = vunpack.c.l.b16 %v191
  %v920 = vunpack.c.h.b16 %v191
  %v921 = vunpack.c.l.b16 %v192
  %v922 = vunpack.c.h.b16 %v192
  %v923 = vunpack.c.l.b16 %v193
  %v924 = vunpack.c.h.b16 %v193
  %v925 = vunpack.c.l.b16 %v194
  %v926 = vunpack.c.h.b16 %v194
  %v927 = vunpack.c.l.b16 %v195
  %v928 = vunpack.c.h.b16 %v195
  %v929 = vunpack.c.l.b16 %v196
  %v930 = vunpack.c.h.b16 %v196
  %v931 = vunpack.c.l.b16 %v197
  %v932 = vunpack.c.h.b16 %v197
  %v933 = vunpack.c.l.b16 %v198
  %v934 = vunpack.c.h.b16 %v198
  %v935 = vunpack.c.l.b16 %v199
  %v936 = vunpack.c.h.b16 %v199
  %v937 = vunpack.c.l.b16 %v200
  %v938 = vunpack.c.h.b16 %v200
  %v939 = vunpack.c.l.b16 %v201
  %v940 = vunpack.c.h.b16 %v201
  %v941 = vunpack.c.l.b16 %v202
  %v942 = vunpack.c.h.b16 %v202
  %v943 = vunpack.c.l.b16 %v203
  %v944 = vunpack.c.h.b16 %v203
  %v945 = vunpack.c.l.b16 %v204
  %v946 = vunpack.c.h.b16 %v204
  %v947 = vunpack.c.l.b16 %v205
  %v948 = vunpack.c.h.b16 %v205
  %v949 = vunpack.c.l.b16 %v206
  %v950 = vunpack.c.h.b16 %v206
  %v951 = vunpack.c.l.b16 %v207
  %v952 = vunpack.c.h.b16 %v207
  %v953 = vunpack.c.l.b16 %v208
  %v954 = vunpack.c.h.b16 %v208
  %v955 = vunpack.c.l.b16 %v209
  %v956 = vunpack.c.h.b16 %v209
  %v957 = vunpack.c.l.b16 %v210
  %v958 = vunpack.c.h.b16 %v210
  %v959 = vunpack.c.l.b16 %v211
  %v960 = vunpack.c.h.b16 %v211
  %v961 = vunpack.c.l.b16 %v212
  %v962 = vunpack.c.h.b16 %v212
  %v963 = vunpack.c.l.b16 %v213
  %v964 = vunpack.c.h.b16 %v213
  %v965 = vunpack.c.l.b16 %v214
  %v966 = vunpack.c.h.b16 %v214
  %v967 = vunpack.c.l.b16 %v215
  %v968 = vunpack.c.h.b16 %v215
  %v969 = vunpack.c.l.b16 %v216
  %v970 = vunpack.c.h.b16 %v216
  %v971 = vunpack.c.l.b16 %v217
  %v972 = vunpack.c.h.b16 %v217
  %v973 = vunpack.c.l.b16 %v218
  %v974 = vunpack.c.h.b16 %v218
  %v975 = vunpack.c.l.b16 %v219
  %v976 = vunpack.c.h.b16 %v219
  %v977 = vunpack.c.l.b16 %v220
  %v978 = vunpack.c.h.b16 %v220
  %v979 = vunpack.c.l.b16 %v221
  %v980 = vunpack.c.h.b16 %v221
  %v981 = vunpack.c.l.b16 %v222
  %v982 = vunpack.c.h.b16 %v222
  %v983 = vunpack.c.l.b16 %v223
  %v984 = vunpack.c.h.b16 %v223
  %v985 = vunpack.c.l.b16 %v224
  %v986 = vunpack.c.h.b16 %v224
  %v987 = vunpack.c.l.b16 %v225
  %v988 = vunpack.c.h.b16 %v225
  %v989 = vunpack.c.l.b16 %v226
  %v990 = vunpack.c.h.b16 %v226
  %v991 = vunpack.c.l.b16 %v227
  %v992 = vunpack.c.h.b16 %v227
  %v993 = vunpack.c.l.b16 %v228
  %v994 = vunpack.c.h.b16 %v228
  %v995 = vunpack.c.l.b16 %v229
  %v996 = vunpack.c.h.b16 %v229
  %v997 = vunpack.c.l.b16 %v230
  %v998 = vunpack.c.h.b16 %v230
  %v999 = vunpack.c.l.b16 %v231
  %v1000 = vunpack.c.h.b16 %v231
  %v1001 = vunpack.c.l.b16 %v232
  %v1002 = vunpack.c.h.b16 %v232
  %v1003 = vunpack.c.l.b16 %v233
  %v1004 = vunpack.c.h.b16 %v233
  %v1005 = vunpack.c.l.b16 %v234
  %v1006 = vunpack.c.h.b16 %v234
  %v1007 = vunpack.c.l.b16 %v235
  %v1008 = vunpack.c.h.b16 %v235
  %v1009 = vunpack.c.l.b16 %v236
  %v1010 = vunpack.c.h.b16 %v236
  %v1011 = vunpack.c.l.b16 %v237
  %v1012 = vunpack.c.h.b16 %v237
  %v1013 = vunpack.c.l.b16 %v238
  %v1014 = vunpack.c.h.b16 %v238
  %v1015 = vunpack.c.l.b16 %v239
  %v1016 = vunpack.c.h.b16 %v239
  %v1017 = vunpack.c.l.b16 %v240
  %v1018 = vunpack.c.h.b16 %v240
  %v1019 = vunpack.c.l.b16 %v241
  %v1020 = vunpack.c.h.b16 %v241
  %v1021 = vunpack.c.l.b16 %v242
  %v1022 = vunpack.c.h.b16 %v242
  %v1023 = vunpack.c.l.b16 %v243
  %v1024 = vunpack.c.h.b16 %v243
  %v1025 = vunpack.c.l.b16 %v244
  %v1026 = vunpack.c.h.b16 %v244
  %v1027 = vunpack.c.l.b16 %v245
  %v1028 = vunpack.c.h.b16 %v245
  %v1029 = vunpack.c.l.b16 %v246
  %v1030 = vunpack.c.h.b16 %v246
  %v1031 = vunpack.c.l.b16 %v247
  %v1032 = vunpack.c.h.b16 %v247
  %v1033 = vunpack.c.l.b16 %v248
  %v1034 = vunpack.c.h.b16 %v248
  %v1035 = vunpack.c.l.b16 %v249
  %v1036 = vunpack.c.h.b16 %v249
  %v1037 = vunpack.c.l.b16 %v250
  %v1038 = vunpack.c.h.b16 %v250
  %v1039 = vunpack.c.l.b16 %v251
  %v1040 = vunpack.c.h.b16 %v251
  %v1041 = vunpack.c.l.b16 %v252
  %v1042 = vunpack.c.h.b16 %v252
  %v1043 = vunpack.c.l.b16 %v253
  %v1044 = vunpack.c.h.b16 %v253
  %v1045 = vunpack.c.l.b16 %v254
  %v1046 = vunpack.c.h.b16 %v254
  %v1047 = vunpack.c.l.b16 %v255
  %v1048 = vunpack.c.h.b16 %v255
  %v1049 = vunpack.c.l.b16 %v256
  %v1050 = vunpack.c.h.b16 %v256
  %v1051 = vunpack.c.l.b16 %v257
  %v1052 = vunpack.c.h.b16 %v257
  %v1053 = vunpack.c.l.b16 %v258
  %v1054 = vunpack.c.h.b16 %v258
  %v1055 = vunpack.c.l.b16 %v259
  %v1056 = vunpack.c.h.b16 %v259
  %v1057 = vunpack.c.l.b16 %v260
  %v1058 = vunpack.c.h.b16 %v260
  %v1059 = vunpack.c.l.b16 %v261
  %v1060 = vunpack.c.h.b16 %v261
  %v1061 = vunpack.c.l.b16 %v262
  %v1062 = vunpack.c.h.b16 %v262
  %v1063 = vunpack.c.l.b16 %v263
  %v1064 = vunpack.c.h.b16 %v263
  %v1065 = vunpack.c.l.b16 %v264
  %v1066 = vunpack.c.h.b16 %v264
  %v1067 = vunpack.c.l.b16 %v265
  %v1068 = vunpack.c.h.b16 %v265
  %v1069 = vunpack.c.l.b16 %v266
  %v1070 = vunpack.c.h.b16 %v266
  %v1071 = vunpack.c.l.b16 %v267
  %v1072 = vunpack.c.h.b16 %v267
  %v1073 = vunpack.c.l.b16 %v268
  %v1074 = vunpack.c.h.b16 %v268
  %v1075 = vunpack.c.l.b16 %v269
  %v1076 = vunpack.c.h.b16 %v269
  %v1077 = vunpack.c.l.b16 %v270
  %v1078 = vunpack.c.h.b16 %v270
  %v1079 = vunpack.c.l.b16 %v271
  %v1080 = vunpack.c.h.b16 %v271
  %v1081 = vunpack.c.l.b16 %v272
  %v1082 = vunpack.c.h.b16 %v272
  %v1083 = vunpack.c.l.b16 %v273
  %v1084 = vunpack.c.h.b16 %v273
  %v1085 = vunpack.c.l.b16 %v274
  %v1086 = vunpack.c.h.b16 %v274
  %v1087 = vunpack.c.l.b16 %v275
  %v1088 = vunpack.c.h.b16 %v275
  %v1089 = vunpack.c.l.b16 %v276
  %v1090 = vunpack.c.h.b16 %v276
  %v1091 = vunpack.c.l.b16 %v277
  %v1092 = vunpack.c.h.b16 %v277
  %v1093 = vunpack.c.l.b16 %v278
  %v1094 = vunpack.c.h.b16 %v278
  %v1095 = vunpack.c.l.b16 %v279
  %v1096 = vunpack.c.h.b16 %v279
  %v1097 = vunpack.c.l.b16 %v280
  %v1098 = vunpack.c.h.b16 %v280
  %v1099 = vpack.c.b16 %v591, %v587
  %v1100 = vpack.c.b16 %v592, %v588
  %v1101 = vpack.c.b16 %v593, %v589
  %v1102 = vpack.c.b16 %v594, %v590
  %v1103 = vpack.c.b16 %v599, %v595
  %v1104 = vpack.c.b16 %v600, %v596
  %v1105 = vpack.c.b16 %v601, %v597
  %v1106 = vpack.c.b16 %v602, %v598
  %v1107 = vpack.c.b16 %v607, %v603
  %v1108 = vpack.c.b16 %v608, %v604
  %v1109 = vpack.c.b16 %v609, %v605
  %v1110 = vpack.c.b16 %v610, %v606
  %v1111 = vpack.c.b16 %v615, %v611
  %v1112 = vpack.c.b16 %v616, %v612
  %v1113 = vpack.c.b16 %v617, %v613
  %v1114 = vpack.c.b16 %v618, %v614
  %v1115 = vpack.c.b16 %v623, %v619
  %v1116 = vpack.c.b16 %v624, %v620
  %v1117 = vpack.c.b16 %v625, %v621
  %v1118 = vpack.c.b16 %v626, %v622
  %v1119 = vpack.c.b16 %v631, %v627
  %v1120 = vpack.c.b16 %v632, %v628
  %v1121 = vpack.c.b16 %v633, %v629
  %v1122 = vpack.c.b16 %v634, %v630
  %v1123 = vpack.c.b16 %v639, %v635
  %v1124 = vpack.c.b16 %v640, %v636
  %v1125 = vpack.c.b16 %v641, %v637
  %v1126 = vpack.c.b16 %v642, %v638
  %v1127 = vpack.c.b16 %v647, %v643
  %v1128 = vpack.c.b16 %v648, %v644
  %v1129 = vpack.c.b16 %v649, %v645
  %v1130 = vpack.c.b16 %v650, %v646
  %v1131 = vpack.c.b16 %v655, %v651
  %v1132 = vpack.c.b16 %v656, %v652
  %v1133 = vpack.c.b16 %v657, %v653
  %v1134 = vpack.c.b16 %v658, %v654
  %v1135 = vpack.c.b16 %v663, %v659
  %v1136 = vpack.c.b16 %v664, %v660
  %v1137 = vpack.c.b16 %v665, %v661
  %v1138 = vpack.c.b16 %v666, %v662
  %v1139 = vpack.c.b16 %v671, %v667
  %v1140 = vpack.c.b16 %v672, %v668
  %v1141 = vpack.c.b16 %v673, %v669
  %v1142 = vpack.c.b16 %v674, %v670
  %v1143 = vpack.c.b16 %v679, %v675
  %v1144 = vpack.c.b16 %v680, %v676
  %v1145 = vpack.c.b16 %v681, %v677
  %v1146 = vpack.c.b16 %v682, %v678
  %v1147 = vpack.c.b16 %v687, %v683
  %v1148 = vpack.c.b16 %v688, %v684
  %v1149 = vpack.c.b16 %v689, %v685
  %v1150 = vpack.c.b16 %v690, %v686
  %v1151 = vpack.c.b16 %v695, %v691
  %v1152 = vpack.c.b16 %v696, %v692
  %v1153 = vpack.c.b16 %v697, %v693
  %v1154 = vpack.c.b16 %v698, %v694
  %v1155 = vpack.c.b16 %v703, %v699
  %v1156 = vpack.c.b16 %v704, %v700
  %v1157 = vpack.c.b16 %v705, %v701
  %v1158 = vpack.c.b16 %v706, %v702
  %v1159 = vpack.c.b16 %v711, %v707
  %v1160 = vpack.c.b16 %v712, %v708
  %v1161 = vpack.c.b16 %v713, %v709
  %v1162 = vpack.c.b16 %v714, %v710
  %v1163 = vpack.c.b16 %v719, %v715
  %v1164 = vpack.c.b16 %v720, %v716
  %v1165 = vpack.c.b16 %v721, %v717
  %v1166 = vpack.c.b16 %v722, %v718
  %v1167 = vpack.c.b16 %v727, %v723
  %v1168 = vpack.c.b16 %v728, %v724
  %v1169 = vpack.c.b16 %v729, %v725
  %v1170 = vpack.c.b16 %v730, %v726
  %v1171 = vpack.c.b16 %v735, %v731
  %v1172 = vpack.c.b16 %v736, %v732
  %v1173 = vpack.c.b16 %v737, %v733
  %v1174 = vpack.c.b16 %v738, %v734
  %v1175 = vpack.c.b16 %v743, %v739
  %v1176 = vpack.c.b16 %v744, %v740
  %v1177 = vpack.c.b16 %v745, %v741
  %v1178 = vpack.c.b16 %v746, %v742
  %v1179 = vpack.c.b16 %v751, %v747
  %v1180 = vpack.c.b16 %v752, %v748
  %v1181 = vpack.c.b16 %v753, %v749
  %v1182 = vpack.c.b16 %v754, %v750
  %v1183 = vpack.c.b16 %v759, %v755
  %v1184 = vpack.c.b16 %v760, %v756
  %v1185 = vpack.c.b16 %v761, %v757
  %v1186 = vpack.c.b16 %v762, %v758
  %v1187 = vpack.c.b16 %v767, %v763
  %v1188 = vpack.c.b16 %v768, %v764
  %v1189 = vpack.c.b16 %v769, %v765
  %v1190 = vpack.c.b16 %v770, %v766
  %v1191 = vpack.c.b16 %v775, %v771
  %v1192 = vpack.c.b16 %v776, %v772
  %v1193 = vpack.c.b16 %v777, %v773
  %v1194 = vpack.c.b16 %v778, %v774
  %v1195 = vpack.c.b16 %v783, %v779
  %v1196 = vpack.c.b16 %v784, %v780
  %v1197 = vpack.c.b16 %v785, %v781
  %v1198 = vpack.c.b16 %v786, %v782
  %v1199 = vpack.c.b16 %v791, %v787
  %v1200 = vpack.c.b16 %v792, %v788
  %v1201 = vpack.c.b16 %v793, %v789
  %v1202 = vpack.c.b16 %v794, %v790
  %v1203 = vpack.c.b16 %v799, %v795
  %v1204 = vpack.c.b16 %v800, %v796
  %v1205 = vpack.c.b16 %v801, %v797
  %v1206 = vpack.c.b16 %v802, %v798
  %v1207 = vpack.c.b16 %v807, %v803
  %v1208 = vpack.c.b16 %v808, %v804
  %v1209 = vpack.c.b16 %v809, %v805
  %v1210 = vpack.c.b16 %v810, %v806
  %v1211 = vpack.c.b16 %v815, %v811
  %v1212 = vpack.c.b16 %v816, %v812
  %v1213 = vpack.c.b16 %v817, %v813
  %v1214 = vpack.c.b16 %v818, %v814
  %v1215 = vpack.c.b16 %v823, %v819
  %v1216 = vpack.c.b16 %v824, %v820
  %v1217 = vpack.c.b16 %v825, %v821
  %v1218 = vpack.c.b16 %v826, %v822
  %v1219 = vpack.c.b16 %v831, %v827
  %v1220 = vpack.c.b16 %v832, %v828
  %v1221 = vpack.c.b16 %v833, %v829
  %v1222 = vpack.c.b16 %v834, %v830
  %v1223 = vpack.c.b16 %v839, %v835
  %v1224 = vpack.c.b16 %v840, %v836
  %v1225 = vpack.c.b16 %v841, %v837
  %v1226 = vpack.c.b16 %v842, %v838
  %v1227 = vpack.c.b16 %v847, %v843
  %v1228 = vpack.c.b16 %v848, %v844
  %v1229 = vpack.c.b16 %v849, %v845
  %v1230 = vpack.c.b16 %v850, %v846
  %v1231 = vpack.c.b16 %v855, %v851
  %v1232 = vpack.c.b16 %v856, %v852
  %v1233 = vpack.c.b16 %v857, %v853
  %v1234 = vpack.c.b16 %v858, %v854
  %v1235 = vpack.c.b16 %v863, %v859
  %v1236 = vpack.c.b16 %v864, %v860
  %v1237 = vpack.c.b16 %v865, %v861
  %v1238 = vpack.c.b16 %v866, %v862
  %v1239 = vpack.c.b16 %v871, %v867
  %v1240 = vpack.c.b16 %v872, %v868
  %v1241 = vpack.c.b16 %v873, %v869
  %v1242 = vpack.c.b16 %v874, %v870
  %v1243 = vpack.c.b16 %v879, %v875
  %v1244 = vpack.c.b16 %v880, %v876
  %v1245 = vpack.c.b16 %v881, %v877
  %v1246 = vpack.c.b16 %v882, %v878
  %v1247 = vpack.c.b16 %v887, %v883
  %v1248 = vpack.c.b16 %v888, %v884
  %v1249 = vpack.c.b16 %v889, %v885
  %v1250 = vpack.c.b16 %v890, %v886
  %v1251 = vpack.c.b16 %v895, %v891
  %v1252 = vpack.c.b16 %v896, %v892
  %v1253 = vpack.c.b16 %v897, %v893
  %v1254 = vpack.c.b16 %v898, %v894
  %v1255 = vpack.c.b16 %v903, %v899
  %v1256 = vpack.c.b16 %v904, %v900
  %v1257 = vpack.c.b16 %v905, %v901
  %v1258 = vpack.c.b16 %v906, %v902
  %v1259 = vpack.c.b16 %v911, %v907
  %v1260 = vpack.c.b16 %v912, %v908
  %v1261 = vpack.c.b16 %v913, %v909
  %v1262 = vpack.c.b16 %v914, %v910
  %v1263 = vpack.c.b16 %v919, %v915
  %v1264 = vpack.c.b16 %v920, %v916
  %v1265 = vpack.c.b16 %v921, %v917
  %v1266 = vpack.c.b16 %v922, %v918
  %v1267 = vpack.c.b16 %v927, %v923
  %v1268 = vpack.c.b16 %v928, %v924
  %v1269 = vpack.c.b16 %v929, %v925
  %v1270 = vpack.c.b16 %v930, %v926
  %v1271 = vpack.c.b16 %v935, %v931
  %v1272 = vpack.c.b16 %v936, %v932
  %v1273 = vpack.c.b16 %v937, %v933
  %v1274 = vpack.c.b16 %v938, %v934
  %v1275 = vpack.c.b16 %v943, %v939
  %v1276 = vpack.c.b16 %v944, %v940
  %v1277 = vpack.c.b16 %v945, %v941
  %v1278 = vpack.c.b16 %v946, %v942
  %v1279 = vpack.c.b16 %v951, %v947
  %v1280 = vpack.c.b16 %v952, %v948
  %v1281 = vpack.c.b16 %v953, %v949
  %v1282 = vpack.c.b16 %v954, %v950
  %v1283 = vpack.c.b16 %v959, %v955
  %v1284 = vpack.c.b16 %v960, %v956
  %v1285 = vpack.c.b16 %v961, %v957
  %v1286 = vpack.c.b16 %v962, %v958
  %v1287 = vpack.c.b16 %v967, %v963
  %v1288 = vpack.c.b16 %v968, %v964
  %v1289 = vpack.c.b16 %v969, %v965
  %v1290 = vpack.c.b16 %v970, %v966
  %v1291 = vpack.c.b16 %v975, %v971
  %v1292 = vpack.c.b16 %v976, %v972
  %v1293 = vpack.c.b16 %v977, %v973
  %v1294 = vpack.c.b16 %v978, %v974
  %v1295 = vpack.c.b16 %v983, %v979
  %v1296 = vpack.c.b16 %v984, %v980
  %v1297 = vpack.c.b16 %v985, %v981
  %v1298 = vpack.c.b16 %v986, %v982
  %v1299 = vpack.c.b16 %v991, %v987
  %v1300 = vpack.c.b16 %v992, %v988
  %v1301 = vpack.c.b16 %v993, %v989
  %v1302 = vpack.c.b16 %v994, %v990
  %v1303 = vpack.c.b16 %v999, %v995
  %v1304 = vpack.c.b16 %v1000, %v996
  %v1305 = vpack.c.b16 %v1001, %v997
  %v1306 = vpack.c.b16 %v1002, %v998
  %v1307 = vpack.c.b16 %v1007, %v1003
  %v1308 = vpack.c.b16 %v1008, %v1004
  %v1309 = vpack.c.b16 %v1009, %v1005
  %v1310 = vpack.c.b16 %v1010, %v1006
  %v1311 = vpack.c.b16 %v1015, %v1011
  %v1312 = vpack.c.b16 %v1016, %v1012
  %v1313 = vpack.c.b16 %v1017, %v1013
  %v1314 = vpack.c.b16 %v1018, %v1014
  %v1315 = vpack.c.b16 %v1023, %v1019
  %v1316 = vpack.c.b16 %v1024, %v1020
  %v1317 = vpack.c.b16 %v1025, %v1021
  %v1318 = vpack.c.b16 %v1026, %v1022
  %v1319 = vpack.c.b16 %v1031, %v1027
  %v1320 = vpack.c.b16 %v1032, %v1028
  %v1321 = vpack.c.b16 %v1033, %v1029
  %v1322 = vpack.c.b16 %v1034, %v1030
  %v1323 = vpack.c.b16 %v1039, %v1035
  %v1324 = vpack.c.b16 %v1040, %v1036
  %v1325 = vpack.c.b16 %v1041, %v1037
  %v1326 = vpack.c.b16 %v1042, %v1038
  %v1327 = vpack.c.b16 %v1047, %v1043
  %v1328 = vpack.c.b16 %v1048, %v1044
  %v1329 = vpack.c.b16 %v1049, %v1045
  %v1330 = vpack.c.b16 %v1050, %v1046
  %v1331 = vpack.c.b16 %v1055, %v1051
  %v1332 = vpack.c.b16 %v1056, %v1052
  %v1333 = vpack.c.b16 %v1057, %v1053
  %v1334 = vpack.c.b16 %v1058, %v1054
  %v1335 = vpack.c.b16 %v1063, %v1059
  %v1336 = vpack.c.b16 %v1064, %v1060
  %v1337 = vpack.c.b16 %v1065, %v1061
  %v1338 = vpack.c.b16 %v1066, %v1062
  %v1339 = vpack.c.b16 %v1071, %v1067
  %v1340 = vpack.c.b16 %v1072, %v1068
  %v1341 = vpack.c.b16 %v1073, %v1069
  %v1342 = vpack.c.b16 %v1074, %v1070
  %v1343 = vpack.c.b16 %v1079, %v1075
  %v1344 = vpack.c.b16 %v1080, %v1076
  %v1345 = vpack.c.b16 %v1081, %v1077
  %v1346 = vpack.c.b16 %v1082, %v1078
  %v1347 = vpack.c.b16 %v1087, %v1083
  %v1348 = vpack.c.b16 %v1088, %v1084
  %v1349 = vpack.c.b16 %v1089, %v1085
  %v1350 = vpack.c.b16 %v1090, %v1086
  %v1351 = vpack.c.b16 %v1095, %v1091
  %v1352 = vpack.c.b16 %v1096, %v1092
  %v1353 = vpack.c.b16 %v1097, %v1093
  %v1354 = vpack.c.b16 %v1098, %v1094
  %1611 = vmatprep.subr.bf16.mxu0 %v1128
  %1612 = vmatpush1.bf16.msra.mxu0 %v1127
  %1613 = vmatprep.subr.bf16.mxu0 %v1124
  %1614 = vmatpush1.bf16.msra.mxu0 %v1123
  %1615 = vmatprep.subr.bf16.mxu0 %v1120
  %1616 = vmatpush1.bf16.msra.mxu0 %v1119
  %1617 = vmatprep.subr.bf16.mxu0 %v1116
  %1618 = vmatpush1.bf16.msra.mxu0 %v1115
  %1619 = vmatprep.subr.bf16.mxu0 %v1112
  %1620 = vmatpush1.bf16.msra.mxu0 %v1111
  %1621 = vmatprep.subr.bf16.mxu0 %v1108
  %1622 = vmatpush1.bf16.msra.mxu0 %v1107
  %1623 = vmatprep.subr.bf16.mxu0 %v1104
  %1624 = vmatpush1.bf16.msra.mxu0 %v1103
  %1625 = vmatprep.subr.bf16.mxu0 %v1100
  %1626 = vmatpush1.bf16.msra.mxu0 %v1099
  %1627 = vmatprep.subr.bf16.mxu0 %v1160
  %1628 = vmatpush2.bf16.msra.mxu0 %v1159
  %1629 = vmatprep.subr.bf16.mxu0 %v1156
  %1630 = vmatpush2.bf16.msra.mxu0 %v1155
  %1631 = vmatprep.subr.bf16.mxu0 %v1152
  %1632 = vmatpush2.bf16.msra.mxu0 %v1151
  %1633 = vmatprep.subr.bf16.mxu0 %v1148
  %1634 = vmatpush2.bf16.msra.mxu0 %v1147
  %1635 = vmatprep.subr.bf16.mxu0 %v1144
  %1636 = vmatpush2.bf16.msra.mxu0 %v1143
  %1637 = vmatprep.subr.bf16.mxu0 %v1140
  %1638 = vmatpush2.bf16.msra.mxu0 %v1139
  %1639 = vmatprep.subr.bf16.mxu0 %v1136
  %1640 = vmatpush2.bf16.msra.mxu0 %v1135
  %1641 = vmatprep.subr.bf16.mxu0 %v1132
  %1642 = vmatpush2.bf16.msra.mxu0 %v1131
  %1643 = vmatprep.mubr.bf16.mxu0 %v316
  %1644 = vmatmul.mubr.bf16.gmra.mxu0 %v315
  %v1645 = vpop.f32.mrf.mxu0
  %v1646 = vadd.f32 %v286, %v1645
  %v1647 = vpop.f32.mrf.mxu0
  %v1648 = vadd.f32 %v290, %v1647
  %v1649 = vpop.f32.mrf.mxu0
  %v1650 = vpop.f32.mrf.mxu0
  %1651 = vdwg.mxu0
  %1652 = vmatprep.subr.bf16.mxu0 %v1192
  %1653 = vmatpush1.bf16.msra.mxu0 %v1191
  %1654 = vmatprep.subr.bf16.mxu0 %v1188
  %1655 = vmatpush1.bf16.msra.mxu0 %v1187
  %1656 = vmatprep.subr.bf16.mxu0 %v1184
  %1657 = vmatpush1.bf16.msra.mxu0 %v1183
  %1658 = vmatprep.subr.bf16.mxu0 %v1180
  %1659 = vmatpush1.bf16.msra.mxu0 %v1179
  %1660 = vmatprep.subr.bf16.mxu0 %v1176
  %1661 = vmatpush1.bf16.msra.mxu0 %v1175
  %1662 = vmatprep.subr.bf16.mxu0 %v1172
  %1663 = vmatpush1.bf16.msra.mxu0 %v1171
  %1664 = vmatprep.subr.bf16.mxu0 %v1168
  %1665 = vmatpush1.bf16.msra.mxu0 %v1167
  %1666 = vmatprep.subr.bf16.mxu0 %v1164
  %1667 = vmatpush1.bf16.msra.mxu0 %v1163
  %1668 = vmatprep.subr.bf16.mxu0 %v1224
  %1669 = vmatpush2.bf16.msra.mxu0 %v1223
  %1670 = vmatprep.subr.bf16.mxu0 %v1220
  %1671 = vmatpush2.bf16.msra.mxu0 %v1219
  %1672 = vmatprep.subr.bf16.mxu0 %v1216
  %1673 = vmatpush2.bf16.msra.mxu0 %v1215
  %1674 = vmatprep.subr.bf16.mxu0 %v1212
  %1675 = vmatpush2.bf16.msra.mxu0 %v1211
  %1676 = vmatprep.subr.bf16.mxu0 %v1208
  %1677 = vmatpush2.bf16.msra.mxu0 %v1207
  %1678 = vmatprep.subr.bf16.mxu0 %v1204
  %1679 = vmatpush2.bf16.msra.mxu0 %v1203
  %1680 = vmatprep.subr.bf16.mxu0 %v1200
  %1681 = vmatpush2.bf16.msra.mxu0 %v1199
  %1682 = vmatprep.subr.bf16.mxu0 %v1196
  %1683 = vmatpush2.bf16.msra.mxu0 %v1195
  %1684 = vmatprep.mubr.bf16.mxu0 %v318
  %1685 = vmatmul.mubr.bf16.gmra.mxu0 %v317
  %v1686 = vpop.f32.mrf.mxu0
  %v1687 = vadd.f32 %v1646, %v1686
  %v1688 = vpop.f32.mrf.mxu0
  %v1689 = vadd.f32 %v1648, %v1688
  %v1690 = vpop.f32.mrf.mxu0
  %v1691 = vpop.f32.mrf.mxu0
  %1692 = vdwg.mxu0
  %1693 = vmatprep.subr.bf16.mxu0 %v1256
  %1694 = vmatpush1.bf16.msra.mxu0 %v1255
  %1695 = vmatprep.subr.bf16.mxu0 %v1252
  %1696 = vmatpush1.bf16.msra.mxu0 %v1251
  %1697 = vmatprep.subr.bf16.mxu0 %v1248
  %1698 = vmatpush1.bf16.msra.mxu0 %v1247
  %1699 = vmatprep.subr.bf16.mxu0 %v1244
  %1700 = vmatpush1.bf16.msra.mxu0 %v1243
  %1701 = vmatprep.subr.bf16.mxu0 %v1240
  %1702 = vmatpush1.bf16.msra.mxu0 %v1239
  %1703 = vmatprep.subr.bf16.mxu0 %v1236
  %1704 = vmatpush1.bf16.msra.mxu0 %v1235
  %1705 = vmatprep.subr.bf16.mxu0 %v1232
  %1706 = vmatpush1.bf16.msra.mxu0 %v1231
  %1707 = vmatprep.subr.bf16.mxu0 %v1228
  %1708 = vmatpush1.bf16.msra.mxu0 %v1227
  %1709 = vmatprep.subr.bf16.mxu0 %v1288
  %1710 = vmatpush2.bf16.msra.mxu0 %v1287
  %1711 = vmatprep.subr.bf16.mxu0 %v1284
  %1712 = vmatpush2.bf16.msra.mxu0 %v1283
  %1713 = vmatprep.subr.bf16.mxu0 %v1280
  %1714 = vmatpush2.bf16.msra.mxu0 %v1279
  %1715 = vmatprep.subr.bf16.mxu0 %v1276
  %1716 = vmatpush2.bf16.msra.mxu0 %v1275
  %1717 = vmatprep.subr.bf16.mxu0 %v1272
  %1718 = vmatpush2.bf16.msra.mxu0 %v1271
  %1719 = vmatprep.subr.bf16.mxu0 %v1268
  %1720 = vmatpush2.bf16.msra.mxu0 %v1267
  %1721 = vmatprep.subr.bf16.mxu0 %v1264
  %1722 = vmatpush2.bf16.msra.mxu0 %v1263
  %1723 = vmatprep.subr.bf16.mxu0 %v1260
  %1724 = vmatpush2.bf16.msra.mxu0 %v1259
  %1725 = vmatprep.mubr.bf16.mxu0 %v320
  %1726 = vmatmul.mubr.bf16.gmra.mxu0 %v319
  %v1727 = vpop.f32.mrf.mxu0
  %v1728 = vadd.f32 %v1687, %v1727
  %v1729 = vpop.f32.mrf.mxu0
  %v1730 = vadd.f32 %v1689, %v1729
  %v1731 = vpop.f32.mrf.mxu0
  %v1732 = vpop.f32.mrf.mxu0
  %1733 = vdwg.mxu0
  %1734 = vmatprep.subr.bf16.mxu0 %v1320
  %1735 = vmatpush1.bf16.msra.mxu0 %v1319
  %1736 = vmatprep.subr.bf16.mxu0 %v1316
  %1737 = vmatpush1.bf16.msra.mxu0 %v1315
  %1738 = vmatprep.subr.bf16.mxu0 %v1312
  %1739 = vmatpush1.bf16.msra.mxu0 %v1311
  %1740 = vmatprep.subr.bf16.mxu0 %v1308
  %1741 = vmatpush1.bf16.msra.mxu0 %v1307
  %1742 = vmatprep.subr.bf16.mxu0 %v1304
  %1743 = vmatpush1.bf16.msra.mxu0 %v1303
  %1744 = vmatprep.subr.bf16.mxu0 %v1300
  %1745 = vmatpush1.bf16.msra.mxu0 %v1299
  %1746 = vmatprep.subr.bf16.mxu0 %v1296
  %1747 = vmatpush1.bf16.msra.mxu0 %v1295
  %1748 = vmatprep.subr.bf16.mxu0 %v1292
  %1749 = vmatpush1.bf16.msra.mxu0 %v1291
  %1750 = vmatprep.subr.bf16.mxu0 %v1352
  %1751 = vmatpush2.bf16.msra.mxu0 %v1351
  %1752 = vmatprep.subr.bf16.mxu0 %v1348
  %1753 = vmatpush2.bf16.msra.mxu0 %v1347
  %1754 = vmatprep.subr.bf16.mxu0 %v1344
  %1755 = vmatpush2.bf16.msra.mxu0 %v1343
  %1756 = vmatprep.subr.bf16.mxu0 %v1340
  %1757 = vmatpush2.bf16.msra.mxu0 %v1339
  %1758 = vmatprep.subr.bf16.mxu0 %v1336
  %1759 = vmatpush2.bf16.msra.mxu0 %v1335
  %1760 = vmatprep.subr.bf16.mxu0 %v1332
  %1761 = vmatpush2.bf16.msra.mxu0 %v1331
  %1762 = vmatprep.subr.bf16.mxu0 %v1328
  %1763 = vmatpush2.bf16.msra.mxu0 %v1327
  %1764 = vmatprep.subr.bf16.mxu0 %v1324
  %1765 = vmatpush2.bf16.msra.mxu0 %v1323
  %1766 = vmatprep.mubr.bf16.mxu0 %v322
  %1767 = vmatmul.mubr.bf16.gmra.mxu0 %v321
  %v1768 = vpop.f32.mrf.mxu0
  %v1769 = vadd.f32 %v1728, %v1768
  %v1770 = vpop.f32.mrf.mxu0
  %v1771 = vadd.f32 %v1730, %v1770
  %v1772 = vpop.f32.mrf.mxu0
  %v1773 = vpop.f32.mrf.mxu0
  %1774 = vdwg.mxu0
  %1775 = vmatprep.subr.bf16.mxu0 %v1130
  %1776 = vmatpush1.bf16.msra.mxu0 %v1129
  %1777 = vmatprep.subr.bf16.mxu0 %v1126
  %1778 = vmatpush1.bf16.msra.mxu0 %v1125
  %1779 = vmatprep.subr.bf16.mxu0 %v1122
  %1780 = vmatpush1.bf16.msra.mxu0 %v1121
  %1781 = vmatprep.subr.bf16.mxu0 %v1118
  %1782 = vmatpush1.bf16.msra.mxu0 %v1117
  %1783 = vmatprep.subr.bf16.mxu0 %v1114
  %1784 = vmatpush1.bf16.msra.mxu0 %v1113
  %1785 = vmatprep.subr.bf16.mxu0 %v1110
  %1786 = vmatpush1.bf16.msra.mxu0 %v1109
  %1787 = vmatprep.subr.bf16.mxu0 %v1106
  %1788 = vmatpush1.bf16.msra.mxu0 %v1105
  %1789 = vmatprep.subr.bf16.mxu0 %v1102
  %1790 = vmatpush1.bf16.msra.mxu0 %v1101
  %1791 = vmatprep.subr.bf16.mxu0 %v1162
  %1792 = vmatpush2.bf16.msra.mxu0 %v1161
  %1793 = vmatprep.subr.bf16.mxu0 %v1158
  %1794 = vmatpush2.bf16.msra.mxu0 %v1157
  %1795 = vmatprep.subr.bf16.mxu0 %v1154
  %1796 = vmatpush2.bf16.msra.mxu0 %v1153
  %1797 = vmatprep.subr.bf16.mxu0 %v1150
  %1798 = vmatpush2.bf16.msra.mxu0 %v1149
  %1799 = vmatprep.subr.bf16.mxu0 %v1146
  %1800 = vmatpush2.bf16.msra.mxu0 %v1145
  %1801 = vmatprep.subr.bf16.mxu0 %v1142
  %1802 = vmatpush2.bf16.msra.mxu0 %v1141
  %1803 = vmatprep.subr.bf16.mxu0 %v1138
  %1804 = vmatpush2.bf16.msra.mxu0 %v1137
  %1805 = vmatprep.subr.bf16.mxu0 %v1134
  %1806 = vmatpush2.bf16.msra.mxu0 %v1133
  %1807 = vmatprep.mubr.bf16.mxu0 %v316
  %1808 = vmatmul.mubr.bf16.gmra.mxu0 %v315
  %v1809 = vpop.f32.mrf.mxu0
  %v1810 = vadd.f32 %v294, %v1809
  %v1811 = vpop.f32.mrf.mxu0
  %v1812 = vadd.f32 %v298, %v1811
  %v1813 = vpop.f32.mrf.mxu0
  %v1814 = vpop.f32.mrf.mxu0
  %1815 = vdwg.mxu0
  %1816 = vmatprep.subr.bf16.mxu0 %v1194
  %1817 = vmatpush1.bf16.msra.mxu0 %v1193
  %1818 = vmatprep.subr.bf16.mxu0 %v1190
  %1819 = vmatpush1.bf16.msra.mxu0 %v1189
  %1820 = vmatprep.subr.bf16.mxu0 %v1186
  %1821 = vmatpush1.bf16.msra.mxu0 %v1185
  %1822 = vmatprep.subr.bf16.mxu0 %v1182
  %1823 = vmatpush1.bf16.msra.mxu0 %v1181
  %1824 = vmatprep.subr.bf16.mxu0 %v1178
  %1825 = vmatpush1.bf16.msra.mxu0 %v1177
  %1826 = vmatprep.subr.bf16.mxu0 %v1174
  %1827 = vmatpush1.bf16.msra.mxu0 %v1173
  %1828 = vmatprep.subr.bf16.mxu0 %v1170
  %1829 = vmatpush1.bf16.msra.mxu0 %v1169
  %1830 = vmatprep.subr.bf16.mxu0 %v1166
  %1831 = vmatpush1.bf16.msra.mxu0 %v1165
  %1832 = vmatprep.subr.bf16.mxu0 %v1226
  %1833 = vmatpush2.bf16.msra.mxu0 %v1225
  %1834 = vmatprep.subr.bf16.mxu0 %v1222
  %1835 = vmatpush2.bf16.msra.mxu0 %v1221
  %1836 = vmatprep.subr.bf16.mxu0 %v1218
  %1837 = vmatpush2.bf16.msra.mxu0 %v1217
  %1838 = vmatprep.subr.bf16.mxu0 %v1214
  %1839 = vmatpush2.bf16.msra.mxu0 %v1213
  %1840 = vmatprep.subr.bf16.mxu0 %v1210
  %1841 = vmatpush2.bf16.msra.mxu0 %v1209
  %1842 = vmatprep.subr.bf16.mxu0 %v1206
  %1843 = vmatpush2.bf16.msra.mxu0 %v1205
  %1844 = vmatprep.subr.bf16.mxu0 %v1202
  %1845 = vmatpush2.bf16.msra.mxu0 %v1201
  %1846 = vmatprep.subr.bf16.mxu0 %v1198
  %1847 = vmatpush2.bf16.msra.mxu0 %v1197
  %1848 = vmatprep.mubr.bf16.mxu0 %v318
  %1849 = vmatmul.mubr.bf16.gmra.mxu0 %v317
  %v1850 = vpop.f32.mrf.mxu0
  %v1851 = vadd.f32 %v1810, %v1850
  %v1852 = vpop.f32.mrf.mxu0
  %v1853 = vadd.f32 %v1812, %v1852
  %v1854 = vpop.f32.mrf.mxu0
  %v1855 = vpop.f32.mrf.mxu0
  %1856 = vdwg.mxu0
  %1857 = vmatprep.subr.bf16.mxu0 %v1258
  %1858 = vmatpush1.bf16.msra.mxu0 %v1257
  %1859 = vmatprep.subr.bf16.mxu0 %v1254
  %1860 = vmatpush1.bf16.msra.mxu0 %v1253
  %1861 = vmatprep.subr.bf16.mxu0 %v1250
  %1862 = vmatpush1.bf16.msra.mxu0 %v1249
  %1863 = vmatprep.subr.bf16.mxu0 %v1246
  %1864 = vmatpush1.bf16.msra.mxu0 %v1245
  %1865 = vmatprep.subr.bf16.mxu0 %v1242
  %1866 = vmatpush1.bf16.msra.mxu0 %v1241
  %1867 = vmatprep.subr.bf16.mxu0 %v1238
  %1868 = vmatpush1.bf16.msra.mxu0 %v1237
  %1869 = vmatprep.subr.bf16.mxu0 %v1234
  %1870 = vmatpush1.bf16.msra.mxu0 %v1233
  %1871 = vmatprep.subr.bf16.mxu0 %v1230
  %1872 = vmatpush1.bf16.msra.mxu0 %v1229
  %1873 = vmatprep.subr.bf16.mxu0 %v1290
  %1874 = vmatpush2.bf16.msra.mxu0 %v1289
  %1875 = vmatprep.subr.bf16.mxu0 %v1286
  %1876 = vmatpush2.bf16.msra.mxu0 %v1285
  %1877 = vmatprep.subr.bf16.mxu0 %v1282
  %1878 = vmatpush2.bf16.msra.mxu0 %v1281
  %1879 = vmatprep.subr.bf16.mxu0 %v1278
  %1880 = vmatpush2.bf16.msra.mxu0 %v1277
  %1881 = vmatprep.subr.bf16.mxu0 %v1274
  %1882 = vmatpush2.bf16.msra.mxu0 %v1273
  %1883 = vmatprep.subr.bf16.mxu0 %v1270
  %1884 = vmatpush2.bf16.msra.mxu0 %v1269
  %1885 = vmatprep.subr.bf16.mxu0 %v1266
  %1886 = vmatpush2.bf16.msra.mxu0 %v1265
  %1887 = vmatprep.subr.bf16.mxu0 %v1262
  %1888 = vmatpush2.bf16.msra.mxu0 %v1261
  %1889 = vmatprep.mubr.bf16.mxu0 %v320
  %1890 = vmatmul.mubr.bf16.gmra.mxu0 %v319
  %v1891 = vpop.f32.mrf.mxu0
  %v1892 = vadd.f32 %v1851, %v1891
  %v1893 = vpop.f32.mrf.mxu0
  %v1894 = vadd.f32 %v1853, %v1893
  %v1895 = vpop.f32.mrf.mxu0
  %v1896 = vpop.f32.mrf.mxu0
  %1897 = vdwg.mxu0
  %1898 = vmatprep.subr.bf16.mxu0 %v1322
  %1899 = vmatpush1.bf16.msra.mxu0 %v1321
  %1900 = vmatprep.subr.bf16.mxu0 %v1318
  %1901 = vmatpush1.bf16.msra.mxu0 %v1317
  %1902 = vmatprep.subr.bf16.mxu0 %v1314
  %1903 = vmatpush1.bf16.msra.mxu0 %v1313
  %1904 = vmatprep.subr.bf16.mxu0 %v1310
  %1905 = vmatpush1.bf16.msra.mxu0 %v1309
  %1906 = vmatprep.subr.bf16.mxu0 %v1306
  %1907 = vmatpush1.bf16.msra.mxu0 %v1305
  %1908 = vmatprep.subr.bf16.mxu0 %v1302
  %1909 = vmatpush1.bf16.msra.mxu0 %v1301
  %1910 = vmatprep.subr.bf16.mxu0 %v1298
  %1911 = vmatpush1.bf16.msra.mxu0 %v1297
  %1912 = vmatprep.subr.bf16.mxu0 %v1294
  %1913 = vmatpush1.bf16.msra.mxu0 %v1293
  %1914 = vmatprep.subr.bf16.mxu0 %v1354
  %1915 = vmatpush2.bf16.msra.mxu0 %v1353
  %1916 = vmatprep.subr.bf16.mxu0 %v1350
  %1917 = vmatpush2.bf16.msra.mxu0 %v1349
  %1918 = vmatprep.subr.bf16.mxu0 %v1346
  %1919 = vmatpush2.bf16.msra.mxu0 %v1345
  %1920 = vmatprep.subr.bf16.mxu0 %v1342
  %1921 = vmatpush2.bf16.msra.mxu0 %v1341
  %1922 = vmatprep.subr.bf16.mxu0 %v1338
  %1923 = vmatpush2.bf16.msra.mxu0 %v1337
  %1924 = vmatprep.subr.bf16.mxu0 %v1334
  %1925 = vmatpush2.bf16.msra.mxu0 %v1333
  %1926 = vmatprep.subr.bf16.mxu0 %v1330
  %1927 = vmatpush2.bf16.msra.mxu0 %v1329
  %1928 = vmatprep.subr.bf16.mxu0 %v1326
  %1929 = vmatpush2.bf16.msra.mxu0 %v1325
  %1930 = vmatprep.mubr.bf16.mxu0 %v322
  %1931 = vmatmul.mubr.bf16.gmra.mxu0 %v321
  %v1932 = vpop.f32.mrf.mxu0
  %v1933 = vadd.f32 %v1892, %v1932
  %v1934 = vpop.f32.mrf.mxu0
  %v1935 = vadd.f32 %v1894, %v1934
  %v1936 = vpop.f32.mrf.mxu0
  %v1937 = vpop.f32.mrf.mxu0
  %1938 = vdwg.mxu0
  %v1939 = vmax.f32 %v1769, 0.0
  %v1940 = vmax.f32 %v1771, 0.0
  %v1941 = vmax.f32 %v1933, 0.0
  %v1942 = vmax.f32 %v1935, 0.0
  %v1943 = vpack.c.bf16 %v1939, %v1939
  %v1944 = vpack.c.bf16 %v1940, %v1940
  %v1945 = vpack.c.bf16 %v1941, %v1941
  %v1946 = vpack.c.bf16 %v1942, %v1942
  %v1947 = vld [vmem:[%s3] sm:$0xf]
  %v1948 = vld [vmem:[%s3 + $0x4] sm:$0xf]
  %v1949 = vld [vmem:[%s3 + $0x8] sm:$0xf]
  %v1950 = vld [vmem:[%s3 + $0xc] sm:$0xf]
  %v1951 = vld [vmem:[%s3 + $0x10] sm:$0xf]
  %v1952 = vld [vmem:[%s3 + $0x14] sm:$0xf]
  %v1953 = vld [vmem:[%s3 + $0x18] sm:$0xf]
  %v1954 = vld [vmem:[%s3 + $0x1c] sm:$0xf]
  %v1955 = vld [vmem:[%s3 + $0x20] sm:$0xf]
  %v1956 = vld [vmem:[%s3 + $0x24] sm:$0xf]
  %v1957 = vld [vmem:[%s3 + $0x28] sm:$0xf]
  %v1958 = vld [vmem:[%s3 + $0x2c] sm:$0xf]
  %v1959 = vld [vmem:[%s3 + $0x30] sm:$0xf]
  %v1960 = vld [vmem:[%s3 + $0x34] sm:$0xf]
  %v1961 = vld [vmem:[%s3 + $0x38] sm:$0xf]
  %v1962 = vld [vmem:[%s3 + $0x3c] sm:$0xf]
  %v1963 = vld [vmem:[%s3 + $0x40] sm:$0xf]
  %v1964 = vld [vmem:[%s3 + $0x44] sm:$0xf]
  %v1965 = vld [vmem:[%s3 + $0x48] sm:$0xf]
  %v1966 = vld [vmem:[%s3 + $0x4c] sm:$0xf]
  %v1967 = vld [vmem:[%s3 + $0x50] sm:$0xf]
  %v1968 = vld [vmem:[%s3 + $0x54] sm:$0xf]
  %v1969 = vld [vmem:[%s3 + $0x58] sm:$0xf]
  %v1970 = vld [vmem:[%s3 + $0x5c] sm:$0xf]
  %v1971 = vld [vmem:[%s3 + $0x60] sm:$0xf]
  %v1972 = vld [vmem:[%s3 + $0x64] sm:$0xf]
  %v1973 = vld [vmem:[%s3 + $0x68] sm:$0xf]
  %v1974 = vld [vmem:[%s3 + $0x6c] sm:$0xf]
  %v1975 = vld [vmem:[%s3 + $0x70] sm:$0xf]
  %v1976 = vld [vmem:[%s3 + $0x74] sm:$0xf]
  %v1977 = vld [vmem:[%s3 + $0x78] sm:$0xf]
  %v1978 = vld [vmem:[%s3 + $0x7c] sm:$0xf]
  %v1979 = vld [vmem:[%s3 + $0x80] sm:$0xf]
  %v1980 = vld [vmem:[%s3 + $0x84] sm:$0xf]
  %v1981 = vld [vmem:[%s3 + $0x88] sm:$0xf]
  %v1982 = vld [vmem:[%s3 + $0x8c] sm:$0xf]
  %v1983 = vld [vmem:[%s3 + $0x90] sm:$0xf]
  %v1984 = vld [vmem:[%s3 + $0x94] sm:$0xf]
  %v1985 = vld [vmem:[%s3 + $0x98] sm:$0xf]
  %v1986 = vld [vmem:[%s3 + $0x9c] sm:$0xf]
  %v1987 = vld [vmem:[%s3 + $0xa0] sm:$0xf]
  %v1988 = vld [vmem:[%s3 + $0xa4] sm:$0xf]
  %v1989 = vld [vmem:[%s3 + $0xa8] sm:$0xf]
  %v1990 = vld [vmem:[%s3 + $0xac] sm:$0xf]
  %v1991 = vld [vmem:[%s3 + $0xb0] sm:$0xf]
  %v1992 = vld [vmem:[%s3 + $0xb4] sm:$0xf]
  %v1993 = vld [vmem:[%s3 + $0xb8] sm:$0xf]
  %v1994 = vld [vmem:[%s3 + $0xbc] sm:$0xf]
  %v1995 = vld [vmem:[%s3 + $0xc0] sm:$0xf]
  %v1996 = vld [vmem:[%s3 + $0xc4] sm:$0xf]
  %v1997 = vld [vmem:[%s3 + $0xc8] sm:$0xf]
  %v1998 = vld [vmem:[%s3 + $0xcc] sm:$0xf]
  %v1999 = vld [vmem:[%s3 + $0xd0] sm:$0xf]
  %v2000 = vld [vmem:[%s3 + $0xd4] sm:$0xf]
  %v2001 = vld [vmem:[%s3 + $0xd8] sm:$0xf]
  %v2002 = vld [vmem:[%s3 + $0xdc] sm:$0xf]
  %v2003 = vld [vmem:[%s3 + $0xe0] sm:$0xf]
  %v2004 = vld [vmem:[%s3 + $0xe4] sm:$0xf]
  %v2005 = vld [vmem:[%s3 + $0xe8] sm:$0xf]
  %v2006 = vld [vmem:[%s3 + $0xec] sm:$0xf]
  %v2007 = vld [vmem:[%s3 + $0xf0] sm:$0xf]
  %v2008 = vld [vmem:[%s3 + $0xf4] sm:$0xf]
  %v2009 = vld [vmem:[%s3 + $0xf8] sm:$0xf]
  %v2010 = vld [vmem:[%s3 + $0xfc] sm:$0xf]
  %v2011 = vld [vmem:[%s4] sm:$0x1]
  %v2013 = vlaneseq
  %v2014 = vshrl.u32 %v2013, 7
  %v2015 = vsub.s32 0, %v2014
  %v2016 = vrot.slane %v2011, %v2015
  %v2082 = vunpack.c.l.b16 %v1947
  %v2083 = vunpack.c.l.b16 %v1948
  %v2084 = vunpack.c.l.b16 %v1949
  %v2085 = vunpack.c.l.b16 %v1950
  %v2086 = vunpack.c.l.b16 %v1951
  %v2087 = vunpack.c.l.b16 %v1952
  %v2088 = vunpack.c.l.b16 %v1953
  %v2089 = vunpack.c.l.b16 %v1954
  %v2090 = vunpack.c.l.b16 %v1955
  %v2091 = vunpack.c.l.b16 %v1956
  %v2092 = vunpack.c.l.b16 %v1957
  %v2093 = vunpack.c.l.b16 %v1958
  %v2094 = vunpack.c.l.b16 %v1959
  %v2095 = vunpack.c.l.b16 %v1960
  %v2096 = vunpack.c.l.b16 %v1961
  %v2097 = vunpack.c.l.b16 %v1962
  %v2098 = vunpack.c.l.b16 %v1963
  %v2099 = vunpack.c.l.b16 %v1964
  %v2100 = vunpack.c.l.b16 %v1965
  %v2101 = vunpack.c.l.b16 %v1966
  %v2102 = vunpack.c.l.b16 %v1967
  %v2103 = vunpack.c.l.b16 %v1968
  %v2104 = vunpack.c.l.b16 %v1969
  %v2105 = vunpack.c.l.b16 %v1970
  %v2106 = vunpack.c.l.b16 %v1971
  %v2107 = vunpack.c.l.b16 %v1972
  %v2108 = vunpack.c.l.b16 %v1973
  %v2109 = vunpack.c.l.b16 %v1974
  %v2110 = vunpack.c.l.b16 %v1975
  %v2111 = vunpack.c.l.b16 %v1976
  %v2112 = vunpack.c.l.b16 %v1977
  %v2113 = vunpack.c.l.b16 %v1978
  %v2114 = vunpack.c.l.b16 %v1979
  %v2115 = vunpack.c.l.b16 %v1980
  %v2116 = vunpack.c.l.b16 %v1981
  %v2117 = vunpack.c.l.b16 %v1982
  %v2118 = vunpack.c.l.b16 %v1983
  %v2119 = vunpack.c.l.b16 %v1984
  %v2120 = vunpack.c.l.b16 %v1985
  %v2121 = vunpack.c.l.b16 %v1986
  %v2122 = vunpack.c.l.b16 %v1987
  %v2123 = vunpack.c.l.b16 %v1988
  %v2124 = vunpack.c.l.b16 %v1989
  %v2125 = vunpack.c.l.b16 %v1990
  %v2126 = vunpack.c.l.b16 %v1991
  %v2127 = vunpack.c.l.b16 %v1992
  %v2128 = vunpack.c.l.b16 %v1993
  %v2129 = vunpack.c.l.b16 %v1994
  %v2130 = vunpack.c.l.b16 %v1995
  %v2131 = vunpack.c.l.b16 %v1996
  %v2132 = vunpack.c.l.b16 %v1997
  %v2133 = vunpack.c.l.b16 %v1998
  %v2134 = vunpack.c.l.b16 %v1999
  %v2135 = vunpack.c.l.b16 %v2000
  %v2136 = vunpack.c.l.b16 %v2001
  %v2137 = vunpack.c.l.b16 %v2002
  %v2138 = vunpack.c.l.b16 %v2003
  %v2139 = vunpack.c.l.b16 %v2004
  %v2140 = vunpack.c.l.b16 %v2005
  %v2141 = vunpack.c.l.b16 %v2006
  %v2142 = vunpack.c.l.b16 %v2007
  %v2143 = vunpack.c.l.b16 %v2008
  %v2144 = vunpack.c.l.b16 %v2009
  %v2145 = vunpack.c.l.b16 %v2010
  %v2146 = vpack.c.b16 %v2083, %v2082
  %v2147 = vpack.c.b16 %v2085, %v2084
  %v2148 = vpack.c.b16 %v2087, %v2086
  %v2149 = vpack.c.b16 %v2089, %v2088
  %v2150 = vpack.c.b16 %v2091, %v2090
  %v2151 = vpack.c.b16 %v2093, %v2092
  %v2152 = vpack.c.b16 %v2095, %v2094
  %v2153 = vpack.c.b16 %v2097, %v2096
  %v2154 = vpack.c.b16 %v2099, %v2098
  %v2155 = vpack.c.b16 %v2101, %v2100
  %v2156 = vpack.c.b16 %v2103, %v2102
  %v2157 = vpack.c.b16 %v2105, %v2104
  %v2158 = vpack.c.b16 %v2107, %v2106
  %v2159 = vpack.c.b16 %v2109, %v2108
  %v2160 = vpack.c.b16 %v2111, %v2110
  %v2161 = vpack.c.b16 %v2113, %v2112
  %v2162 = vpack.c.b16 %v2115, %v2114
  %v2163 = vpack.c.b16 %v2117, %v2116
  %v2164 = vpack.c.b16 %v2119, %v2118
  %v2165 = vpack.c.b16 %v2121, %v2120
  %v2166 = vpack.c.b16 %v2123, %v2122
  %v2167 = vpack.c.b16 %v2125, %v2124
  %v2168 = vpack.c.b16 %v2127, %v2126
  %v2169 = vpack.c.b16 %v2129, %v2128
  %v2170 = vpack.c.b16 %v2131, %v2130
  %v2171 = vpack.c.b16 %v2133, %v2132
  %v2172 = vpack.c.b16 %v2135, %v2134
  %v2173 = vpack.c.b16 %v2137, %v2136
  %v2174 = vpack.c.b16 %v2139, %v2138
  %v2175 = vpack.c.b16 %v2141, %v2140
  %v2176 = vpack.c.b16 %v2143, %v2142
  %v2177 = vpack.c.b16 %v2145, %v2144
  %2210 = vmatprep.subr.bf16.mxu0 0
  %2211 = vmatpush1.bf16.msra.mxu0 %v2153
  %2212 = vmatprep.subr.bf16.mxu0 0
  %2213 = vmatpush1.bf16.msra.mxu0 %v2152
  %2214 = vmatprep.subr.bf16.mxu0 0
  %2215 = vmatpush1.bf16.msra.mxu0 %v2151
  %2216 = vmatprep.subr.bf16.mxu0 0
  %2217 = vmatpush1.bf16.msra.mxu0 %v2150
  %2218 = vmatprep.subr.bf16.mxu0 0
  %2219 = vmatpush1.bf16.msra.mxu0 %v2149
  %2220 = vmatprep.subr.bf16.mxu0 0
  %2221 = vmatpush1.bf16.msra.mxu0 %v2148
  %2222 = vmatprep.subr.bf16.mxu0 0
  %2223 = vmatpush1.bf16.msra.mxu0 %v2147
  %2224 = vmatprep.subr.bf16.mxu0 0
  %2225 = vmatpush1.bf16.msra.mxu0 %v2146
  %2226 = vmatprep.subr.bf16.mxu0 0
  %2227 = vmatpush2.bf16.msra.mxu0 %v2161
  %2228 = vmatprep.subr.bf16.mxu0 0
  %2229 = vmatpush2.bf16.msra.mxu0 %v2160
  %2230 = vmatprep.subr.bf16.mxu0 0
  %2231 = vmatpush2.bf16.msra.mxu0 %v2159
  %2232 = vmatprep.subr.bf16.mxu0 0
  %2233 = vmatpush2.bf16.msra.mxu0 %v2158
  %2234 = vmatprep.subr.bf16.mxu0 0
  %2235 = vmatpush2.bf16.msra.mxu0 %v2157
  %2236 = vmatprep.subr.bf16.mxu0 0
  %2237 = vmatpush2.bf16.msra.mxu0 %v2156
  %2238 = vmatprep.subr.bf16.mxu0 0
  %2239 = vmatpush2.bf16.msra.mxu0 %v2155
  %2240 = vmatprep.subr.bf16.mxu0 0
  %2241 = vmatpush2.bf16.msra.mxu0 %v2154
  %2242 = vmatprep.mubr.bf16.mxu0 %v1944
  %2243 = vmatmul.mubr.bf16.gmra.mxu0 %v1943
  %v2244 = vpop.f32.mrf.mxu0
  %v2245 = vadd.f32 %v2016, %v2244
  %v2246 = vpop.f32.mrf.mxu0
  %v2247 = vpop.f32.mrf.mxu0
  %v2248 = vpop.f32.mrf.mxu0
  %2249 = vdwg.mxu0
  %2250 = vmatprep.subr.bf16.mxu0 0
  %2251 = vmatpush1.bf16.msra.mxu0 %v2169
  %2252 = vmatprep.subr.bf16.mxu0 0
  %2253 = vmatpush1.bf16.msra.mxu0 %v2168
  %2254 = vmatprep.subr.bf16.mxu0 0
  %2255 = vmatpush1.bf16.msra.mxu0 %v2167
  %2256 = vmatprep.subr.bf16.mxu0 0
  %2257 = vmatpush1.bf16.msra.mxu0 %v2166
  %2258 = vmatprep.subr.bf16.mxu0 0
  %2259 = vmatpush1.bf16.msra.mxu0 %v2165
  %2260 = vmatprep.subr.bf16.mxu0 0
  %2261 = vmatpush1.bf16.msra.mxu0 %v2164
  %2262 = vmatprep.subr.bf16.mxu0 0
  %2263 = vmatpush1.bf16.msra.mxu0 %v2163
  %2264 = vmatprep.subr.bf16.mxu0 0
  %2265 = vmatpush1.bf16.msra.mxu0 %v2162
  %2266 = vmatprep.subr.bf16.mxu0 0
  %2267 = vmatpush2.bf16.msra.mxu0 %v2177
  %2268 = vmatprep.subr.bf16.mxu0 0
  %2269 = vmatpush2.bf16.msra.mxu0 %v2176
  %2270 = vmatprep.subr.bf16.mxu0 0
  %2271 = vmatpush2.bf16.msra.mxu0 %v2175
  %2272 = vmatprep.subr.bf16.mxu0 0
  %2273 = vmatpush2.bf16.msra.mxu0 %v2174
  %2274 = vmatprep.subr.bf16.mxu0 0
  %2275 = vmatpush2.bf16.msra.mxu0 %v2173
  %2276 = vmatprep.subr.bf16.mxu0 0
  %2277 = vmatpush2.bf16.msra.mxu0 %v2172
  %2278 = vmatprep.subr.bf16.mxu0 0
  %2279 = vmatpush2.bf16.msra.mxu0 %v2171
  %2280 = vmatprep.subr.bf16.mxu0 0
  %2281 = vmatpush2.bf16.msra.mxu0 %v2170
  %2282 = vmatprep.mubr.bf16.mxu0 %v1946
  %2283 = vmatmul.mubr.bf16.gmra.mxu0 %v1945
  %v2284 = vpop.f32.mrf.mxu0
  %v2285 = vadd.f32 %v2245, %v2284
  %v2286 = vpop.f32.mrf.mxu0
  %v2287 = vpop.f32.mrf.mxu0
  %v2288 = vpop.f32.mrf.mxu0
  %2289 = vdwg.mxu0
  %vm2290 = vcmask 80896
  %2291 = vst.msk [vmem:[%s5] sm:$0xff] %vm2290, %v2285
  // Predicated region
  $region22: #{mnist_forward.5} parent=0 // pred_check
    _
  $region23: #{mnist_forward.5} parent=0 // pred_check_branch
    %2293 = sbr.rel (0) target = $region25
  $region24: #{mnist_forward.5} parent=0 // pred_region
    _
  $region25: #{mnist_forward.5} parent=0 // pred_fallthru
    _
  // Predicated region
  $region26: #{mnist_forward.5} parent=0 // pred_check
    _
  $region27: #{mnist_forward.5} parent=0 // pred_check_branch
    %2295 = sbr.rel (0) target = $region29
  $region28: #{mnist_forward.5} parent=0 // pred_region
    _
  $region29: #{mnist_forward.5} parent=0 // pred_fallthru
    _

</llo_original>
